<compile_context>
chip_gen: v6e
topology: v6e:2x2x1
jax: 0.10.0
libtpu: 0.0.40
codegen_flags: <defaults>
</compile_context>

<pallas_src>
import jax
import jax.numpy as jnp
from jax.experimental import pallas as pl
from jax.experimental.pallas import tpu as pltpu

HIDDEN = 768   # SciBERT hidden size (fixed by the module: Conv1d in_channels=768)
C1 = 128       # conv1 out channels
C2 = 64        # conv2 out channels
K = 5          # conv kernel size
PAD = 2        # conv padding
TOP = 8        # sublane-aligned top halo inside the padded VMEM scratches


def _cnn_head_kernel(x_ref, w1_ref, b1_ref, w2_ref, b2_ref,
                     fc1w_ref, fc1b_ref, fc2w_ref, fc2b_ref,
                     out_ref,
                     xpad_scr, y1_scr, pad2_scr, y2_scr):
    """One grid step = B_TILE batch elements:
       conv1+relu -> maxpool2 -> conv2+relu -> maxpool2 -> flatten (PyTorch
       channel-major order via time-major-permuted fc1 weight) -> fc1+relu -> fc2."""
    BT, L, H = x_ref.shape
    L2 = L // 2
    T = L2 // 2
    M1 = BT * L
    M2 = BT * L2

    # Zero only the halo rows, every step (keeps the batch axis safely "parallel":
    # no state is carried between grid steps).
    xpad_scr[:, :TOP, :] = jnp.zeros((BT, TOP, H), xpad_scr.dtype)
    xpad_scr[:, TOP + L:, :] = jnp.zeros((BT, PAD, H), xpad_scr.dtype)
    pad2_scr[:, :TOP, :] = jnp.zeros((BT, TOP, C1), pad2_scr.dtype)
    pad2_scr[:, TOP + L2:, :] = jnp.zeros((BT, PAD, C1), pad2_scr.dtype)

    # Stage the unpadded input block into the zero-haloed scratch (VMEM->VMEM DMA,
    # sublane-aligned interior) — replaces the old wrapper-side jnp.pad HBM pass.
    pltpu.sync_copy(x_ref, xpad_scr.at[:, TOP:TOP + L, :])

    # ---- conv1 (kernel 5, padding 2) + ReLU: K bf16 matmuls with M = BT*L ----
    acc1 = jnp.zeros((M1, C1), jnp.float32)
    for k in range(K):
        xs = xpad_scr[:, TOP - PAD + k:TOP - PAD + k + L, :]        # (BT, L, 768) bf16
        acc1 = acc1 + jnp.dot(xs.reshape(M1, H), w1_ref[k],
                              preferred_element_type=jnp.float32)
    y1_scr[...] = jnp.maximum(acc1 + b1_ref[...], 0.0)              # (BT*L, 128) f32

    # ---- MaxPool1d(2) via stride-2 ref reads; pooled rows go straight into the
    #      conv2 pad scratch (bf16), aligned at row TOP ----
    p1 = jnp.maximum(y1_scr[pl.ds(0, M2, stride=2), :],
                     y1_scr[pl.ds(1, M2, stride=2), :])              # (BT*L2, 128)
    pad2_scr[:, TOP:TOP + L2, :] = p1.reshape(BT, L2, C1).astype(pad2_scr.dtype)

    # ---- conv2 (kernel 5, padding 2) + ReLU ----
    acc2 = jnp.zeros((M2, C2), jnp.float32)
    for k in range(K):
        ps = pad2_scr[:, TOP - PAD + k:TOP - PAD + k + L2, :]        # (BT, L2, 128) bf16
        acc2 = acc2 + jnp.dot(ps.reshape(M2, C1), w2_ref[k],
                              preferred_element_type=jnp.float32)
    y2_scr[...] = jnp.maximum(acc2 + b2_ref[...], 0.0)               # (BT*L2, 64) f32

    # ---- MaxPool1d(2) fused with the flatten: for each pooled time step t gather
    #      its two source rows across the batch (stride L2), max them, and
    #      concatenate along lanes -> (BT, T*C2) in time-major column order ----
    cols = []
    for t in range(T):
        a = y2_scr[pl.ds(2 * t, BT, stride=L2), :]
        b = y2_scr[pl.ds(2 * t + 1, BT, stride=L2), :]
        cols.append(jnp.maximum(a, b))
    flat = jnp.concatenate(cols, axis=1)                             # (BT, T*C2) f32

    # ---- fc1 + ReLU: a single MXU contraction (weight pre-permuted to time-major) ----
    h = jnp.dot(flat.astype(jnp.bfloat16), fc1w_ref[...],
                preferred_element_type=jnp.float32) + fc1b_ref[...]
    h = jnp.maximum(h, 0.0)                                          # (BT, 64)

    # ---- fc2 ----
    logits = jnp.dot(h.astype(jnp.bfloat16), fc2w_ref[...],
                     preferred_element_type=jnp.float32) + fc2b_ref[...]
    out_ref[0] = logits                                              # (BT, num_labels)


def scibert_cnn_head_pallas(hidden, params, *, b_tile=None):
    """hidden: (B, L, 768) last_hidden_state (channels-last, any float dtype).
       Returns (B, num_labels) float32 logits."""
    w1, b1, w2, b2, fc1_w, fc1_b, fc2_w, fc2_b = params
    B, L, H = hidden.shape
    assert H == HIDDEN and L % 4 == 0
    L2, T = L // 2, L // 4
    num_labels = fc2_w.shape[1]

    if b_tile is None:
        # target M = b_tile*L ~ 256 rows (fills the MXU on v6e/v7x, >=128 for v5e),
        # capped so the bf16 padded-input scratch stays well under scoped VMEM
        # (re-derive this cap for v7x's 64 MiB VMEM if pushing larger tiles).
        b_tile = max(1, min(B, -(-256 // L)))
        while b_tile > 1 and b_tile * (L + TOP + PAD) * HIDDEN * 2 > 8 * 1024 * 1024:
            b_tile -= 1
    num_tiles = -(-B // b_tile)
    Bp = num_tiles * b_tile

    # bf16 matmul operands (f32 accumulation inside the kernel); biases stay f32.
    x = hidden.astype(jnp.bfloat16)
    if Bp != B:
        x = jnp.pad(x, ((0, Bp - B), (0, 0), (0, 0)))
    w1_b = w1.astype(jnp.bfloat16)
    w2_b = w2.astype(jnp.bfloat16)
    # PyTorch flattens NCL channel-major (index c*T + t); permute fc1 weight to the
    # kernel's time-major flatten (index t*C2 + c).
    fc1w_tm = (fc1_w.reshape(C2, T, 64).transpose(1, 0, 2)
               .reshape(T * C2, 64).astype(jnp.bfloat16))
    fc2w_b = fc2_w.astype(jnp.bfloat16)
    b1_2d = b1.reshape(1, C1).astype(jnp.float32)
    b2_2d = b2.reshape(1, C2).astype(jnp.float32)
    fc1b_2d = fc1_b.reshape(1, 64).astype(jnp.float32)
    fc2b_2d = fc2_b.reshape(1, num_labels).astype(jnp.float32)

    def full_spec(a):
        nd = a.ndim
        return pl.BlockSpec(a.shape, lambda i, _nd=nd: (0,) * _nd)

    out = pl.pallas_call(
        _cnn_head_kernel,
        out_shape=jax.ShapeDtypeStruct((num_tiles, b_tile, num_labels), jnp.float32),
        grid=(num_tiles,),
        in_specs=[
            pl.BlockSpec((b_tile, L, HIDDEN), lambda i: (i, 0, 0)),
            full_spec(w1_b), full_spec(b1_2d),
            full_spec(w2_b), full_spec(b2_2d),
            full_spec(fc1w_tm), full_spec(fc1b_2d),
            full_spec(fc2w_b), full_spec(fc2b_2d),
        ],
        out_specs=pl.BlockSpec((1, b_tile, num_labels), lambda i: (i, 0, 0)),
        scratch_shapes=[
            pltpu.VMEM((b_tile, L + TOP + PAD, HIDDEN), jnp.bfloat16),  # padded input
            pltpu.VMEM((b_tile * L, C1), jnp.float32),                  # conv1+relu
            pltpu.VMEM((b_tile, L2 + TOP + PAD, C1), jnp.bfloat16),     # padded pooled1
            pltpu.VMEM((b_tile * L2, C2), jnp.float32),                 # conv2+relu
        ],
        compiler_params=pltpu.CompilerParams(
            dimension_semantics=("parallel",)),   # batch tiles independent -> 2 TCs on v7x
    )(x, w1_b, b1_2d, w2_b, b2_2d, fc1w_tm, fc1b_2d, fc2w_b, fc2b_2d)
    return out.reshape(Bp, num_labels)[:B]


def ref_forward(hidden, params):
    """Pure-JAX f32 reference mirroring the PyTorch forward (dropout = identity)."""
    w1, b1, w2, b2, fc1_w, fc1_b, fc2_w, fc2_b = params
    B, L, _ = hidden.shape
    L2 = L // 2
    xp = jnp.pad(hidden, ((0, 0), (PAD, PAD), (0, 0)))
    y1 = sum(jnp.einsum('btc,co->bto', xp[:, k:k + L], w1[k]) for k in range(K)) + b1
    y1 = jax.nn.relu(y1)
    p1 = jnp.max(y1.reshape(B, L2, 2, C1), axis=2)
    x2 = jnp.pad(p1, ((0, 0), (PAD, PAD), (0, 0)))
    y2 = sum(jnp.einsum('btc,co->bto', x2[:, k:k + L2], w2[k]) for k in range(K)) + b2
    y2 = jax.nn.relu(y2)
    p2 = jnp.max(y2.reshape(B, L2 // 2, 2, C2), axis=2)          # (B, L/4, 64)
    flat = jnp.transpose(p2, (0, 2, 1)).reshape(B, -1)           # PyTorch x.view(B,-1) on NCL
    h = jax.nn.relu(flat @ fc1_w + fc1_b)
    return h @ fc2_w + fc2_b


if __name__ == "__main__":
    B, max_length, num_labels, vocab = 2, 16, 4, 50
    key = jax.random.PRNGKey(0)
    ks = jax.random.split(key, 12)

    # ---- deterministic synthetic parameters (shapes from the module __init__) ----
    w1 = 0.02 * jax.random.normal(ks[0], (K, HIDDEN, C1), jnp.float32)
    b1 = 0.02 * jax.random.normal(ks[1], (C1,), jnp.float32)
    w2 = 0.02 * jax.random.normal(ks[2], (K, C1, C2), jnp.float32)
    b2 = 0.02 * jax.random.normal(ks[3], (C2,), jnp.float32)
    fc1_in = C2 * (max_length // 2 // 2)
    fc1_w = 0.02 * jax.random.normal(ks[4], (fc1_in, 64), jnp.float32)  # (in, out)
    fc1_b = 0.02 * jax.random.normal(ks[5], (64,), jnp.float32)
    fc2_w = 0.02 * jax.random.normal(ks[6], (64, num_labels), jnp.float32)
    fc2_b = 0.02 * jax.random.normal(ks[7], (num_labels,), jnp.float32)
    params = (w1, b1, w2, b2, fc1_w, fc1_b, fc2_w, fc2_b)

    # ---- SciBERT backbone stub (deterministic embedding lookup) ----
    # TODO(synk): the full pretrained SciBERT transformer (AutoModel) is not
    # reproduced; a deterministic embedding stub produces last_hidden_state.
    input_ids = jax.random.randint(ks[8], (B, max_length), 0, vocab)
    attention_mask = jnp.ones((B, max_length), jnp.float32)
    emb_table = 0.5 * jax.random.normal(ks[9], (vocab, HIDDEN), jnp.float32)
    last_hidden_state = emb_table[input_ids] * attention_mask[..., None]  # (B, L, 768)

    # ---- run Pallas kernel + f32 reference ----
    out = jax.block_until_ready(scibert_cnn_head_pallas(last_hidden_state, params))
    ref = jax.block_until_ready(ref_forward(last_hidden_state, params))

    assert out.shape == (B, num_labels)
    # bf16 matmul operands in the kernel -> looser tolerance vs. the f32 reference.
    assert jnp.allclose(out, ref, rtol=2e-2, atol=2e-2), (out, ref)
    print("KERNEL_OK")
</pallas_src>

<mosaic_0001>
module attributes {stable_mosaic.version = 11 : i64} {
  func.func @_cnn_head_kernel(%arg0: i32, %arg1: memref<2x16x768xbf16, #tpu.memory_space<vmem>>, %arg2: memref<5x768x128xbf16, #tpu.memory_space<vmem>>, %arg3: memref<1x128xf32, #tpu.memory_space<vmem>>, %arg4: memref<5x128x64xbf16, #tpu.memory_space<vmem>>, %arg5: memref<1x64xf32, #tpu.memory_space<vmem>>, %arg6: memref<256x64xbf16, #tpu.memory_space<vmem>>, %arg7: memref<1x64xf32, #tpu.memory_space<vmem>>, %arg8: memref<64x4xbf16, #tpu.memory_space<vmem>>, %arg9: memref<1x4xf32, #tpu.memory_space<vmem>>, %arg10: memref<1x2x4xf32, #tpu.memory_space<vmem>>, %arg11: memref<2x26x768xbf16, #tpu.memory_space<vmem>>, %arg12: memref<32x128xf32, #tpu.memory_space<vmem>>, %arg13: memref<2x18x128xbf16, #tpu.memory_space<vmem>>, %arg14: memref<16x64xf32, #tpu.memory_space<vmem>>) attributes {dimension_semantics = [#tpu.dimension_semantics<parallel>], iteration_bounds = array<i64: 1>, scalar_prefetch = 0 : i64, scratch_operands = 4 : i64, tpu.core_type = #tpu.core_type<tc>, window_params = [{transform_indices = @transform_0, window_bounds = array<i64: 2, 16, 768>}, {pipeline_mode = #tpu.pipeline_mode<synchronous>, transform_indices = @transform_1, window_bounds = array<i64: 5, 768, 128>}, {pipeline_mode = #tpu.pipeline_mode<synchronous>, transform_indices = @transform_2, window_bounds = array<i64: 1, 128>}, {pipeline_mode = #tpu.pipeline_mode<synchronous>, transform_indices = @transform_3, window_bounds = array<i64: 5, 128, 64>}, {pipeline_mode = #tpu.pipeline_mode<synchronous>, transform_indices = @transform_4, window_bounds = array<i64: 1, 64>}, {pipeline_mode = #tpu.pipeline_mode<synchronous>, transform_indices = @transform_5, window_bounds = array<i64: 256, 64>}, {pipeline_mode = #tpu.pipeline_mode<synchronous>, transform_indices = @transform_6, window_bounds = array<i64: 1, 64>}, {pipeline_mode = #tpu.pipeline_mode<synchronous>, transform_indices = @transform_7, window_bounds = array<i64: 64, 4>}, {pipeline_mode = #tpu.pipeline_mode<synchronous>, transform_indices = @transform_8, window_bounds = array<i64: 1, 4>}, {transform_indices = @transform_9, window_bounds = array<i64: 1, 2, 4>}]} {
    %cst = arith.constant 0.000000e+00 : bf16
    %0 = vector.broadcast %cst : bf16 to vector<2x8x768xbf16>
    %c0 = arith.constant 0 : index
    %c0_0 = arith.constant 0 : index
    %c0_1 = arith.constant 0 : index
    %1 = vector.load %arg11[%c0, %c0_0, %c0_1] : memref<2x26x768xbf16, #tpu.memory_space<vmem>>, vector<2x8x768xbf16>
    tpu.vector_store %arg11[%c0, %c0_0, %c0_1], %0 {strides = array<i32>} : memref<2x26x768xbf16, #tpu.memory_space<vmem>>, vector<2x8x768xbf16>,
    %cst_2 = arith.constant 0.000000e+00 : bf16
    %2 = vector.broadcast %cst_2 : bf16 to vector<2x2x768xbf16>
    %c0_3 = arith.constant 0 : index
    %c24 = arith.constant 24 : index
    %c0_4 = arith.constant 0 : index
    %3 = vector.load %arg11[%c0_3, %c24, %c0_4] : memref<2x26x768xbf16, #tpu.memory_space<vmem>>, vector<2x2x768xbf16>
    tpu.vector_store %arg11[%c0_3, %c24, %c0_4], %2 {strides = array<i32>} : memref<2x26x768xbf16, #tpu.memory_space<vmem>>, vector<2x2x768xbf16>,
    %cst_5 = arith.constant 0.000000e+00 : bf16
    %4 = vector.broadcast %cst_5 : bf16 to vector<2x8x128xbf16>
    %c0_6 = arith.constant 0 : index
    %c0_7 = arith.constant 0 : index
    %c0_8 = arith.constant 0 : index
    %5 = vector.load %arg13[%c0_6, %c0_7, %c0_8] : memref<2x18x128xbf16, #tpu.memory_space<vmem>>, vector<2x8x128xbf16>
    tpu.vector_store %arg13[%c0_6, %c0_7, %c0_8], %4 {strides = array<i32>} : memref<2x18x128xbf16, #tpu.memory_space<vmem>>, vector<2x8x128xbf16>,
    %cst_9 = arith.constant 0.000000e+00 : bf16
    %6 = vector.broadcast %cst_9 : bf16 to vector<2x2x128xbf16>
    %c0_10 = arith.constant 0 : index
    %c16 = arith.constant 16 : index
    %c0_11 = arith.constant 0 : index
    %7 = vector.load %arg13[%c0_10, %c16, %c0_11] : memref<2x18x128xbf16, #tpu.memory_space<vmem>>, vector<2x2x128xbf16>
    tpu.vector_store %arg13[%c0_10, %c16, %c0_11], %6 {strides = array<i32>} : memref<2x18x128xbf16, #tpu.memory_space<vmem>>, vector<2x2x128xbf16>,
    "tpu.region"() ({
      %118 = tpu.sem_alloc : memref<!tpu.dma_semaphore, #tpu.memory_space<semaphore_mem>>
      %c0_i32 = arith.constant 0 : i32
      %c8_i32 = arith.constant 8 : i32
      %c0_i32_121 = arith.constant 0 : i32
      %119 = tpu.memref_slice %arg11[%c0_i32, %c8_i32, %c0_i32_121] : memref<2x26x768xbf16, #tpu.memory_space<vmem>> -> memref<2x16x768xbf16, #tpu.memory_space<vmem>>
      tpu.enqueue_dma source(%arg1 : memref<2x16x768xbf16, #tpu.memory_space<vmem>>) target(%119 : memref<2x16x768xbf16, #tpu.memory_space<vmem>>) target_semaphore(%118 : memref<!tpu.dma_semaphore, #tpu.memory_space<semaphore_mem>>)
      %c0_i32_122 = arith.constant 0 : i32
      %c8_i32_123 = arith.constant 8 : i32
      %c0_i32_124 = arith.constant 0 : i32
      %120 = tpu.memref_slice %arg11[%c0_i32_122, %c8_i32_123, %c0_i32_124] : memref<2x26x768xbf16, #tpu.memory_space<vmem>> -> memref<2x16x768xbf16, #tpu.memory_space<vmem>>
      tpu.wait_dma2 semaphore(%118 : memref<!tpu.dma_semaphore, #tpu.memory_space<semaphore_mem>>) src(%arg1 : memref<2x16x768xbf16, #tpu.memory_space<vmem>>) dst(%120 : memref<2x16x768xbf16, #tpu.memory_space<vmem>>)
      tpu.yield
    }) : () -> ()
    %cst_12 = arith.constant 0.000000e+00 : f32
    %8 = vector.broadcast %cst_12 : f32 to vector<32x128xf32>
    %c0_13 = arith.constant 0 : index
    %c6 = arith.constant 6 : index
    %c0_14 = arith.constant 0 : index
    %9 = vector.load %arg11[%c0_13, %c6, %c0_14] : memref<2x26x768xbf16, #tpu.memory_space<vmem>>, vector<2x16x768xbf16>
    %10 = vector.shape_cast %9 : vector<2x16x768xbf16> to vector<32x768xbf16>
    %c0_15 = arith.constant 0 : index
    %c0_16 = arith.constant 0 : index
    %c0_17 = arith.constant 0 : index
    %11 = vector.load %arg2[%c0_15, %c0_16, %c0_17] : memref<5x768x128xbf16, #tpu.memory_space<vmem>>, vector<1x768x128xbf16>
    %12 = vector.shape_cast %11 : vector<1x768x128xbf16> to vector<768x128xbf16>
    %cst_18 = arith.constant dense<0.000000e+00> : vector<32x128xf32>
    %13 = tpu.matmul %10, %12, %cst_18 {dimension_numbers = #tpu.dot_dimension_numbers<[1], [0], [0], [1], [0, 0, 1, 1], [], []>} : vector<32x768xbf16>, vector<768x128xbf16>, vector<32x128xf32> -> vector<32x128xf32>
    %14 = arith.addf %8, %13 : vector<32x128xf32>
    %c0_19 = arith.constant 0 : index
    %c7 = arith.constant 7 : index
    %c0_20 = arith.constant 0 : index
    %15 = vector.load %arg11[%c0_19, %c7, %c0_20] : memref<2x26x768xbf16, #tpu.memory_space<vmem>>, vector<2x16x768xbf16>
    %16 = vector.shape_cast %15 : vector<2x16x768xbf16> to vector<32x768xbf16>
    %c1 = arith.constant 1 : index
    %c0_21 = arith.constant 0 : index
    %c0_22 = arith.constant 0 : index
    %17 = vector.load %arg2[%c1, %c0_21, %c0_22] : memref<5x768x128xbf16, #tpu.memory_space<vmem>>, vector<1x768x128xbf16>
    %18 = vector.shape_cast %17 : vector<1x768x128xbf16> to vector<768x128xbf16>
    %cst_23 = arith.constant dense<0.000000e+00> : vector<32x128xf32>
    %19 = tpu.matmul %16, %18, %cst_23 {dimension_numbers = #tpu.dot_dimension_numbers<[1], [0], [0], [1], [0, 0, 1, 1], [], []>} : vector<32x768xbf16>, vector<768x128xbf16>, vector<32x128xf32> -> vector<32x128xf32>
    %20 = arith.addf %14, %19 : vector<32x128xf32>
    %c0_24 = arith.constant 0 : index
    %c8 = arith.constant 8 : index
    %c0_25 = arith.constant 0 : index
    %21 = vector.load %arg11[%c0_24, %c8, %c0_25] : memref<2x26x768xbf16, #tpu.memory_space<vmem>>, vector<2x16x768xbf16>
    %22 = vector.shape_cast %21 : vector<2x16x768xbf16> to vector<32x768xbf16>
    %c2 = arith.constant 2 : index
    %c0_26 = arith.constant 0 : index
    %c0_27 = arith.constant 0 : index
    %23 = vector.load %arg2[%c2, %c0_26, %c0_27] : memref<5x768x128xbf16, #tpu.memory_space<vmem>>, vector<1x768x128xbf16>
    %24 = vector.shape_cast %23 : vector<1x768x128xbf16> to vector<768x128xbf16>
    %cst_28 = arith.constant dense<0.000000e+00> : vector<32x128xf32>
    %25 = tpu.matmul %22, %24, %cst_28 {dimension_numbers = #tpu.dot_dimension_numbers<[1], [0], [0], [1], [0, 0, 1, 1], [], []>} : vector<32x768xbf16>, vector<768x128xbf16>, vector<32x128xf32> -> vector<32x128xf32>
    %26 = arith.addf %20, %25 : vector<32x128xf32>
    %c0_29 = arith.constant 0 : index
    %c9 = arith.constant 9 : index
    %c0_30 = arith.constant 0 : index
    %27 = vector.load %arg11[%c0_29, %c9, %c0_30] : memref<2x26x768xbf16, #tpu.memory_space<vmem>>, vector<2x16x768xbf16>
    %28 = vector.shape_cast %27 : vector<2x16x768xbf16> to vector<32x768xbf16>
    %c3 = arith.constant 3 : index
    %c0_31 = arith.constant 0 : index
    %c0_32 = arith.constant 0 : index
    %29 = vector.load %arg2[%c3, %c0_31, %c0_32] : memref<5x768x128xbf16, #tpu.memory_space<vmem>>, vector<1x768x128xbf16>
    %30 = vector.shape_cast %29 : vector<1x768x128xbf16> to vector<768x128xbf16>
    %cst_33 = arith.constant dense<0.000000e+00> : vector<32x128xf32>
    %31 = tpu.matmul %28, %30, %cst_33 {dimension_numbers = #tpu.dot_dimension_numbers<[1], [0], [0], [1], [0, 0, 1, 1], [], []>} : vector<32x768xbf16>, vector<768x128xbf16>, vector<32x128xf32> -> vector<32x128xf32>
    %32 = arith.addf %26, %31 : vector<32x128xf32>
    %c0_34 = arith.constant 0 : index
    %c10 = arith.constant 10 : index
    %c0_35 = arith.constant 0 : index
    %33 = vector.load %arg11[%c0_34, %c10, %c0_35] : memref<2x26x768xbf16, #tpu.memory_space<vmem>>, vector<2x16x768xbf16>
    %34 = vector.shape_cast %33 : vector<2x16x768xbf16> to vector<32x768xbf16>
    %c4 = arith.constant 4 : index
    %c0_36 = arith.constant 0 : index
    %c0_37 = arith.constant 0 : index
    %35 = vector.load %arg2[%c4, %c0_36, %c0_37] : memref<5x768x128xbf16, #tpu.memory_space<vmem>>, vector<1x768x128xbf16>
    %36 = vector.shape_cast %35 : vector<1x768x128xbf16> to vector<768x128xbf16>
    %cst_38 = arith.constant dense<0.000000e+00> : vector<32x128xf32>
    %37 = tpu.matmul %34, %36, %cst_38 {dimension_numbers = #tpu.dot_dimension_numbers<[1], [0], [0], [1], [0, 0, 1, 1], [], []>} : vector<32x768xbf16>, vector<768x128xbf16>, vector<32x128xf32> -> vector<32x128xf32>
    %38 = arith.addf %32, %37 : vector<32x128xf32>
    %c0_39 = arith.constant 0 : index
    %c0_40 = arith.constant 0 : index
    %39 = vector.load %arg3[%c0_39, %c0_40] : memref<1x128xf32, #tpu.memory_space<vmem>>, vector<1x128xf32>
    %40 = vector.broadcast %39 : vector<1x128xf32> to vector<32x128xf32>
    %41 = arith.addf %38, %40 : vector<32x128xf32>
    %cst_41 = arith.constant 0.000000e+00 : f32
    %42 = vector.broadcast %cst_41 : f32 to vector<32x128xf32>
    %43 = arith.maximumf %41, %42 : vector<32x128xf32>
    %c0_42 = arith.constant 0 : index
    %c0_43 = arith.constant 0 : index
    %44 = vector.load %arg12[%c0_42, %c0_43] : memref<32x128xf32, #tpu.memory_space<vmem>>, vector<32x128xf32>
    tpu.vector_store %arg12[%c0_42, %c0_43], %43 {strides = array<i32>} : memref<32x128xf32, #tpu.memory_space<vmem>>, vector<32x128xf32>,
    %c0_44 = arith.constant 0 : index
    %c0_45 = arith.constant 0 : index
    %45 = tpu.strided_load %arg12[%c0_44, %c0_45] {strides = array<i32: 2, 1>} : memref<32x128xf32, #tpu.memory_space<vmem>>, vector<16x128xf32>
    %c1_46 = arith.constant 1 : index
    %c0_47 = arith.constant 0 : index
    %46 = tpu.strided_load %arg12[%c1_46, %c0_47] {strides = array<i32: 2, 1>} : memref<32x128xf32, #tpu.memory_space<vmem>>, vector<16x128xf32>
    %47 = arith.maximumf %45, %46 : vector<16x128xf32>
    %48 = vector.shape_cast %47 : vector<16x128xf32> to vector<2x8x128xf32>
    %49 = arith.truncf %48 : vector<2x8x128xf32> to vector<2x8x128xbf16>
    %c0_48 = arith.constant 0 : index
    %c8_49 = arith.constant 8 : index
    %c0_50 = arith.constant 0 : index
    %50 = vector.load %arg13[%c0_48, %c8_49, %c0_50] : memref<2x18x128xbf16, #tpu.memory_space<vmem>>, vector<2x8x128xbf16>
    tpu.vector_store %arg13[%c0_48, %c8_49, %c0_50], %49 {strides = array<i32>} : memref<2x18x128xbf16, #tpu.memory_space<vmem>>, vector<2x8x128xbf16>,
    %cst_51 = arith.constant 0.000000e+00 : f32
    %51 = vector.broadcast %cst_51 : f32 to vector<16x64xf32>
    %c0_52 = arith.constant 0 : index
    %c6_53 = arith.constant 6 : index
    %c0_54 = arith.constant 0 : index
    %52 = vector.load %arg13[%c0_52, %c6_53, %c0_54] : memref<2x18x128xbf16, #tpu.memory_space<vmem>>, vector<2x8x128xbf16>
    %53 = vector.shape_cast %52 : vector<2x8x128xbf16> to vector<16x128xbf16>
    %c0_55 = arith.constant 0 : index
    %c0_56 = arith.constant 0 : index
    %c0_57 = arith.constant 0 : index
    %54 = vector.load %arg4[%c0_55, %c0_56, %c0_57] : memref<5x128x64xbf16, #tpu.memory_space<vmem>>, vector<1x128x64xbf16>
    %55 = vector.shape_cast %54 : vector<1x128x64xbf16> to vector<128x64xbf16>
    %cst_58 = arith.constant dense<0.000000e+00> : vector<16x64xf32>
    %56 = tpu.matmul %53, %55, %cst_58 {dimension_numbers = #tpu.dot_dimension_numbers<[1], [0], [0], [1], [0, 0, 1, 1], [], []>} : vector<16x128xbf16>, vector<128x64xbf16>, vector<16x64xf32> -> vector<16x64xf32>
    %57 = arith.addf %51, %56 : vector<16x64xf32>
    %c0_59 = arith.constant 0 : index
    %c7_60 = arith.constant 7 : index
    %c0_61 = arith.constant 0 : index
    %58 = vector.load %arg13[%c0_59, %c7_60, %c0_61] : memref<2x18x128xbf16, #tpu.memory_space<vmem>>, vector<2x8x128xbf16>
    %59 = vector.shape_cast %58 : vector<2x8x128xbf16> to vector<16x128xbf16>
    %c1_62 = arith.constant 1 : index
    %c0_63 = arith.constant 0 : index
    %c0_64 = arith.constant 0 : index
    %60 = vector.load %arg4[%c1_62, %c0_63, %c0_64] : memref<5x128x64xbf16, #tpu.memory_space<vmem>>, vector<1x128x64xbf16>
    %61 = vector.shape_cast %60 : vector<1x128x64xbf16> to vector<128x64xbf16>
    %cst_65 = arith.constant dense<0.000000e+00> : vector<16x64xf32>
    %62 = tpu.matmul %59, %61, %cst_65 {dimension_numbers = #tpu.dot_dimension_numbers<[1], [0], [0], [1], [0, 0, 1, 1], [], []>} : vector<16x128xbf16>, vector<128x64xbf16>, vector<16x64xf32> -> vector<16x64xf32>
    %63 = arith.addf %57, %62 : vector<16x64xf32>
    %c0_66 = arith.constant 0 : index
    %c8_67 = arith.constant 8 : index
    %c0_68 = arith.constant 0 : index
    %64 = vector.load %arg13[%c0_66, %c8_67, %c0_68] : memref<2x18x128xbf16, #tpu.memory_space<vmem>>, vector<2x8x128xbf16>
    %65 = vector.shape_cast %64 : vector<2x8x128xbf16> to vector<16x128xbf16>
    %c2_69 = arith.constant 2 : index
    %c0_70 = arith.constant 0 : index
    %c0_71 = arith.constant 0 : index
    %66 = vector.load %arg4[%c2_69, %c0_70, %c0_71] : memref<5x128x64xbf16, #tpu.memory_space<vmem>>, vector<1x128x64xbf16>
    %67 = vector.shape_cast %66 : vector<1x128x64xbf16> to vector<128x64xbf16>
    %cst_72 = arith.constant dense<0.000000e+00> : vector<16x64xf32>
    %68 = tpu.matmul %65, %67, %cst_72 {dimension_numbers = #tpu.dot_dimension_numbers<[1], [0], [0], [1], [0, 0, 1, 1], [], []>} : vector<16x128xbf16>, vector<128x64xbf16>, vector<16x64xf32> -> vector<16x64xf32>
    %69 = arith.addf %63, %68 : vector<16x64xf32>
    %c0_73 = arith.constant 0 : index
    %c9_74 = arith.constant 9 : index
    %c0_75 = arith.constant 0 : index
    %70 = vector.load %arg13[%c0_73, %c9_74, %c0_75] : memref<2x18x128xbf16, #tpu.memory_space<vmem>>, vector<2x8x128xbf16>
    %71 = vector.shape_cast %70 : vector<2x8x128xbf16> to vector<16x128xbf16>
    %c3_76 = arith.constant 3 : index
    %c0_77 = arith.constant 0 : index
    %c0_78 = arith.constant 0 : index
    %72 = vector.load %arg4[%c3_76, %c0_77, %c0_78] : memref<5x128x64xbf16, #tpu.memory_space<vmem>>, vector<1x128x64xbf16>
    %73 = vector.shape_cast %72 : vector<1x128x64xbf16> to vector<128x64xbf16>
    %cst_79 = arith.constant dense<0.000000e+00> : vector<16x64xf32>
    %74 = tpu.matmul %71, %73, %cst_79 {dimension_numbers = #tpu.dot_dimension_numbers<[1], [0], [0], [1], [0, 0, 1, 1], [], []>} : vector<16x128xbf16>, vector<128x64xbf16>, vector<16x64xf32> -> vector<16x64xf32>
    %75 = arith.addf %69, %74 : vector<16x64xf32>
    %c0_80 = arith.constant 0 : index
    %c10_81 = arith.constant 10 : index
    %c0_82 = arith.constant 0 : index
    %76 = vector.load %arg13[%c0_80, %c10_81, %c0_82] : memref<2x18x128xbf16, #tpu.memory_space<vmem>>, vector<2x8x128xbf16>
    %77 = vector.shape_cast %76 : vector<2x8x128xbf16> to vector<16x128xbf16>
    %c4_83 = arith.constant 4 : index
    %c0_84 = arith.constant 0 : index
    %c0_85 = arith.constant 0 : index
    %78 = vector.load %arg4[%c4_83, %c0_84, %c0_85] : memref<5x128x64xbf16, #tpu.memory_space<vmem>>, vector<1x128x64xbf16>
    %79 = vector.shape_cast %78 : vector<1x128x64xbf16> to vector<128x64xbf16>
    %cst_86 = arith.constant dense<0.000000e+00> : vector<16x64xf32>
    %80 = tpu.matmul %77, %79, %cst_86 {dimension_numbers = #tpu.dot_dimension_numbers<[1], [0], [0], [1], [0, 0, 1, 1], [], []>} : vector<16x128xbf16>, vector<128x64xbf16>, vector<16x64xf32> -> vector<16x64xf32>
    %81 = arith.addf %75, %80 : vector<16x64xf32>
    %c0_87 = arith.constant 0 : index
    %c0_88 = arith.constant 0 : index
    %82 = vector.load %arg5[%c0_87, %c0_88] : memref<1x64xf32, #tpu.memory_space<vmem>>, vector<1x64xf32>
    %83 = vector.broadcast %82 : vector<1x64xf32> to vector<16x64xf32>
    %84 = arith.addf %81, %83 : vector<16x64xf32>
    %cst_89 = arith.constant 0.000000e+00 : f32
    %85 = vector.broadcast %cst_89 : f32 to vector<16x64xf32>
    %86 = arith.maximumf %84, %85 : vector<16x64xf32>
    %c0_90 = arith.constant 0 : index
    %c0_91 = arith.constant 0 : index
    %87 = vector.load %arg14[%c0_90, %c0_91] : memref<16x64xf32, #tpu.memory_space<vmem>>, vector<16x64xf32>
    tpu.vector_store %arg14[%c0_90, %c0_91], %86 {strides = array<i32>} : memref<16x64xf32, #tpu.memory_space<vmem>>, vector<16x64xf32>,
    %c0_92 = arith.constant 0 : index
    %c0_93 = arith.constant 0 : index
    %88 = tpu.strided_load %arg14[%c0_92, %c0_93] {strides = array<i32: 8, 1>} : memref<16x64xf32, #tpu.memory_space<vmem>>, vector<2x64xf32>
    %c1_94 = arith.constant 1 : index
    %c0_95 = arith.constant 0 : index
    %89 = tpu.strided_load %arg14[%c1_94, %c0_95] {strides = array<i32: 8, 1>} : memref<16x64xf32, #tpu.memory_space<vmem>>, vector<2x64xf32>
    %90 = arith.maximumf %88, %89 : vector<2x64xf32>
    %c2_96 = arith.constant 2 : index
    %c0_97 = arith.constant 0 : index
    %91 = tpu.strided_load %arg14[%c2_96, %c0_97] {strides = array<i32: 8, 1>} : memref<16x64xf32, #tpu.memory_space<vmem>>, vector<2x64xf32>
    %c3_98 = arith.constant 3 : index
    %c0_99 = arith.constant 0 : index
    %92 = tpu.strided_load %arg14[%c3_98, %c0_99] {strides = array<i32: 8, 1>} : memref<16x64xf32, #tpu.memory_space<vmem>>, vector<2x64xf32>
    %93 = arith.maximumf %91, %92 : vector<2x64xf32>
    %c4_100 = arith.constant 4 : index
    %c0_101 = arith.constant 0 : index
    %94 = tpu.strided_load %arg14[%c4_100, %c0_101] {strides = array<i32: 8, 1>} : memref<16x64xf32, #tpu.memory_space<vmem>>, vector<2x64xf32>
    %c5 = arith.constant 5 : index
    %c0_102 = arith.constant 0 : index
    %95 = tpu.strided_load %arg14[%c5, %c0_102] {strides = array<i32: 8, 1>} : memref<16x64xf32, #tpu.memory_space<vmem>>, vector<2x64xf32>
    %96 = arith.maximumf %94, %95 : vector<2x64xf32>
    %c6_103 = arith.constant 6 : index
    %c0_104 = arith.constant 0 : index
    %97 = tpu.strided_load %arg14[%c6_103, %c0_104] {strides = array<i32: 8, 1>} : memref<16x64xf32, #tpu.memory_space<vmem>>, vector<2x64xf32>
    %c7_105 = arith.constant 7 : index
    %c0_106 = arith.constant 0 : index
    %98 = tpu.strided_load %arg14[%c7_105, %c0_106] {strides = array<i32: 8, 1>} : memref<16x64xf32, #tpu.memory_space<vmem>>, vector<2x64xf32>
    %99 = arith.maximumf %97, %98 : vector<2x64xf32>
    %100 = tpu.concatenate %90, %93, %96, %99 in 1 : vector<2x64xf32>, vector<2x64xf32>, vector<2x64xf32>, vector<2x64xf32> -> vector<2x256xf32>
    %101 = arith.truncf %100 : vector<2x256xf32> to vector<2x256xbf16>
    %c0_107 = arith.constant 0 : index
    %c0_108 = arith.constant 0 : index
    %102 = vector.load %arg6[%c0_107, %c0_108] : memref<256x64xbf16, #tpu.memory_space<vmem>>, vector<256x64xbf16>
    %cst_109 = arith.constant dense<0.000000e+00> : vector<2x64xf32>
    %103 = tpu.matmul %101, %102, %cst_109 {dimension_numbers = #tpu.dot_dimension_numbers<[1], [0], [0], [1], [0, 0, 1, 1], [], []>} : vector<2x256xbf16>, vector<256x64xbf16>, vector<2x64xf32> -> vector<2x64xf32>
    %c0_110 = arith.constant 0 : index
    %c0_111 = arith.constant 0 : index
    %104 = vector.load %arg7[%c0_110, %c0_111] : memref<1x64xf32, #tpu.memory_space<vmem>>, vector<1x64xf32>
    %105 = vector.broadcast %104 : vector<1x64xf32> to vector<2x64xf32>
    %106 = arith.addf %103, %105 : vector<2x64xf32>
    %cst_112 = arith.constant 0.000000e+00 : f32
    %107 = vector.broadcast %cst_112 : f32 to vector<2x64xf32>
    %108 = arith.maximumf %106, %107 : vector<2x64xf32>
    %109 = arith.truncf %108 : vector<2x64xf32> to vector<2x64xbf16>
    %c0_113 = arith.constant 0 : index
    %c0_114 = arith.constant 0 : index
    %110 = vector.load %arg8[%c0_113, %c0_114] : memref<64x4xbf16, #tpu.memory_space<vmem>>, vector<64x4xbf16>
    %cst_115 = arith.constant dense<0.000000e+00> : vector<2x4xf32>
    %111 = tpu.matmul %109, %110, %cst_115 {dimension_numbers = #tpu.dot_dimension_numbers<[1], [0], [0], [1], [0, 0, 1, 1], [], []>} : vector<2x64xbf16>, vector<64x4xbf16>, vector<2x4xf32> -> vector<2x4xf32>
    %c0_116 = arith.constant 0 : index
    %c0_117 = arith.constant 0 : index
    %112 = vector.load %arg9[%c0_116, %c0_117] : memref<1x4xf32, #tpu.memory_space<vmem>>, vector<1x4xf32>
    %113 = vector.broadcast %112 : vector<1x4xf32> to vector<2x4xf32>
    %114 = arith.addf %111, %113 : vector<2x4xf32>
    %c0_118 = arith.constant 0 : index
    %c0_119 = arith.constant 0 : index
    %c0_120 = arith.constant 0 : index
    %115 = vector.load %arg10[%c0_118, %c0_119, %c0_120] : memref<1x2x4xf32, #tpu.memory_space<vmem>>, vector<1x2x4xf32>
    %116 = vector.shape_cast %115 : vector<1x2x4xf32> to vector<2x4xf32>
    %117 = vector.shape_cast %114 : vector<2x4xf32> to vector<1x2x4xf32>
    tpu.vector_store %arg10[%c0_118, %c0_119, %c0_120], %117 {strides = array<i32>} : memref<1x2x4xf32, #tpu.memory_space<vmem>>, vector<1x2x4xf32>,
    return
  }
  func.func @transform_0(%arg0: i32) -> (i32, i32, i32) {
    %c0_i32 = arith.constant 0 : i32
    %c0_i32_0 = arith.constant 0 : i32
    %c0_i32_1 = arith.constant 0 : i32
    return %arg0, %c0_i32, %c0_i32_0 : i32, i32, i32
  }
  func.func @transform_1(%arg0: i32) -> (i32, i32, i32) {
    %c0_i32 = arith.constant 0 : i32
    %c0_i32_0 = arith.constant 0 : i32
    %c0_i32_1 = arith.constant 0 : i32
    %c0_i32_2 = arith.constant 0 : i32
    return %c0_i32, %c0_i32_0, %c0_i32_1 : i32, i32, i32
  }
  func.func @transform_2(%arg0: i32) -> (i32, i32) {
    %c0_i32 = arith.constant 0 : i32
    %c0_i32_0 = arith.constant 0 : i32
    %c0_i32_1 = arith.constant 0 : i32
    return %c0_i32, %c0_i32_0 : i32, i32
  }
  func.func @transform_3(%arg0: i32) -> (i32, i32, i32) {
    %c0_i32 = arith.constant 0 : i32
    %c0_i32_0 = arith.constant 0 : i32
    %c0_i32_1 = arith.constant 0 : i32
    %c0_i32_2 = arith.constant 0 : i32
    return %c0_i32, %c0_i32_0, %c0_i32_1 : i32, i32, i32
  }
  func.func @transform_4(%arg0: i32) -> (i32, i32) {
    %c0_i32 = arith.constant 0 : i32
    %c0_i32_0 = arith.constant 0 : i32
    %c0_i32_1 = arith.constant 0 : i32
    return %c0_i32, %c0_i32_0 : i32, i32
  }
  func.func @transform_5(%arg0: i32) -> (i32, i32) {
    %c0_i32 = arith.constant 0 : i32
    %c0_i32_0 = arith.constant 0 : i32
    %c0_i32_1 = arith.constant 0 : i32
    return %c0_i32, %c0_i32_0 : i32, i32
  }
  func.func @transform_6(%arg0: i32) -> (i32, i32) {
    %c0_i32 = arith.constant 0 : i32
    %c0_i32_0 = arith.constant 0 : i32
    %c0_i32_1 = arith.constant 0 : i32
    return %c0_i32, %c0_i32_0 : i32, i32
  }
  func.func @transform_7(%arg0: i32) -> (i32, i32) {
    %c0_i32 = arith.constant 0 : i32
    %c0_i32_0 = arith.constant 0 : i32
    %c0_i32_1 = arith.constant 0 : i32
    return %c0_i32, %c0_i32_0 : i32, i32
  }
  func.func @transform_8(%arg0: i32) -> (i32, i32) {
    %c0_i32 = arith.constant 0 : i32
    %c0_i32_0 = arith.constant 0 : i32
    %c0_i32_1 = arith.constant 0 : i32
    return %c0_i32, %c0_i32_0 : i32, i32
  }
  func.func @transform_9(%arg0: i32) -> (i32, i32, i32) {
    %c0_i32 = arith.constant 0 : i32
    %c0_i32_0 = arith.constant 0 : i32
    %c0_i32_1 = arith.constant 0 : i32
    return %arg0, %c0_i32, %c0_i32_0 : i32, i32, i32
  }
}

</mosaic_0001>

<llo_original>
// kernel: tpu_custom_call.1
$region0: #{tpu_custom_call.1}
  #allocation0 [shape = 'u32[]', space=smem, size = 0x4, offset = 0x4, fixed_abs, tag = 'smem constant byte address 0x4 - core index']
  #allocation1 [shape = 'u32[144,128]{1,0:T(1,128)}', space=vmem, size = 0x12000, scoped, tag = 'internal scratch']
  #allocation2 [shape = 'bf16[2,26,768]{2,1,0:T(8,128)(2,1)}', space=vmem, size = 0x18000, scoped, tag = 'scratch operand']
  #allocation3 [shape = 'f32[32,128]{1,0:T(8,128)}', space=vmem, size = 0x4000, scoped, tag = 'scratch operand']
  #allocation4 [shape = 'bf16[2,18,128]{2,1,0:T(8,128)(2,1)}', space=vmem, size = 0x3000, scoped, tag = 'scratch operand']
  #allocation5 [shape = 'f32[16,64]{1,0:T(8,128)}', space=vmem, size = 0x2000, scoped, tag = 'scratch operand']
  #allocation11 [shape = 's32[]', space=sflag, size = 0x4, offset = 0, fixed_abs, tag = 'sflag constant byte address 0x0 - dummy sync flag']
  %s0 = inlined_call_operand.vmem [shape: bf16[2,16,768], index: 0, kind: input, shape index: {}]
  %s1 = inlined_call_operand.hbm [shape: bf16[5,768,128], index: 1, kind: input, shape index: {}]
  %s2 = inlined_call_operand.vmem [shape: f32[1,128], index: 2, kind: input, shape index: {}]
  %s3 = inlined_call_operand.vmem [shape: bf16[5,128,64], index: 3, kind: input, shape index: {}]
  %s4 = inlined_call_operand.vmem [shape: f32[1,64], index: 4, kind: input, shape index: {}]
  %s5 = inlined_call_operand.vmem [shape: bf16[256,64], index: 5, kind: input, shape index: {}]
  %s6 = inlined_call_operand.vmem [shape: f32[1,64], index: 6, kind: input, shape index: {}]
  %s7 = inlined_call_operand.vmem [shape: bf16[64,4], index: 7, kind: input, shape index: {}]
  %s8 = inlined_call_operand.vmem [shape: f32[1,4], index: 8, kind: input, shape index: {}]
  %s9 = inlined_call_operand.hbm [shape: f32[1,2,4], index: 9, kind: output, shape index: {}]
  %s10 = sld [smem:[#allocation0]]
  $region85: #{tpu_custom_call.1} parent=0
    _
  %s12 = ssub.s32 1, %s10
  %s13 = scalar_select 0, %s12, %s10
  $region1: #{tpu_custom_call.1} parent=0
    #allocation6 [shape = 'u8[983040]{0}', space=vmem, size = 0xf0000, scoped, tag = 'input window, operand 1, single buffered']
    #allocation7 [shape = 's32[1]{0}', space=sflag, size = 0x4, scoped, tag = 'scoped memory for tpu_custom_call.1']
    #allocation8 [shape = 's32[1]{0}', space=sflag, size = 0x4, scoped, tag = 'scoped memory for tpu_custom_call.1']
    #allocation9 [shape = 'u8[1024]{0}', space=vmem, size = 0x400, scoped, tag = 'output window, operand 0, single buffered']
    %14 = vsyncpa [#allocation7], 0
    %15 = vsyncpa [#allocation8], 0
    // Predicated region
    $region2: #{tpu_custom_call.1} parent=1 // pred_check
      _
    $region3: #{tpu_custom_call.1} parent=1 // pred_check_branch
      %17 = sbr.rel (0) target = $region5
    $region4: #{tpu_custom_call.1} parent=1 // pred_region
      _
    $region5: #{tpu_custom_call.1} parent=1 // pred_fallthru
      _
    // Predicated region
    $region6: #{tpu_custom_call.1} parent=1 // pred_check
      _
    $region7: #{tpu_custom_call.1} parent=1 // pred_check_branch
      %19 = sbr.rel (0) target = $region9
    $region8: #{tpu_custom_call.1} parent=1 // pred_region
      %s21 = ssub.s32 30720, 30720
      %22 = vsyncadd [#allocation7], %s21
      %s23 = sshll.u32 [#allocation6], 4
      %s24 = int_to_ptr.vmem [resolvable:$true] %s23
      %29 = dma.hbm_to_vmem [thread:$0]  %s1, 30720, %s24, [#allocation7], 64, 64, 4
    $region9: #{tpu_custom_call.1} parent=1 // pred_fallthru
      _
    // Predicated region
    $region10: #{tpu_custom_call.1} parent=1 // pred_check
      _
    $region11: #{tpu_custom_call.1} parent=1 // pred_check_branch
      %31 = sbr.rel (0) target = $region13
    $region12: #{tpu_custom_call.1} parent=1 // pred_region
      _
    $region13: #{tpu_custom_call.1} parent=1 // pred_fallthru
      _
    // Predicated region
    $region14: #{tpu_custom_call.1} parent=1 // pred_check
      _
    $region15: #{tpu_custom_call.1} parent=1 // pred_check_branch
      %33 = sbr.rel (0) target = $region17
    $region16: #{tpu_custom_call.1} parent=1 // pred_region
      _
    $region17: #{tpu_custom_call.1} parent=1 // pred_fallthru
      _
    // Predicated region
    $region18: #{tpu_custom_call.1} parent=1 // pred_check
      _
    $region19: #{tpu_custom_call.1} parent=1 // pred_check_branch
      %35 = sbr.rel (0) target = $region21
    $region20: #{tpu_custom_call.1} parent=1 // pred_region
      _
    $region21: #{tpu_custom_call.1} parent=1 // pred_fallthru
      _
    // Predicated region
    $region22: #{tpu_custom_call.1} parent=1 // pred_check
      _
    $region23: #{tpu_custom_call.1} parent=1 // pred_check_branch
      %37 = sbr.rel (0) target = $region25
    $region24: #{tpu_custom_call.1} parent=1 // pred_region
      _
    $region25: #{tpu_custom_call.1} parent=1 // pred_fallthru
      _
    // Predicated region
    $region26: #{tpu_custom_call.1} parent=1 // pred_check
      _
    $region27: #{tpu_custom_call.1} parent=1 // pred_check_branch
      %39 = sbr.rel (0) target = $region29
    $region28: #{tpu_custom_call.1} parent=1 // pred_region
      _
    $region29: #{tpu_custom_call.1} parent=1 // pred_fallthru
      _
    // Predicated region
    $region30: #{tpu_custom_call.1} parent=1 // pred_check
      _
    $region31: #{tpu_custom_call.1} parent=1 // pred_check_branch
      %41 = sbr.rel (0) target = $region33
    $region32: #{tpu_custom_call.1} parent=1 // pred_region
      _
    $region33: #{tpu_custom_call.1} parent=1 // pred_fallthru
      _
    // Predicated region
    $region34: #{tpu_custom_call.1} parent=1 // pred_check
      _
    $region35: #{tpu_custom_call.1} parent=1 // pred_check_branch
      %43 = sbr.rel (0) target = $region37
    $region36: #{tpu_custom_call.1} parent=1 // pred_region
      _
    $region37: #{tpu_custom_call.1} parent=1 // pred_fallthru
      _
    // Predicated region
    $region38: #{tpu_custom_call.1} parent=1 // pred_check
      _
    $region39: #{tpu_custom_call.1} parent=1 // pred_check_branch
      %45 = sbr.rel (0) target = $region41
    $region40: #{tpu_custom_call.1} parent=1 // pred_region
      %46 = dma.done [#allocation7], 30720
    $region41: #{tpu_custom_call.1} parent=1 // pred_fallthru
      _
    %48 = vst [vmem:[#allocation2] sm:$0xff] 0
    %49 = vst [vmem:[#allocation2 + $0x8] sm:$0xff] 0
    %50 = vst [vmem:[#allocation2 + $0x10] sm:$0xff] 0
    %51 = vst [vmem:[#allocation2 + $0x60] sm:$0xff] 0
    %52 = vst [vmem:[#allocation2 + $0x68] sm:$0xff] 0
    %53 = vst [vmem:[#allocation2 + $0x70] sm:$0xff] 0
    %54 = vst [vmem:[#allocation2 + $0x48] sm:$0x11] 0
    %55 = vst [vmem:[#allocation2 + $0x50] sm:$0x11] 0
    %56 = vst [vmem:[#allocation2 + $0x58] sm:$0x11] 0
    %57 = vst [vmem:[#allocation2 + $0xa8] sm:$0x11] 0
    %58 = vst [vmem:[#allocation2 + $0xb0] sm:$0x11] 0
    %59 = vst [vmem:[#allocation2 + $0xb8] sm:$0x11] 0
    %60 = vst [vmem:[#allocation4] sm:$0xf] 0
    %61 = vst [vmem:[#allocation4 + $0xc] sm:$0xf] 0
    %62 = vst [vmem:[#allocation4 + $0x8] sm:$0x1] 0
    %63 = vst [vmem:[#allocation4 + $0x14] sm:$0x1] 0
    $region42: #{tpu_custom_call.1} parent=1
      #allocation10 [shape = 's32[1]{0}', space=sflag, size = 0x4, scoped, tag = 'scoped memory for tpu_custom_call.1']
      %s64 = scalar_lea.vmem [#allocation2], 24
      %p66 = scmp.lt.u32.totalorder 48, 8
      %p67 = pneg %p66
      // Predicated region
      $region43: #{tpu_custom_call.1} parent=42 // pred_check
        _
      $region44: #{tpu_custom_call.1} parent=42 // pred_check_branch
        %69 = sbr.rel (%p66) target = $region46
      $region45: #{tpu_custom_call.1} parent=42 // pred_region
        %s87 = sand.u32 48, 7
        %p88 = scmp.eq.s32.totalorder %s87, 0
        // Predicated region
        $region58: #{tpu_custom_call.1} parent=45 // pred_check
          %p89 = pneg %p88
        $region59: #{tpu_custom_call.1} parent=45 // pred_check_branch
          %91 = sbr.rel (%p89) target = $region61
        $region60: #{tpu_custom_call.1} parent=45 // pred_region
          loop: start=0, step=1, limit=1
          $region62: #{tpu_custom_call.1} parent=60 // loop_pre_header
            _
          $region63: #{tpu_custom_call.1} parent=60 // loop_header
            %s93 = sphi 0, %s97
            %p94 = scmp.ge.s32.totalorder %s93, 1
            %s98 = sphi %s0, %s0
            %s99 = sphi %s64, %s64
          $region64: #{tpu_custom_call.1} parent=60 // loop_header_branch
            %96 = sbr.rel (%p94) target = $region68
          $region65: #{tpu_custom_call.1} parent=60 // loop_body
            %v100 = vld [vmem:[%s98] sm:$0xff]
            %101 = vst [vmem:[%s99] sm:$0xff] %v100
            %v102 = vld [vmem:[%s98 + $0x8] sm:$0xff]
            %103 = vst [vmem:[%s99 + $0x8] sm:$0xff] %v102
            %v104 = vld [vmem:[%s98 + $0x10] sm:$0xff]
            %105 = vst [vmem:[%s99 + $0x10] sm:$0xff] %v104
            %v106 = vld [vmem:[%s98 + $0x18] sm:$0xff]
            %107 = vst [vmem:[%s99 + $0x18] sm:$0xff] %v106
            %v108 = vld [vmem:[%s98 + $0x20] sm:$0xff]
            %109 = vst [vmem:[%s99 + $0x20] sm:$0xff] %v108
            %v110 = vld [vmem:[%s98 + $0x28] sm:$0xff]
            %111 = vst [vmem:[%s99 + $0x28] sm:$0xff] %v110
            %v112 = vld [vmem:[%s98 + $0x30] sm:$0xff]
            %113 = vst [vmem:[%s99 + $0x60] sm:$0xff] %v112
            %v114 = vld [vmem:[%s98 + $0x38] sm:$0xff]
            %115 = vst [vmem:[%s99 + $0x68] sm:$0xff] %v114
            %v116 = vld [vmem:[%s98 + $0x40] sm:$0xff]
            %117 = vst [vmem:[%s99 + $0x70] sm:$0xff] %v116
            %v118 = vld [vmem:[%s98 + $0x48] sm:$0xff]
            %119 = vst [vmem:[%s99 + $0x78] sm:$0xff] %v118
            %v120 = vld [vmem:[%s98 + $0x50] sm:$0xff]
            %121 = vst [vmem:[%s99 + $0x80] sm:$0xff] %v120
            %v122 = vld [vmem:[%s98 + $0x58] sm:$0xff]
            %123 = vst [vmem:[%s99 + $0x88] sm:$0xff] %v122
          $region66: #{tpu_custom_call.1} parent=60 // loop_footer
            %s97 = sadd.s32 1, %s93
          $region67: #{tpu_custom_call.1} parent=60 // loop_footer_branch
            %92 = sbr.rel target = $region63
          $region68: #{tpu_custom_call.1} parent=60 // loop_exit
            _
        $region61: #{tpu_custom_call.1} parent=45 // pred_fallthru
          _
        %p124 = pneg %p88
        // Predicated region
        $region69: #{tpu_custom_call.1} parent=45 // pred_check
          _
        $region70: #{tpu_custom_call.1} parent=45 // pred_check_branch
          %126 = sbr.rel (%p88) target = $region72
        $region71: #{tpu_custom_call.1} parent=45 // pred_region
          %s127 = sand.u32 48, 7
        $region72: #{tpu_custom_call.1} parent=45 // pred_fallthru
          _
      $region46: #{tpu_custom_call.1} parent=42 // pred_fallthru
        _
      // Predicated region
      $region47: #{tpu_custom_call.1} parent=42 // pred_check
        %p70 = pneg %p66
      $region48: #{tpu_custom_call.1} parent=42 // pred_check_branch
        %72 = sbr.rel (%p70) target = $region50
      $region49: #{tpu_custom_call.1} parent=42 // pred_region
        %s73 = sshll.u32 1, 48
        %s74 = ssub.s32 %s73, 1
        loop: start=0, step=1, limit=1
        $region51: #{tpu_custom_call.1} parent=49 // loop_pre_header
          _
        $region52: #{tpu_custom_call.1} parent=49 // loop_header
          %s76 = sphi 0, %s80
          %p77 = scmp.ge.s32.totalorder %s76, 1
          %s81 = sphi %s0, %s0
          %s82 = sphi %s64, %s64
        $region53: #{tpu_custom_call.1} parent=49 // loop_header_branch
          %79 = sbr.rel (%p77) target = $region57
        $region54: #{tpu_custom_call.1} parent=49 // loop_body
          %v83 = vld [vmem:[%s81] sm:%s74]
          %84 = vst [vmem:[%s82] sm:%s74] %v83
          %v85 = vld [vmem:[%s81 + $0x30] sm:%s74]
          %86 = vst [vmem:[%s82 + $0x60] sm:%s74] %v85
        $region55: #{tpu_custom_call.1} parent=49 // loop_footer
          %s80 = sadd.s32 1, %s76
        $region56: #{tpu_custom_call.1} parent=49 // loop_footer_branch
          %75 = sbr.rel target = $region52
        $region57: #{tpu_custom_call.1} parent=49 // loop_exit
          _
      $region50: #{tpu_custom_call.1} parent=42 // pred_fallthru
        _
      // Predicated region
      $region73: #{tpu_custom_call.1} parent=42 // pred_check
        _
      $region74: #{tpu_custom_call.1} parent=42 // pred_check_branch
        %130 = sbr.rel (0) target = $region76
      $region75: #{tpu_custom_call.1} parent=42 // pred_region
        %131 = vsyncadd [#allocation10], 1536
      $region76: #{tpu_custom_call.1} parent=42 // pred_fallthru
        _
      %s132 = smul.u32 4, 2
      %s133 = smul.u32 %s132, 2
      %s134 = smul.u32 %s133, 6
      %s135 = sshll.u32 %s134, 4
      %136 = dma.done [#allocation10], %s135
    %v137 = vld [vmem:[#allocation2] sm:$0x88]
    %v138 = vld [vmem:[#allocation2 + $0x8] sm:$0x88]
    %v139 = vld [vmem:[#allocation2 + $0x10] sm:$0x88]
    %v140 = vld [vmem:[#allocation2 + $0x18] sm:$0xff]
    %v141 = vld [vmem:[#allocation2 + $0x20] sm:$0xff]
    %v142 = vld [vmem:[#allocation2 + $0x28] sm:$0xff]
    %v143 = vld [vmem:[#allocation2 + $0x30] sm:$0x77]
    %v144 = vld [vmem:[#allocation2 + $0x38] sm:$0x77]
    %v145 = vld [vmem:[#allocation2 + $0x40] sm:$0x77]
    %v146 = vld [vmem:[#allocation2 + $0x60] sm:$0x88]
    %v147 = vld [vmem:[#allocation2 + $0x68] sm:$0x88]
    %v148 = vld [vmem:[#allocation2 + $0x70] sm:$0x88]
    %v149 = vld [vmem:[#allocation2 + $0x78] sm:$0xff]
    %v150 = vld [vmem:[#allocation2 + $0x80] sm:$0xff]
    %v151 = vld [vmem:[#allocation2 + $0x88] sm:$0xff]
    %v152 = vld [vmem:[#allocation2 + $0x90] sm:$0x77]
    %v153 = vld [vmem:[#allocation2 + $0x98] sm:$0x77]
    %v154 = vld [vmem:[#allocation2 + $0xa0] sm:$0x77]
    %vm173 = vcmask 1040384
    %vm174 = vcmask 1044484
    %vm175 = vmor %vm173, %vm174
    %v176 = vrot.slane %v137, 7
    %v177 = vrot.slane %v176, 4
    %v178 = vrot.slane %v140, 7
    %v179 = vsel %vm175, %v177, %v178
    %v180 = vrot.slane %v138, 7
    %v181 = vrot.slane %v180, 4
    %v182 = vrot.slane %v141, 7
    %v183 = vsel %vm175, %v181, %v182
    %v184 = vrot.slane %v139, 7
    %v185 = vrot.slane %v184, 4
    %v186 = vrot.slane %v142, 7
    %v187 = vsel %vm175, %v185, %v186
    %v188 = vrot.slane %v178, 4
    %v189 = vrot.slane %v143, 7
    %v190 = vsel %vm175, %v188, %v189
    %v191 = vrot.slane %v182, 4
    %v192 = vrot.slane %v144, 7
    %v193 = vsel %vm175, %v191, %v192
    %v194 = vrot.slane %v186, 4
    %v195 = vrot.slane %v145, 7
    %v196 = vsel %vm175, %v194, %v195
    %v197 = vrot.slane %v146, 7
    %v198 = vrot.slane %v197, 4
    %v199 = vrot.slane %v149, 7
    %v200 = vsel %vm175, %v198, %v199
    %v201 = vrot.slane %v147, 7
    %v202 = vrot.slane %v201, 4
    %v203 = vrot.slane %v150, 7
    %v204 = vsel %vm175, %v202, %v203
    %v205 = vrot.slane %v148, 7
    %v206 = vrot.slane %v205, 4
    %v207 = vrot.slane %v151, 7
    %v208 = vsel %vm175, %v206, %v207
    %v209 = vrot.slane %v199, 4
    %v210 = vrot.slane %v152, 7
    %v211 = vsel %vm175, %v209, %v210
    %v212 = vrot.slane %v203, 4
    %v213 = vrot.slane %v153, 7
    %v214 = vsel %vm175, %v212, %v213
    %v215 = vrot.slane %v207, 4
    %v216 = vrot.slane %v154, 7
    %v217 = vsel %vm175, %v215, %v216
    %v218 = vld [vmem:[#allocation6] sm:$0xf]
    %v219 = vld [vmem:[#allocation6 + $0x4] sm:$0xf]
    %v220 = vld [vmem:[#allocation6 + $0x8] sm:$0xf]
    %v221 = vld [vmem:[#allocation6 + $0xc] sm:$0xf]
    %v222 = vld [vmem:[#allocation6 + $0x10] sm:$0xf]
    %v223 = vld [vmem:[#allocation6 + $0x14] sm:$0xf]
    %v224 = vld [vmem:[#allocation6 + $0x18] sm:$0xf]
    %v225 = vld [vmem:[#allocation6 + $0x1c] sm:$0xf]
    %v226 = vld [vmem:[#allocation6 + $0x20] sm:$0xf]
    %v227 = vld [vmem:[#allocation6 + $0x24] sm:$0xf]
    %v228 = vld [vmem:[#allocation6 + $0x28] sm:$0xf]
    %v229 = vld [vmem:[#allocation6 + $0x2c] sm:$0xf]
    %v230 = vld [vmem:[#allocation6 + $0x30] sm:$0xf]
    %v231 = vld [vmem:[#allocation6 + $0x34] sm:$0xf]
    %v232 = vld [vmem:[#allocation6 + $0x38] sm:$0xf]
    %v233 = vld [vmem:[#allocation6 + $0x3c] sm:$0xf]
    %v234 = vld [vmem:[#allocation6 + $0x40] sm:$0xf]
    %v235 = vld [vmem:[#allocation6 + $0x44] sm:$0xf]
    %v236 = vld [vmem:[#allocation6 + $0x48] sm:$0xf]
    %v237 = vld [vmem:[#allocation6 + $0x4c] sm:$0xf]
    %v238 = vld [vmem:[#allocation6 + $0x50] sm:$0xf]
    %v239 = vld [vmem:[#allocation6 + $0x54] sm:$0xf]
    %v240 = vld [vmem:[#allocation6 + $0x58] sm:$0xf]
    %v241 = vld [vmem:[#allocation6 + $0x5c] sm:$0xf]
    %v242 = vld [vmem:[#allocation6 + $0x60] sm:$0xf]
    %v243 = vld [vmem:[#allocation6 + $0x64] sm:$0xf]
    %v244 = vld [vmem:[#allocation6 + $0x68] sm:$0xf]
    %v245 = vld [vmem:[#allocation6 + $0x6c] sm:$0xf]
    %v246 = vld [vmem:[#allocation6 + $0x70] sm:$0xf]
    %v247 = vld [vmem:[#allocation6 + $0x74] sm:$0xf]
    %v248 = vld [vmem:[#allocation6 + $0x78] sm:$0xf]
    %v249 = vld [vmem:[#allocation6 + $0x7c] sm:$0xf]
    %v250 = vld [vmem:[#allocation6 + $0x80] sm:$0xf]
    %v251 = vld [vmem:[#allocation6 + $0x84] sm:$0xf]
    %v252 = vld [vmem:[#allocation6 + $0x88] sm:$0xf]
    %v253 = vld [vmem:[#allocation6 + $0x8c] sm:$0xf]
    %v254 = vld [vmem:[#allocation6 + $0x90] sm:$0xf]
    %v255 = vld [vmem:[#allocation6 + $0x94] sm:$0xf]
    %v256 = vld [vmem:[#allocation6 + $0x98] sm:$0xf]
    %v257 = vld [vmem:[#allocation6 + $0x9c] sm:$0xf]
    %v258 = vld [vmem:[#allocation6 + $0xa0] sm:$0xf]
    %v259 = vld [vmem:[#allocation6 + $0xa4] sm:$0xf]
    %v260 = vld [vmem:[#allocation6 + $0xa8] sm:$0xf]
    %v261 = vld [vmem:[#allocation6 + $0xac] sm:$0xf]
    %v262 = vld [vmem:[#allocation6 + $0xb0] sm:$0xf]
    %v263 = vld [vmem:[#allocation6 + $0xb4] sm:$0xf]
    %v264 = vld [vmem:[#allocation6 + $0xb8] sm:$0xf]
    %v265 = vld [vmem:[#allocation6 + $0xbc] sm:$0xf]
    %v266 = vld [vmem:[#allocation6 + $0xc0] sm:$0xf]
    %v267 = vld [vmem:[#allocation6 + $0xc4] sm:$0xf]
    %v268 = vld [vmem:[#allocation6 + $0xc8] sm:$0xf]
    %v269 = vld [vmem:[#allocation6 + $0xcc] sm:$0xf]
    %v270 = vld [vmem:[#allocation6 + $0xd0] sm:$0xf]
    %v271 = vld [vmem:[#allocation6 + $0xd4] sm:$0xf]
    %v272 = vld [vmem:[#allocation6 + $0xd8] sm:$0xf]
    %v273 = vld [vmem:[#allocation6 + $0xdc] sm:$0xf]
    %v274 = vld [vmem:[#allocation6 + $0xe0] sm:$0xf]
    %v275 = vld [vmem:[#allocation6 + $0xe4] sm:$0xf]
    %v276 = vld [vmem:[#allocation6 + $0xe8] sm:$0xf]
    %v277 = vld [vmem:[#allocation6 + $0xec] sm:$0xf]
    %v278 = vld [vmem:[#allocation6 + $0xf0] sm:$0xf]
    %v279 = vld [vmem:[#allocation6 + $0xf4] sm:$0xf]
    %v280 = vld [vmem:[#allocation6 + $0xf8] sm:$0xf]
    %v281 = vld [vmem:[#allocation6 + $0xfc] sm:$0xf]
    %v282 = vld [vmem:[#allocation6 + $0x100] sm:$0xf]
    %v283 = vld [vmem:[#allocation6 + $0x104] sm:$0xf]
    %v284 = vld [vmem:[#allocation6 + $0x108] sm:$0xf]
    %v285 = vld [vmem:[#allocation6 + $0x10c] sm:$0xf]
    %v286 = vld [vmem:[#allocation6 + $0x110] sm:$0xf]
    %v287 = vld [vmem:[#allocation6 + $0x114] sm:$0xf]
    %v288 = vld [vmem:[#allocation6 + $0x118] sm:$0xf]
    %v289 = vld [vmem:[#allocation6 + $0x11c] sm:$0xf]
    %v290 = vld [vmem:[#allocation6 + $0x120] sm:$0xf]
    %v291 = vld [vmem:[#allocation6 + $0x124] sm:$0xf]
    %v292 = vld [vmem:[#allocation6 + $0x128] sm:$0xf]
    %v293 = vld [vmem:[#allocation6 + $0x12c] sm:$0xf]
    %v294 = vld [vmem:[#allocation6 + $0x130] sm:$0xf]
    %v295 = vld [vmem:[#allocation6 + $0x134] sm:$0xf]
    %v296 = vld [vmem:[#allocation6 + $0x138] sm:$0xf]
    %v297 = vld [vmem:[#allocation6 + $0x13c] sm:$0xf]
    %v298 = vld [vmem:[#allocation6 + $0x140] sm:$0xf]
    %v299 = vld [vmem:[#allocation6 + $0x144] sm:$0xf]
    %v300 = vld [vmem:[#allocation6 + $0x148] sm:$0xf]
    %v301 = vld [vmem:[#allocation6 + $0x14c] sm:$0xf]
    %v302 = vld [vmem:[#allocation6 + $0x150] sm:$0xf]
    %v303 = vld [vmem:[#allocation6 + $0x154] sm:$0xf]
    %v304 = vld [vmem:[#allocation6 + $0x158] sm:$0xf]
    %v305 = vld [vmem:[#allocation6 + $0x15c] sm:$0xf]
    %v306 = vld [vmem:[#allocation6 + $0x160] sm:$0xf]
    %v307 = vld [vmem:[#allocation6 + $0x164] sm:$0xf]
    %v308 = vld [vmem:[#allocation6 + $0x168] sm:$0xf]
    %v309 = vld [vmem:[#allocation6 + $0x16c] sm:$0xf]
    %v310 = vld [vmem:[#allocation6 + $0x170] sm:$0xf]
    %v311 = vld [vmem:[#allocation6 + $0x174] sm:$0xf]
    %v312 = vld [vmem:[#allocation6 + $0x178] sm:$0xf]
    %v313 = vld [vmem:[#allocation6 + $0x17c] sm:$0xf]
    %v314 = vld [vmem:[#allocation2 + $0x30] sm:$0xff]
    %v315 = vld [vmem:[#allocation2 + $0x38] sm:$0xff]
    %v316 = vld [vmem:[#allocation2 + $0x40] sm:$0xff]
    %v317 = vld [vmem:[#allocation2 + $0x90] sm:$0xff]
    %v318 = vld [vmem:[#allocation2 + $0x98] sm:$0xff]
    %v319 = vld [vmem:[#allocation2 + $0xa0] sm:$0xff]
    %vm320 = vsmask.f32 256
    %vm321 = vsmask.f32 4368
    %vm322 = vmor %vm320, %vm321
    %v324 = vshrl.u32 %v137, 16
    %v326 = vrot.slane %v324, 7
    %v327 = vrot.slane %v326, 4
    %v329 = vshrl.u32 %v140, 16
    %v331 = vrot.slane %v329, 7
    %v332 = vshll.u32 %v140, 16
    %v334 = vor.u32 %v331, %v332
    %v335 = vsel %vm322, %v327, %v334
    %v337 = vshrl.u32 %v138, 16
    %v339 = vrot.slane %v337, 7
    %v340 = vrot.slane %v339, 4
    %v342 = vshrl.u32 %v141, 16
    %v344 = vrot.slane %v342, 7
    %v345 = vshll.u32 %v141, 16
    %v347 = vor.u32 %v344, %v345
    %v348 = vsel %vm322, %v340, %v347
    %v350 = vshrl.u32 %v139, 16
    %v352 = vrot.slane %v350, 7
    %v353 = vrot.slane %v352, 4
    %v355 = vshrl.u32 %v142, 16
    %v357 = vrot.slane %v355, 7
    %v358 = vshll.u32 %v142, 16
    %v360 = vor.u32 %v357, %v358
    %v361 = vsel %vm322, %v353, %v360
    %v362 = vrot.slane %v331, 4
    %v364 = vshrl.u32 %v314, 16
    %v366 = vrot.slane %v364, 7
    %v367 = vshll.u32 %v314, 16
    %v369 = vor.u32 %v366, %v367
    %v370 = vsel %vm322, %v362, %v369
    %v371 = vrot.slane %v344, 4
    %v373 = vshrl.u32 %v315, 16
    %v375 = vrot.slane %v373, 7
    %v376 = vshll.u32 %v315, 16
    %v378 = vor.u32 %v375, %v376
    %v379 = vsel %vm322, %v371, %v378
    %v380 = vrot.slane %v357, 4
    %v382 = vshrl.u32 %v316, 16
    %v384 = vrot.slane %v382, 7
    %v385 = vshll.u32 %v316, 16
    %v387 = vor.u32 %v384, %v385
    %v388 = vsel %vm322, %v380, %v387
    %v390 = vshrl.u32 %v146, 16
    %v392 = vrot.slane %v390, 7
    %v393 = vrot.slane %v392, 4
    %v395 = vshrl.u32 %v149, 16
    %v397 = vrot.slane %v395, 7
    %v398 = vshll.u32 %v149, 16
    %v400 = vor.u32 %v397, %v398
    %v401 = vsel %vm322, %v393, %v400
    %v403 = vshrl.u32 %v147, 16
    %v405 = vrot.slane %v403, 7
    %v406 = vrot.slane %v405, 4
    %v408 = vshrl.u32 %v150, 16
    %v410 = vrot.slane %v408, 7
    %v411 = vshll.u32 %v150, 16
    %v413 = vor.u32 %v410, %v411
    %v414 = vsel %vm322, %v406, %v413
    %v416 = vshrl.u32 %v148, 16
    %v418 = vrot.slane %v416, 7
    %v419 = vrot.slane %v418, 4
    %v421 = vshrl.u32 %v151, 16
    %v423 = vrot.slane %v421, 7
    %v424 = vshll.u32 %v151, 16
    %v426 = vor.u32 %v423, %v424
    %v427 = vsel %vm322, %v419, %v426
    %v428 = vrot.slane %v397, 4
    %v430 = vshrl.u32 %v317, 16
    %v432 = vrot.slane %v430, 7
    %v433 = vshll.u32 %v317, 16
    %v435 = vor.u32 %v432, %v433
    %v436 = vsel %vm322, %v428, %v435
    %v437 = vrot.slane %v410, 4
    %v439 = vshrl.u32 %v318, 16
    %v441 = vrot.slane %v439, 7
    %v442 = vshll.u32 %v318, 16
    %v444 = vor.u32 %v441, %v442
    %v445 = vsel %vm322, %v437, %v444
    %v446 = vrot.slane %v423, 4
    %v448 = vshrl.u32 %v319, 16
    %v450 = vrot.slane %v448, 7
    %v451 = vshll.u32 %v319, 16
    %v453 = vor.u32 %v450, %v451
    %v454 = vsel %vm322, %v446, %v453
    %s455 = scalar_lea.vmem [#allocation6], 384
    %v456 = vld [vmem:[%s455] sm:$0xf]
    %v457 = vld [vmem:[%s455 + $0x4] sm:$0xf]
    %v458 = vld [vmem:[%s455 + $0x8] sm:$0xf]
    %v459 = vld [vmem:[%s455 + $0xc] sm:$0xf]
    %v460 = vld [vmem:[%s455 + $0x10] sm:$0xf]
    %v461 = vld [vmem:[%s455 + $0x14] sm:$0xf]
    %v462 = vld [vmem:[%s455 + $0x18] sm:$0xf]
    %v463 = vld [vmem:[%s455 + $0x1c] sm:$0xf]
    %v464 = vld [vmem:[%s455 + $0x20] sm:$0xf]
    %v465 = vld [vmem:[%s455 + $0x24] sm:$0xf]
    %v466 = vld [vmem:[%s455 + $0x28] sm:$0xf]
    %v467 = vld [vmem:[%s455 + $0x2c] sm:$0xf]
    %v468 = vld [vmem:[%s455 + $0x30] sm:$0xf]
    %v469 = vld [vmem:[%s455 + $0x34] sm:$0xf]
    %v470 = vld [vmem:[%s455 + $0x38] sm:$0xf]
    %v471 = vld [vmem:[%s455 + $0x3c] sm:$0xf]
    %v472 = vld [vmem:[%s455 + $0x40] sm:$0xf]
    %v473 = vld [vmem:[%s455 + $0x44] sm:$0xf]
    %v474 = vld [vmem:[%s455 + $0x48] sm:$0xf]
    %v475 = vld [vmem:[%s455 + $0x4c] sm:$0xf]
    %v476 = vld [vmem:[%s455 + $0x50] sm:$0xf]
    %v477 = vld [vmem:[%s455 + $0x54] sm:$0xf]
    %v478 = vld [vmem:[%s455 + $0x58] sm:$0xf]
    %v479 = vld [vmem:[%s455 + $0x5c] sm:$0xf]
    %v480 = vld [vmem:[%s455 + $0x60] sm:$0xf]
    %v481 = vld [vmem:[%s455 + $0x64] sm:$0xf]
    %v482 = vld [vmem:[%s455 + $0x68] sm:$0xf]
    %v483 = vld [vmem:[%s455 + $0x6c] sm:$0xf]
    %v484 = vld [vmem:[%s455 + $0x70] sm:$0xf]
    %v485 = vld [vmem:[%s455 + $0x74] sm:$0xf]
    %v486 = vld [vmem:[%s455 + $0x78] sm:$0xf]
    %v487 = vld [vmem:[%s455 + $0x7c] sm:$0xf]
    %v488 = vld [vmem:[%s455 + $0x80] sm:$0xf]
    %v489 = vld [vmem:[%s455 + $0x84] sm:$0xf]
    %v490 = vld [vmem:[%s455 + $0x88] sm:$0xf]
    %v491 = vld [vmem:[%s455 + $0x8c] sm:$0xf]
    %v492 = vld [vmem:[%s455 + $0x90] sm:$0xf]
    %v493 = vld [vmem:[%s455 + $0x94] sm:$0xf]
    %v494 = vld [vmem:[%s455 + $0x98] sm:$0xf]
    %v495 = vld [vmem:[%s455 + $0x9c] sm:$0xf]
    %v496 = vld [vmem:[%s455 + $0xa0] sm:$0xf]
    %v497 = vld [vmem:[%s455 + $0xa4] sm:$0xf]
    %v498 = vld [vmem:[%s455 + $0xa8] sm:$0xf]
    %v499 = vld [vmem:[%s455 + $0xac] sm:$0xf]
    %v500 = vld [vmem:[%s455 + $0xb0] sm:$0xf]
    %v501 = vld [vmem:[%s455 + $0xb4] sm:$0xf]
    %v502 = vld [vmem:[%s455 + $0xb8] sm:$0xf]
    %v503 = vld [vmem:[%s455 + $0xbc] sm:$0xf]
    %v504 = vld [vmem:[%s455 + $0xc0] sm:$0xf]
    %v505 = vld [vmem:[%s455 + $0xc4] sm:$0xf]
    %v506 = vld [vmem:[%s455 + $0xc8] sm:$0xf]
    %v507 = vld [vmem:[%s455 + $0xcc] sm:$0xf]
    %v508 = vld [vmem:[%s455 + $0xd0] sm:$0xf]
    %v509 = vld [vmem:[%s455 + $0xd4] sm:$0xf]
    %v510 = vld [vmem:[%s455 + $0xd8] sm:$0xf]
    %v511 = vld [vmem:[%s455 + $0xdc] sm:$0xf]
    %v512 = vld [vmem:[%s455 + $0xe0] sm:$0xf]
    %v513 = vld [vmem:[%s455 + $0xe4] sm:$0xf]
    %v514 = vld [vmem:[%s455 + $0xe8] sm:$0xf]
    %v515 = vld [vmem:[%s455 + $0xec] sm:$0xf]
    %v516 = vld [vmem:[%s455 + $0xf0] sm:$0xf]
    %v517 = vld [vmem:[%s455 + $0xf4] sm:$0xf]
    %v518 = vld [vmem:[%s455 + $0xf8] sm:$0xf]
    %v519 = vld [vmem:[%s455 + $0xfc] sm:$0xf]
    %v520 = vld [vmem:[%s455 + $0x100] sm:$0xf]
    %v521 = vld [vmem:[%s455 + $0x104] sm:$0xf]
    %v522 = vld [vmem:[%s455 + $0x108] sm:$0xf]
    %v523 = vld [vmem:[%s455 + $0x10c] sm:$0xf]
    %v524 = vld [vmem:[%s455 + $0x110] sm:$0xf]
    %v525 = vld [vmem:[%s455 + $0x114] sm:$0xf]
    %v526 = vld [vmem:[%s455 + $0x118] sm:$0xf]
    %v527 = vld [vmem:[%s455 + $0x11c] sm:$0xf]
    %v528 = vld [vmem:[%s455 + $0x120] sm:$0xf]
    %v529 = vld [vmem:[%s455 + $0x124] sm:$0xf]
    %v530 = vld [vmem:[%s455 + $0x128] sm:$0xf]
    %v531 = vld [vmem:[%s455 + $0x12c] sm:$0xf]
    %v532 = vld [vmem:[%s455 + $0x130] sm:$0xf]
    %v533 = vld [vmem:[%s455 + $0x134] sm:$0xf]
    %v534 = vld [vmem:[%s455 + $0x138] sm:$0xf]
    %v535 = vld [vmem:[%s455 + $0x13c] sm:$0xf]
    %v536 = vld [vmem:[%s455 + $0x140] sm:$0xf]
    %v537 = vld [vmem:[%s455 + $0x144] sm:$0xf]
    %v538 = vld [vmem:[%s455 + $0x148] sm:$0xf]
    %v539 = vld [vmem:[%s455 + $0x14c] sm:$0xf]
    %v540 = vld [vmem:[%s455 + $0x150] sm:$0xf]
    %v541 = vld [vmem:[%s455 + $0x154] sm:$0xf]
    %v542 = vld [vmem:[%s455 + $0x158] sm:$0xf]
    %v543 = vld [vmem:[%s455 + $0x15c] sm:$0xf]
    %v544 = vld [vmem:[%s455 + $0x160] sm:$0xf]
    %v545 = vld [vmem:[%s455 + $0x164] sm:$0xf]
    %v546 = vld [vmem:[%s455 + $0x168] sm:$0xf]
    %v547 = vld [vmem:[%s455 + $0x16c] sm:$0xf]
    %v548 = vld [vmem:[%s455 + $0x170] sm:$0xf]
    %v549 = vld [vmem:[%s455 + $0x174] sm:$0xf]
    %v550 = vld [vmem:[%s455 + $0x178] sm:$0xf]
    %v551 = vld [vmem:[%s455 + $0x17c] sm:$0xf]
    %v552 = vunpack.c.l.b16 %v335
    %v553 = vunpack.c.h.b16 %v335
    %v554 = vunpack.c.l.b16 %v348
    %v555 = vunpack.c.h.b16 %v348
    %v556 = vunpack.c.l.b16 %v361
    %v557 = vunpack.c.h.b16 %v361
    %v558 = vunpack.c.l.b16 %v370
    %v559 = vunpack.c.h.b16 %v370
    %v560 = vunpack.c.l.b16 %v379
    %v561 = vunpack.c.h.b16 %v379
    %v562 = vunpack.c.l.b16 %v388
    %v563 = vunpack.c.h.b16 %v388
    %v564 = vunpack.c.l.b16 %v401
    %v565 = vunpack.c.h.b16 %v401
    %v566 = vunpack.c.l.b16 %v414
    %v567 = vunpack.c.h.b16 %v414
    %v568 = vunpack.c.l.b16 %v427
    %v569 = vunpack.c.h.b16 %v427
    %v570 = vunpack.c.l.b16 %v436
    %v571 = vunpack.c.h.b16 %v436
    %v572 = vunpack.c.l.b16 %v445
    %v573 = vunpack.c.h.b16 %v445
    %v574 = vunpack.c.l.b16 %v454
    %v575 = vunpack.c.h.b16 %v454
    %v576 = vpack.c.b16 %v558, %v552
    %v577 = vpack.c.b16 %v559, %v553
    %v578 = vpack.c.b16 %v560, %v554
    %v579 = vpack.c.b16 %v561, %v555
    %v580 = vpack.c.b16 %v562, %v556
    %v581 = vpack.c.b16 %v563, %v557
    %v582 = vpack.c.b16 %v570, %v564
    %v583 = vpack.c.b16 %v571, %v565
    %v584 = vpack.c.b16 %v572, %v566
    %v585 = vpack.c.b16 %v573, %v567
    %v586 = vpack.c.b16 %v574, %v568
    %v587 = vpack.c.b16 %v575, %v569
    %v696 = vunpack.c.l.b16 %v456
    %v697 = vunpack.c.l.b16 %v457
    %v698 = vunpack.c.l.b16 %v458
    %v699 = vunpack.c.l.b16 %v459
    %v700 = vunpack.c.l.b16 %v460
    %v701 = vunpack.c.l.b16 %v461
    %v702 = vunpack.c.l.b16 %v462
    %v703 = vunpack.c.l.b16 %v463
    %v704 = vunpack.c.l.b16 %v464
    %v705 = vunpack.c.l.b16 %v465
    %v706 = vunpack.c.l.b16 %v466
    %v707 = vunpack.c.l.b16 %v467
    %v708 = vunpack.c.l.b16 %v468
    %v709 = vunpack.c.l.b16 %v469
    %v710 = vunpack.c.l.b16 %v470
    %v711 = vunpack.c.l.b16 %v471
    %v712 = vunpack.c.l.b16 %v472
    %v713 = vunpack.c.l.b16 %v473
    %v714 = vunpack.c.l.b16 %v474
    %v715 = vunpack.c.l.b16 %v475
    %v716 = vunpack.c.l.b16 %v476
    %v717 = vunpack.c.l.b16 %v477
    %v718 = vunpack.c.l.b16 %v478
    %v719 = vunpack.c.l.b16 %v479
    %v720 = vunpack.c.l.b16 %v480
    %v721 = vunpack.c.l.b16 %v481
    %v722 = vunpack.c.l.b16 %v482
    %v723 = vunpack.c.l.b16 %v483
    %v724 = vunpack.c.l.b16 %v484
    %v725 = vunpack.c.l.b16 %v485
    %v726 = vunpack.c.l.b16 %v486
    %v727 = vunpack.c.l.b16 %v487
    %v728 = vunpack.c.l.b16 %v488
    %v729 = vunpack.c.l.b16 %v489
    %v730 = vunpack.c.l.b16 %v490
    %v731 = vunpack.c.l.b16 %v491
    %v732 = vunpack.c.l.b16 %v492
    %v733 = vunpack.c.l.b16 %v493
    %v734 = vunpack.c.l.b16 %v494
    %v735 = vunpack.c.l.b16 %v495
    %v736 = vunpack.c.l.b16 %v496
    %v737 = vunpack.c.l.b16 %v497
    %v738 = vunpack.c.l.b16 %v498
    %v739 = vunpack.c.l.b16 %v499
    %v740 = vunpack.c.l.b16 %v500
    %v741 = vunpack.c.l.b16 %v501
    %v742 = vunpack.c.l.b16 %v502
    %v743 = vunpack.c.l.b16 %v503
    %v744 = vunpack.c.l.b16 %v504
    %v745 = vunpack.c.l.b16 %v505
    %v746 = vunpack.c.l.b16 %v506
    %v747 = vunpack.c.l.b16 %v507
    %v748 = vunpack.c.l.b16 %v508
    %v749 = vunpack.c.l.b16 %v509
    %v750 = vunpack.c.l.b16 %v510
    %v751 = vunpack.c.l.b16 %v511
    %v752 = vunpack.c.l.b16 %v512
    %v753 = vunpack.c.l.b16 %v513
    %v754 = vunpack.c.l.b16 %v514
    %v755 = vunpack.c.l.b16 %v515
    %v756 = vunpack.c.l.b16 %v516
    %v757 = vunpack.c.l.b16 %v517
    %v758 = vunpack.c.l.b16 %v518
    %v759 = vunpack.c.l.b16 %v519
    %v760 = vunpack.c.l.b16 %v520
    %v761 = vunpack.c.l.b16 %v521
    %v762 = vunpack.c.l.b16 %v522
    %v763 = vunpack.c.l.b16 %v523
    %v764 = vunpack.c.l.b16 %v524
    %v765 = vunpack.c.l.b16 %v525
    %v766 = vunpack.c.l.b16 %v526
    %v767 = vunpack.c.l.b16 %v527
    %v768 = vunpack.c.l.b16 %v528
    %v769 = vunpack.c.l.b16 %v529
    %v770 = vunpack.c.l.b16 %v530
    %v771 = vunpack.c.l.b16 %v531
    %v772 = vunpack.c.l.b16 %v532
    %v773 = vunpack.c.l.b16 %v533
    %v774 = vunpack.c.l.b16 %v534
    %v775 = vunpack.c.l.b16 %v535
    %v776 = vunpack.c.l.b16 %v536
    %v777 = vunpack.c.l.b16 %v537
    %v778 = vunpack.c.l.b16 %v538
    %v779 = vunpack.c.l.b16 %v539
    %v780 = vunpack.c.l.b16 %v540
    %v781 = vunpack.c.l.b16 %v541
    %v782 = vunpack.c.l.b16 %v542
    %v783 = vunpack.c.l.b16 %v543
    %v784 = vunpack.c.l.b16 %v544
    %v785 = vunpack.c.l.b16 %v545
    %v786 = vunpack.c.l.b16 %v546
    %v787 = vunpack.c.l.b16 %v547
    %v788 = vunpack.c.l.b16 %v548
    %v789 = vunpack.c.l.b16 %v549
    %v790 = vunpack.c.l.b16 %v550
    %v791 = vunpack.c.l.b16 %v551
    %v792 = vpack.c.b16 %v697, %v696
    %v793 = vpack.c.b16 %v699, %v698
    %v794 = vpack.c.b16 %v701, %v700
    %v795 = vpack.c.b16 %v703, %v702
    %v796 = vpack.c.b16 %v705, %v704
    %v797 = vpack.c.b16 %v707, %v706
    %v798 = vpack.c.b16 %v709, %v708
    %v799 = vpack.c.b16 %v711, %v710
    %v800 = vpack.c.b16 %v713, %v712
    %v801 = vpack.c.b16 %v715, %v714
    %v802 = vpack.c.b16 %v717, %v716
    %v803 = vpack.c.b16 %v719, %v718
    %v804 = vpack.c.b16 %v721, %v720
    %v805 = vpack.c.b16 %v723, %v722
    %v806 = vpack.c.b16 %v725, %v724
    %v807 = vpack.c.b16 %v727, %v726
    %v808 = vpack.c.b16 %v729, %v728
    %v809 = vpack.c.b16 %v731, %v730
    %v810 = vpack.c.b16 %v733, %v732
    %v811 = vpack.c.b16 %v735, %v734
    %v812 = vpack.c.b16 %v737, %v736
    %v813 = vpack.c.b16 %v739, %v738
    %v814 = vpack.c.b16 %v741, %v740
    %v815 = vpack.c.b16 %v743, %v742
    %v816 = vpack.c.b16 %v745, %v744
    %v817 = vpack.c.b16 %v747, %v746
    %v818 = vpack.c.b16 %v749, %v748
    %v819 = vpack.c.b16 %v751, %v750
    %v820 = vpack.c.b16 %v753, %v752
    %v821 = vpack.c.b16 %v755, %v754
    %v822 = vpack.c.b16 %v757, %v756
    %v823 = vpack.c.b16 %v759, %v758
    %v824 = vpack.c.b16 %v761, %v760
    %v825 = vpack.c.b16 %v763, %v762
    %v826 = vpack.c.b16 %v765, %v764
    %v827 = vpack.c.b16 %v767, %v766
    %v828 = vpack.c.b16 %v769, %v768
    %v829 = vpack.c.b16 %v771, %v770
    %v830 = vpack.c.b16 %v773, %v772
    %v831 = vpack.c.b16 %v775, %v774
    %v832 = vpack.c.b16 %v777, %v776
    %v833 = vpack.c.b16 %v779, %v778
    %v834 = vpack.c.b16 %v781, %v780
    %v835 = vpack.c.b16 %v783, %v782
    %v836 = vpack.c.b16 %v785, %v784
    %v837 = vpack.c.b16 %v787, %v786
    %v838 = vpack.c.b16 %v789, %v788
    %v839 = vpack.c.b16 %v791, %v790
    %888 = vmatprep.subr.bf16.mxu0 0
    %889 = vmatpush1.bf16.msra.mxu0 %v799
    %890 = vmatprep.subr.bf16.mxu0 0
    %891 = vmatpush1.bf16.msra.mxu0 %v798
    %892 = vmatprep.subr.bf16.mxu0 0
    %893 = vmatpush1.bf16.msra.mxu0 %v797
    %894 = vmatprep.subr.bf16.mxu0 0
    %895 = vmatpush1.bf16.msra.mxu0 %v796
    %896 = vmatprep.subr.bf16.mxu0 0
    %897 = vmatpush1.bf16.msra.mxu0 %v795
    %898 = vmatprep.subr.bf16.mxu0 0
    %899 = vmatpush1.bf16.msra.mxu0 %v794
    %900 = vmatprep.subr.bf16.mxu0 0
    %901 = vmatpush1.bf16.msra.mxu0 %v793
    %902 = vmatprep.subr.bf16.mxu0 0
    %903 = vmatpush1.bf16.msra.mxu0 %v792
    %904 = vmatprep.subr.bf16.mxu0 0
    %905 = vmatpush2.bf16.msra.mxu0 %v807
    %906 = vmatprep.subr.bf16.mxu0 0
    %907 = vmatpush2.bf16.msra.mxu0 %v806
    %908 = vmatprep.subr.bf16.mxu0 0
    %909 = vmatpush2.bf16.msra.mxu0 %v805
    %910 = vmatprep.subr.bf16.mxu0 0
    %911 = vmatpush2.bf16.msra.mxu0 %v804
    %912 = vmatprep.subr.bf16.mxu0 0
    %913 = vmatpush2.bf16.msra.mxu0 %v803
    %914 = vmatprep.subr.bf16.mxu0 0
    %915 = vmatpush2.bf16.msra.mxu0 %v802
    %916 = vmatprep.subr.bf16.mxu0 0
    %917 = vmatpush2.bf16.msra.mxu0 %v801
    %918 = vmatprep.subr.bf16.mxu0 0
    %919 = vmatpush2.bf16.msra.mxu0 %v800
    %920 = vmatprep.mubr.bf16.mxu0 %v577
    %921 = vmatmul.mubr.bf16.gmra.mxu0 %v576
    %v922 = vpop.f32.mrf.mxu0
    %v923 = vadd.f32 0.0, %v922
    %v924 = vpop.f32.mrf.mxu0
    %v925 = vpop.f32.mrf.mxu0
    %v926 = vadd.f32 0.0, %v925
    %v927 = vpop.f32.mrf.mxu0
    %928 = vmatprep.mubr.bf16.mxu0 %v583
    %929 = vmatmul.mubr.bf16.gmra.mxu0 %v582
    %v930 = vpop.f32.mrf.mxu0
    %v931 = vadd.f32 0.0, %v930
    %v932 = vpop.f32.mrf.mxu0
    %v933 = vpop.f32.mrf.mxu0
    %v934 = vadd.f32 0.0, %v933
    %v935 = vpop.f32.mrf.mxu0
    %936 = vdwg.mxu0
    %937 = vmatprep.subr.bf16.mxu0 0
    %938 = vmatpush1.bf16.msra.mxu0 %v815
    %939 = vmatprep.subr.bf16.mxu0 0
    %940 = vmatpush1.bf16.msra.mxu0 %v814
    %941 = vmatprep.subr.bf16.mxu0 0
    %942 = vmatpush1.bf16.msra.mxu0 %v813
    %943 = vmatprep.subr.bf16.mxu0 0
    %944 = vmatpush1.bf16.msra.mxu0 %v812
    %945 = vmatprep.subr.bf16.mxu0 0
    %946 = vmatpush1.bf16.msra.mxu0 %v811
    %947 = vmatprep.subr.bf16.mxu0 0
    %948 = vmatpush1.bf16.msra.mxu0 %v810
    %949 = vmatprep.subr.bf16.mxu0 0
    %950 = vmatpush1.bf16.msra.mxu0 %v809
    %951 = vmatprep.subr.bf16.mxu0 0
    %952 = vmatpush1.bf16.msra.mxu0 %v808
    %953 = vmatprep.subr.bf16.mxu0 0
    %954 = vmatpush2.bf16.msra.mxu0 %v823
    %955 = vmatprep.subr.bf16.mxu0 0
    %956 = vmatpush2.bf16.msra.mxu0 %v822
    %957 = vmatprep.subr.bf16.mxu0 0
    %958 = vmatpush2.bf16.msra.mxu0 %v821
    %959 = vmatprep.subr.bf16.mxu0 0
    %960 = vmatpush2.bf16.msra.mxu0 %v820
    %961 = vmatprep.subr.bf16.mxu0 0
    %962 = vmatpush2.bf16.msra.mxu0 %v819
    %963 = vmatprep.subr.bf16.mxu0 0
    %964 = vmatpush2.bf16.msra.mxu0 %v818
    %965 = vmatprep.subr.bf16.mxu0 0
    %966 = vmatpush2.bf16.msra.mxu0 %v817
    %967 = vmatprep.subr.bf16.mxu0 0
    %968 = vmatpush2.bf16.msra.mxu0 %v816
    %969 = vmatprep.mubr.bf16.mxu0 %v579
    %970 = vmatmul.mubr.bf16.gmra.mxu0 %v578
    %v971 = vpop.f32.mrf.mxu0
    %v972 = vadd.f32 %v923, %v971
    %v973 = vpop.f32.mrf.mxu0
    %v974 = vpop.f32.mrf.mxu0
    %v975 = vadd.f32 %v926, %v974
    %v976 = vpop.f32.mrf.mxu0
    %977 = vmatprep.mubr.bf16.mxu0 %v585
    %978 = vmatmul.mubr.bf16.gmra.mxu0 %v584
    %v979 = vpop.f32.mrf.mxu0
    %v980 = vadd.f32 %v931, %v979
    %v981 = vpop.f32.mrf.mxu0
    %v982 = vpop.f32.mrf.mxu0
    %v983 = vadd.f32 %v934, %v982
    %v984 = vpop.f32.mrf.mxu0
    %985 = vdwg.mxu0
    %986 = vmatprep.subr.bf16.mxu0 0
    %987 = vmatpush1.bf16.msra.mxu0 %v831
    %988 = vmatprep.subr.bf16.mxu0 0
    %989 = vmatpush1.bf16.msra.mxu0 %v830
    %990 = vmatprep.subr.bf16.mxu0 0
    %991 = vmatpush1.bf16.msra.mxu0 %v829
    %992 = vmatprep.subr.bf16.mxu0 0
    %993 = vmatpush1.bf16.msra.mxu0 %v828
    %994 = vmatprep.subr.bf16.mxu0 0
    %995 = vmatpush1.bf16.msra.mxu0 %v827
    %996 = vmatprep.subr.bf16.mxu0 0
    %997 = vmatpush1.bf16.msra.mxu0 %v826
    %998 = vmatprep.subr.bf16.mxu0 0
    %999 = vmatpush1.bf16.msra.mxu0 %v825
    %1000 = vmatprep.subr.bf16.mxu0 0
    %1001 = vmatpush1.bf16.msra.mxu0 %v824
    %1002 = vmatprep.subr.bf16.mxu0 0
    %1003 = vmatpush2.bf16.msra.mxu0 %v839
    %1004 = vmatprep.subr.bf16.mxu0 0
    %1005 = vmatpush2.bf16.msra.mxu0 %v838
    %1006 = vmatprep.subr.bf16.mxu0 0
    %1007 = vmatpush2.bf16.msra.mxu0 %v837
    %1008 = vmatprep.subr.bf16.mxu0 0
    %1009 = vmatpush2.bf16.msra.mxu0 %v836
    %1010 = vmatprep.subr.bf16.mxu0 0
    %1011 = vmatpush2.bf16.msra.mxu0 %v835
    %1012 = vmatprep.subr.bf16.mxu0 0
    %1013 = vmatpush2.bf16.msra.mxu0 %v834
    %1014 = vmatprep.subr.bf16.mxu0 0
    %1015 = vmatpush2.bf16.msra.mxu0 %v833
    %1016 = vmatprep.subr.bf16.mxu0 0
    %1017 = vmatpush2.bf16.msra.mxu0 %v832
    %1018 = vmatprep.mubr.bf16.mxu0 %v581
    %1019 = vmatmul.mubr.bf16.gmra.mxu0 %v580
    %v1020 = vpop.f32.mrf.mxu0
    %v1021 = vadd.f32 %v972, %v1020
    %v1022 = vpop.f32.mrf.mxu0
    %v1023 = vpop.f32.mrf.mxu0
    %v1024 = vadd.f32 %v975, %v1023
    %v1025 = vpop.f32.mrf.mxu0
    %1026 = vmatprep.mubr.bf16.mxu0 %v587
    %1027 = vmatmul.mubr.bf16.gmra.mxu0 %v586
    %v1028 = vpop.f32.mrf.mxu0
    %v1029 = vadd.f32 %v980, %v1028
    %v1030 = vpop.f32.mrf.mxu0
    %v1031 = vpop.f32.mrf.mxu0
    %v1032 = vadd.f32 %v983, %v1031
    %v1033 = vpop.f32.mrf.mxu0
    %1034 = vdwg.mxu0
    %v1035 = vunpack.c.l.b16 %v179
    %v1036 = vunpack.c.h.b16 %v179
    %v1037 = vunpack.c.l.b16 %v183
    %v1038 = vunpack.c.h.b16 %v183
    %v1039 = vunpack.c.l.b16 %v187
    %v1040 = vunpack.c.h.b16 %v187
    %v1041 = vunpack.c.l.b16 %v190
    %v1042 = vunpack.c.h.b16 %v190
    %v1043 = vunpack.c.l.b16 %v193
    %v1044 = vunpack.c.h.b16 %v193
    %v1045 = vunpack.c.l.b16 %v196
    %v1046 = vunpack.c.h.b16 %v196
    %v1047 = vunpack.c.l.b16 %v200
    %v1048 = vunpack.c.h.b16 %v200
    %v1049 = vunpack.c.l.b16 %v204
    %v1050 = vunpack.c.h.b16 %v204
    %v1051 = vunpack.c.l.b16 %v208
    %v1052 = vunpack.c.h.b16 %v208
    %v1053 = vunpack.c.l.b16 %v211
    %v1054 = vunpack.c.h.b16 %v211
    %v1055 = vunpack.c.l.b16 %v214
    %v1056 = vunpack.c.h.b16 %v214
    %v1057 = vunpack.c.l.b16 %v217
    %v1058 = vunpack.c.h.b16 %v217
    %v1059 = vpack.c.b16 %v1041, %v1035
    %v1060 = vpack.c.b16 %v1042, %v1036
    %v1061 = vpack.c.b16 %v1043, %v1037
    %v1062 = vpack.c.b16 %v1044, %v1038
    %v1063 = vpack.c.b16 %v1045, %v1039
    %v1064 = vpack.c.b16 %v1046, %v1040
    %v1065 = vpack.c.b16 %v1053, %v1047
    %v1066 = vpack.c.b16 %v1054, %v1048
    %v1067 = vpack.c.b16 %v1055, %v1049
    %v1068 = vpack.c.b16 %v1056, %v1050
    %v1069 = vpack.c.b16 %v1057, %v1051
    %v1070 = vpack.c.b16 %v1058, %v1052
    %v1179 = vunpack.c.l.b16 %v218
    %v1180 = vunpack.c.l.b16 %v219
    %v1181 = vunpack.c.l.b16 %v220
    %v1182 = vunpack.c.l.b16 %v221
    %v1183 = vunpack.c.l.b16 %v222
    %v1184 = vunpack.c.l.b16 %v223
    %v1185 = vunpack.c.l.b16 %v224
    %v1186 = vunpack.c.l.b16 %v225
    %v1187 = vunpack.c.l.b16 %v226
    %v1188 = vunpack.c.l.b16 %v227
    %v1189 = vunpack.c.l.b16 %v228
    %v1190 = vunpack.c.l.b16 %v229
    %v1191 = vunpack.c.l.b16 %v230
    %v1192 = vunpack.c.l.b16 %v231
    %v1193 = vunpack.c.l.b16 %v232
    %v1194 = vunpack.c.l.b16 %v233
    %v1195 = vunpack.c.l.b16 %v234
    %v1196 = vunpack.c.l.b16 %v235
    %v1197 = vunpack.c.l.b16 %v236
    %v1198 = vunpack.c.l.b16 %v237
    %v1199 = vunpack.c.l.b16 %v238
    %v1200 = vunpack.c.l.b16 %v239
    %v1201 = vunpack.c.l.b16 %v240
    %v1202 = vunpack.c.l.b16 %v241
    %v1203 = vunpack.c.l.b16 %v242
    %v1204 = vunpack.c.l.b16 %v243
    %v1205 = vunpack.c.l.b16 %v244
    %v1206 = vunpack.c.l.b16 %v245
    %v1207 = vunpack.c.l.b16 %v246
    %v1208 = vunpack.c.l.b16 %v247
    %v1209 = vunpack.c.l.b16 %v248
    %v1210 = vunpack.c.l.b16 %v249
    %v1211 = vunpack.c.l.b16 %v250
    %v1212 = vunpack.c.l.b16 %v251
    %v1213 = vunpack.c.l.b16 %v252
    %v1214 = vunpack.c.l.b16 %v253
    %v1215 = vunpack.c.l.b16 %v254
    %v1216 = vunpack.c.l.b16 %v255
    %v1217 = vunpack.c.l.b16 %v256
    %v1218 = vunpack.c.l.b16 %v257
    %v1219 = vunpack.c.l.b16 %v258
    %v1220 = vunpack.c.l.b16 %v259
    %v1221 = vunpack.c.l.b16 %v260
    %v1222 = vunpack.c.l.b16 %v261
    %v1223 = vunpack.c.l.b16 %v262
    %v1224 = vunpack.c.l.b16 %v263
    %v1225 = vunpack.c.l.b16 %v264
    %v1226 = vunpack.c.l.b16 %v265
    %v1227 = vunpack.c.l.b16 %v266
    %v1228 = vunpack.c.l.b16 %v267
    %v1229 = vunpack.c.l.b16 %v268
    %v1230 = vunpack.c.l.b16 %v269
    %v1231 = vunpack.c.l.b16 %v270
    %v1232 = vunpack.c.l.b16 %v271
    %v1233 = vunpack.c.l.b16 %v272
    %v1234 = vunpack.c.l.b16 %v273
    %v1235 = vunpack.c.l.b16 %v274
    %v1236 = vunpack.c.l.b16 %v275
    %v1237 = vunpack.c.l.b16 %v276
    %v1238 = vunpack.c.l.b16 %v277
    %v1239 = vunpack.c.l.b16 %v278
    %v1240 = vunpack.c.l.b16 %v279
    %v1241 = vunpack.c.l.b16 %v280
    %v1242 = vunpack.c.l.b16 %v281
    %v1243 = vunpack.c.l.b16 %v282
    %v1244 = vunpack.c.l.b16 %v283
    %v1245 = vunpack.c.l.b16 %v284
    %v1246 = vunpack.c.l.b16 %v285
    %v1247 = vunpack.c.l.b16 %v286
    %v1248 = vunpack.c.l.b16 %v287
    %v1249 = vunpack.c.l.b16 %v288
    %v1250 = vunpack.c.l.b16 %v289
    %v1251 = vunpack.c.l.b16 %v290
    %v1252 = vunpack.c.l.b16 %v291
    %v1253 = vunpack.c.l.b16 %v292
    %v1254 = vunpack.c.l.b16 %v293
    %v1255 = vunpack.c.l.b16 %v294
    %v1256 = vunpack.c.l.b16 %v295
    %v1257 = vunpack.c.l.b16 %v296
    %v1258 = vunpack.c.l.b16 %v297
    %v1259 = vunpack.c.l.b16 %v298
    %v1260 = vunpack.c.l.b16 %v299
    %v1261 = vunpack.c.l.b16 %v300
    %v1262 = vunpack.c.l.b16 %v301
    %v1263 = vunpack.c.l.b16 %v302
    %v1264 = vunpack.c.l.b16 %v303
    %v1265 = vunpack.c.l.b16 %v304
    %v1266 = vunpack.c.l.b16 %v305
    %v1267 = vunpack.c.l.b16 %v306
    %v1268 = vunpack.c.l.b16 %v307
    %v1269 = vunpack.c.l.b16 %v308
    %v1270 = vunpack.c.l.b16 %v309
    %v1271 = vunpack.c.l.b16 %v310
    %v1272 = vunpack.c.l.b16 %v311
    %v1273 = vunpack.c.l.b16 %v312
    %v1274 = vunpack.c.l.b16 %v313
    %v1275 = vpack.c.b16 %v1180, %v1179
    %v1276 = vpack.c.b16 %v1182, %v1181
    %v1277 = vpack.c.b16 %v1184, %v1183
    %v1278 = vpack.c.b16 %v1186, %v1185
    %v1279 = vpack.c.b16 %v1188, %v1187
    %v1280 = vpack.c.b16 %v1190, %v1189
    %v1281 = vpack.c.b16 %v1192, %v1191
    %v1282 = vpack.c.b16 %v1194, %v1193
    %v1283 = vpack.c.b16 %v1196, %v1195
    %v1284 = vpack.c.b16 %v1198, %v1197
    %v1285 = vpack.c.b16 %v1200, %v1199
    %v1286 = vpack.c.b16 %v1202, %v1201
    %v1287 = vpack.c.b16 %v1204, %v1203
    %v1288 = vpack.c.b16 %v1206, %v1205
    %v1289 = vpack.c.b16 %v1208, %v1207
    %v1290 = vpack.c.b16 %v1210, %v1209
    %v1291 = vpack.c.b16 %v1212, %v1211
    %v1292 = vpack.c.b16 %v1214, %v1213
    %v1293 = vpack.c.b16 %v1216, %v1215
    %v1294 = vpack.c.b16 %v1218, %v1217
    %v1295 = vpack.c.b16 %v1220, %v1219
    %v1296 = vpack.c.b16 %v1222, %v1221
    %v1297 = vpack.c.b16 %v1224, %v1223
    %v1298 = vpack.c.b16 %v1226, %v1225
    %v1299 = vpack.c.b16 %v1228, %v1227
    %v1300 = vpack.c.b16 %v1230, %v1229
    %v1301 = vpack.c.b16 %v1232, %v1231
    %v1302 = vpack.c.b16 %v1234, %v1233
    %v1303 = vpack.c.b16 %v1236, %v1235
    %v1304 = vpack.c.b16 %v1238, %v1237
    %v1305 = vpack.c.b16 %v1240, %v1239
    %v1306 = vpack.c.b16 %v1242, %v1241
    %v1307 = vpack.c.b16 %v1244, %v1243
    %v1308 = vpack.c.b16 %v1246, %v1245
    %v1309 = vpack.c.b16 %v1248, %v1247
    %v1310 = vpack.c.b16 %v1250, %v1249
    %v1311 = vpack.c.b16 %v1252, %v1251
    %v1312 = vpack.c.b16 %v1254, %v1253
    %v1313 = vpack.c.b16 %v1256, %v1255
    %v1314 = vpack.c.b16 %v1258, %v1257
    %v1315 = vpack.c.b16 %v1260, %v1259
    %v1316 = vpack.c.b16 %v1262, %v1261
    %v1317 = vpack.c.b16 %v1264, %v1263
    %v1318 = vpack.c.b16 %v1266, %v1265
    %v1319 = vpack.c.b16 %v1268, %v1267
    %v1320 = vpack.c.b16 %v1270, %v1269
    %v1321 = vpack.c.b16 %v1272, %v1271
    %v1322 = vpack.c.b16 %v1274, %v1273
    %1371 = vmatprep.subr.bf16.mxu0 0
    %1372 = vmatpush1.bf16.msra.mxu0 %v1282
    %1373 = vmatprep.subr.bf16.mxu0 0
    %1374 = vmatpush1.bf16.msra.mxu0 %v1281
    %1375 = vmatprep.subr.bf16.mxu0 0
    %1376 = vmatpush1.bf16.msra.mxu0 %v1280
    %1377 = vmatprep.subr.bf16.mxu0 0
    %1378 = vmatpush1.bf16.msra.mxu0 %v1279
    %1379 = vmatprep.subr.bf16.mxu0 0
    %1380 = vmatpush1.bf16.msra.mxu0 %v1278
    %1381 = vmatprep.subr.bf16.mxu0 0
    %1382 = vmatpush1.bf16.msra.mxu0 %v1277
    %1383 = vmatprep.subr.bf16.mxu0 0
    %1384 = vmatpush1.bf16.msra.mxu0 %v1276
    %1385 = vmatprep.subr.bf16.mxu0 0
    %1386 = vmatpush1.bf16.msra.mxu0 %v1275
    %1387 = vmatprep.subr.bf16.mxu0 0
    %1388 = vmatpush2.bf16.msra.mxu0 %v1290
    %1389 = vmatprep.subr.bf16.mxu0 0
    %1390 = vmatpush2.bf16.msra.mxu0 %v1289
    %1391 = vmatprep.subr.bf16.mxu0 0
    %1392 = vmatpush2.bf16.msra.mxu0 %v1288
    %1393 = vmatprep.subr.bf16.mxu0 0
    %1394 = vmatpush2.bf16.msra.mxu0 %v1287
    %1395 = vmatprep.subr.bf16.mxu0 0
    %1396 = vmatpush2.bf16.msra.mxu0 %v1286
    %1397 = vmatprep.subr.bf16.mxu0 0
    %1398 = vmatpush2.bf16.msra.mxu0 %v1285
    %1399 = vmatprep.subr.bf16.mxu0 0
    %1400 = vmatpush2.bf16.msra.mxu0 %v1284
    %1401 = vmatprep.subr.bf16.mxu0 0
    %1402 = vmatpush2.bf16.msra.mxu0 %v1283
    %1403 = vmatprep.mubr.bf16.mxu0 %v1060
    %1404 = vmatmul.mubr.bf16.gmra.mxu0 %v1059
    %v1405 = vpop.f32.mrf.mxu0
    %v1406 = vadd.f32 %v1021, %v1405
    %v1407 = vpop.f32.mrf.mxu0
    %v1408 = vpop.f32.mrf.mxu0
    %v1409 = vadd.f32 %v1024, %v1408
    %v1410 = vpop.f32.mrf.mxu0
    %1411 = vmatprep.mubr.bf16.mxu0 %v1066
    %1412 = vmatmul.mubr.bf16.gmra.mxu0 %v1065
    %v1413 = vpop.f32.mrf.mxu0
    %v1414 = vadd.f32 %v1029, %v1413
    %v1415 = vpop.f32.mrf.mxu0
    %v1416 = vpop.f32.mrf.mxu0
    %v1417 = vadd.f32 %v1032, %v1416
    %v1418 = vpop.f32.mrf.mxu0
    %1419 = vdwg.mxu0
    %1420 = vmatprep.subr.bf16.mxu0 0
    %1421 = vmatpush1.bf16.msra.mxu0 %v1298
    %1422 = vmatprep.subr.bf16.mxu0 0
    %1423 = vmatpush1.bf16.msra.mxu0 %v1297
    %1424 = vmatprep.subr.bf16.mxu0 0
    %1425 = vmatpush1.bf16.msra.mxu0 %v1296
    %1426 = vmatprep.subr.bf16.mxu0 0
    %1427 = vmatpush1.bf16.msra.mxu0 %v1295
    %1428 = vmatprep.subr.bf16.mxu0 0
    %1429 = vmatpush1.bf16.msra.mxu0 %v1294
    %1430 = vmatprep.subr.bf16.mxu0 0
    %1431 = vmatpush1.bf16.msra.mxu0 %v1293
    %1432 = vmatprep.subr.bf16.mxu0 0
    %1433 = vmatpush1.bf16.msra.mxu0 %v1292
    %1434 = vmatprep.subr.bf16.mxu0 0
    %1435 = vmatpush1.bf16.msra.mxu0 %v1291
    %1436 = vmatprep.subr.bf16.mxu0 0
    %1437 = vmatpush2.bf16.msra.mxu0 %v1306
    %1438 = vmatprep.subr.bf16.mxu0 0
    %1439 = vmatpush2.bf16.msra.mxu0 %v1305
    %1440 = vmatprep.subr.bf16.mxu0 0
    %1441 = vmatpush2.bf16.msra.mxu0 %v1304
    %1442 = vmatprep.subr.bf16.mxu0 0
    %1443 = vmatpush2.bf16.msra.mxu0 %v1303
    %1444 = vmatprep.subr.bf16.mxu0 0
    %1445 = vmatpush2.bf16.msra.mxu0 %v1302
    %1446 = vmatprep.subr.bf16.mxu0 0
    %1447 = vmatpush2.bf16.msra.mxu0 %v1301
    %1448 = vmatprep.subr.bf16.mxu0 0
    %1449 = vmatpush2.bf16.msra.mxu0 %v1300
    %1450 = vmatprep.subr.bf16.mxu0 0
    %1451 = vmatpush2.bf16.msra.mxu0 %v1299
    %1452 = vmatprep.mubr.bf16.mxu0 %v1062
    %1453 = vmatmul.mubr.bf16.gmra.mxu0 %v1061
    %v1454 = vpop.f32.mrf.mxu0
    %v1455 = vadd.f32 %v1406, %v1454
    %v1456 = vpop.f32.mrf.mxu0
    %v1457 = vpop.f32.mrf.mxu0
    %v1458 = vadd.f32 %v1409, %v1457
    %v1459 = vpop.f32.mrf.mxu0
    %1460 = vmatprep.mubr.bf16.mxu0 %v1068
    %1461 = vmatmul.mubr.bf16.gmra.mxu0 %v1067
    %v1462 = vpop.f32.mrf.mxu0
    %v1463 = vadd.f32 %v1414, %v1462
    %v1464 = vpop.f32.mrf.mxu0
    %v1465 = vpop.f32.mrf.mxu0
    %v1466 = vadd.f32 %v1417, %v1465
    %v1467 = vpop.f32.mrf.mxu0
    %1468 = vdwg.mxu0
    %1469 = vmatprep.subr.bf16.mxu0 0
    %1470 = vmatpush1.bf16.msra.mxu0 %v1314
    %1471 = vmatprep.subr.bf16.mxu0 0
    %1472 = vmatpush1.bf16.msra.mxu0 %v1313
    %1473 = vmatprep.subr.bf16.mxu0 0
    %1474 = vmatpush1.bf16.msra.mxu0 %v1312
    %1475 = vmatprep.subr.bf16.mxu0 0
    %1476 = vmatpush1.bf16.msra.mxu0 %v1311
    %1477 = vmatprep.subr.bf16.mxu0 0
    %1478 = vmatpush1.bf16.msra.mxu0 %v1310
    %1479 = vmatprep.subr.bf16.mxu0 0
    %1480 = vmatpush1.bf16.msra.mxu0 %v1309
    %1481 = vmatprep.subr.bf16.mxu0 0
    %1482 = vmatpush1.bf16.msra.mxu0 %v1308
    %1483 = vmatprep.subr.bf16.mxu0 0
    %1484 = vmatpush1.bf16.msra.mxu0 %v1307
    %1485 = vmatprep.subr.bf16.mxu0 0
    %1486 = vmatpush2.bf16.msra.mxu0 %v1322
    %1487 = vmatprep.subr.bf16.mxu0 0
    %1488 = vmatpush2.bf16.msra.mxu0 %v1321
    %1489 = vmatprep.subr.bf16.mxu0 0
    %1490 = vmatpush2.bf16.msra.mxu0 %v1320
    %1491 = vmatprep.subr.bf16.mxu0 0
    %1492 = vmatpush2.bf16.msra.mxu0 %v1319
    %1493 = vmatprep.subr.bf16.mxu0 0
    %1494 = vmatpush2.bf16.msra.mxu0 %v1318
    %1495 = vmatprep.subr.bf16.mxu0 0
    %1496 = vmatpush2.bf16.msra.mxu0 %v1317
    %1497 = vmatprep.subr.bf16.mxu0 0
    %1498 = vmatpush2.bf16.msra.mxu0 %v1316
    %1499 = vmatprep.subr.bf16.mxu0 0
    %1500 = vmatpush2.bf16.msra.mxu0 %v1315
    %1501 = vmatprep.mubr.bf16.mxu0 %v1064
    %1502 = vmatmul.mubr.bf16.gmra.mxu0 %v1063
    %v1503 = vpop.f32.mrf.mxu0
    %v1504 = vadd.f32 %v1455, %v1503
    %v1505 = vpop.f32.mrf.mxu0
    %v1506 = vpop.f32.mrf.mxu0
    %v1507 = vadd.f32 %v1458, %v1506
    %v1508 = vpop.f32.mrf.mxu0
    %1509 = vmatprep.mubr.bf16.mxu0 %v1070
    %1510 = vmatmul.mubr.bf16.gmra.mxu0 %v1069
    %v1511 = vpop.f32.mrf.mxu0
    %v1512 = vadd.f32 %v1463, %v1511
    %v1513 = vpop.f32.mrf.mxu0
    %v1514 = vpop.f32.mrf.mxu0
    %v1515 = vadd.f32 %v1466, %v1514
    %v1516 = vpop.f32.mrf.mxu0
    %1517 = vdwg.mxu0
    %s1518 = scalar_lea.vmem [#allocation6], 768
    %v1519 = vld [vmem:[%s1518] sm:$0xf]
    %v1520 = vld [vmem:[%s1518 + $0x4] sm:$0xf]
    %v1521 = vld [vmem:[%s1518 + $0x8] sm:$0xf]
    %v1522 = vld [vmem:[%s1518 + $0xc] sm:$0xf]
    %v1523 = vld [vmem:[%s1518 + $0x10] sm:$0xf]
    %v1524 = vld [vmem:[%s1518 + $0x14] sm:$0xf]
    %v1525 = vld [vmem:[%s1518 + $0x18] sm:$0xf]
    %v1526 = vld [vmem:[%s1518 + $0x1c] sm:$0xf]
    %v1527 = vld [vmem:[%s1518 + $0x20] sm:$0xf]
    %v1528 = vld [vmem:[%s1518 + $0x24] sm:$0xf]
    %v1529 = vld [vmem:[%s1518 + $0x28] sm:$0xf]
    %v1530 = vld [vmem:[%s1518 + $0x2c] sm:$0xf]
    %v1531 = vld [vmem:[%s1518 + $0x30] sm:$0xf]
    %v1532 = vld [vmem:[%s1518 + $0x34] sm:$0xf]
    %v1533 = vld [vmem:[%s1518 + $0x38] sm:$0xf]
    %v1534 = vld [vmem:[%s1518 + $0x3c] sm:$0xf]
    %v1535 = vld [vmem:[%s1518 + $0x40] sm:$0xf]
    %v1536 = vld [vmem:[%s1518 + $0x44] sm:$0xf]
    %v1537 = vld [vmem:[%s1518 + $0x48] sm:$0xf]
    %v1538 = vld [vmem:[%s1518 + $0x4c] sm:$0xf]
    %v1539 = vld [vmem:[%s1518 + $0x50] sm:$0xf]
    %v1540 = vld [vmem:[%s1518 + $0x54] sm:$0xf]
    %v1541 = vld [vmem:[%s1518 + $0x58] sm:$0xf]
    %v1542 = vld [vmem:[%s1518 + $0x5c] sm:$0xf]
    %v1543 = vld [vmem:[%s1518 + $0x60] sm:$0xf]
    %v1544 = vld [vmem:[%s1518 + $0x64] sm:$0xf]
    %v1545 = vld [vmem:[%s1518 + $0x68] sm:$0xf]
    %v1546 = vld [vmem:[%s1518 + $0x6c] sm:$0xf]
    %v1547 = vld [vmem:[%s1518 + $0x70] sm:$0xf]
    %v1548 = vld [vmem:[%s1518 + $0x74] sm:$0xf]
    %v1549 = vld [vmem:[%s1518 + $0x78] sm:$0xf]
    %v1550 = vld [vmem:[%s1518 + $0x7c] sm:$0xf]
    %v1551 = vld [vmem:[%s1518 + $0x80] sm:$0xf]
    %v1552 = vld [vmem:[%s1518 + $0x84] sm:$0xf]
    %v1553 = vld [vmem:[%s1518 + $0x88] sm:$0xf]
    %v1554 = vld [vmem:[%s1518 + $0x8c] sm:$0xf]
    %v1555 = vld [vmem:[%s1518 + $0x90] sm:$0xf]
    %v1556 = vld [vmem:[%s1518 + $0x94] sm:$0xf]
    %v1557 = vld [vmem:[%s1518 + $0x98] sm:$0xf]
    %v1558 = vld [vmem:[%s1518 + $0x9c] sm:$0xf]
    %v1559 = vld [vmem:[%s1518 + $0xa0] sm:$0xf]
    %v1560 = vld [vmem:[%s1518 + $0xa4] sm:$0xf]
    %v1561 = vld [vmem:[%s1518 + $0xa8] sm:$0xf]
    %v1562 = vld [vmem:[%s1518 + $0xac] sm:$0xf]
    %v1563 = vld [vmem:[%s1518 + $0xb0] sm:$0xf]
    %v1564 = vld [vmem:[%s1518 + $0xb4] sm:$0xf]
    %v1565 = vld [vmem:[%s1518 + $0xb8] sm:$0xf]
    %v1566 = vld [vmem:[%s1518 + $0xbc] sm:$0xf]
    %v1567 = vld [vmem:[%s1518 + $0xc0] sm:$0xf]
    %v1568 = vld [vmem:[%s1518 + $0xc4] sm:$0xf]
    %v1569 = vld [vmem:[%s1518 + $0xc8] sm:$0xf]
    %v1570 = vld [vmem:[%s1518 + $0xcc] sm:$0xf]
    %v1571 = vld [vmem:[%s1518 + $0xd0] sm:$0xf]
    %v1572 = vld [vmem:[%s1518 + $0xd4] sm:$0xf]
    %v1573 = vld [vmem:[%s1518 + $0xd8] sm:$0xf]
    %v1574 = vld [vmem:[%s1518 + $0xdc] sm:$0xf]
    %v1575 = vld [vmem:[%s1518 + $0xe0] sm:$0xf]
    %v1576 = vld [vmem:[%s1518 + $0xe4] sm:$0xf]
    %v1577 = vld [vmem:[%s1518 + $0xe8] sm:$0xf]
    %v1578 = vld [vmem:[%s1518 + $0xec] sm:$0xf]
    %v1579 = vld [vmem:[%s1518 + $0xf0] sm:$0xf]
    %v1580 = vld [vmem:[%s1518 + $0xf4] sm:$0xf]
    %v1581 = vld [vmem:[%s1518 + $0xf8] sm:$0xf]
    %v1582 = vld [vmem:[%s1518 + $0xfc] sm:$0xf]
    %v1583 = vld [vmem:[%s1518 + $0x100] sm:$0xf]
    %v1584 = vld [vmem:[%s1518 + $0x104] sm:$0xf]
    %v1585 = vld [vmem:[%s1518 + $0x108] sm:$0xf]
    %v1586 = vld [vmem:[%s1518 + $0x10c] sm:$0xf]
    %v1587 = vld [vmem:[%s1518 + $0x110] sm:$0xf]
    %v1588 = vld [vmem:[%s1518 + $0x114] sm:$0xf]
    %v1589 = vld [vmem:[%s1518 + $0x118] sm:$0xf]
    %v1590 = vld [vmem:[%s1518 + $0x11c] sm:$0xf]
    %v1591 = vld [vmem:[%s1518 + $0x120] sm:$0xf]
    %v1592 = vld [vmem:[%s1518 + $0x124] sm:$0xf]
    %v1593 = vld [vmem:[%s1518 + $0x128] sm:$0xf]
    %v1594 = vld [vmem:[%s1518 + $0x12c] sm:$0xf]
    %v1595 = vld [vmem:[%s1518 + $0x130] sm:$0xf]
    %v1596 = vld [vmem:[%s1518 + $0x134] sm:$0xf]
    %v1597 = vld [vmem:[%s1518 + $0x138] sm:$0xf]
    %v1598 = vld [vmem:[%s1518 + $0x13c] sm:$0xf]
    %v1599 = vld [vmem:[%s1518 + $0x140] sm:$0xf]
    %v1600 = vld [vmem:[%s1518 + $0x144] sm:$0xf]
    %v1601 = vld [vmem:[%s1518 + $0x148] sm:$0xf]
    %v1602 = vld [vmem:[%s1518 + $0x14c] sm:$0xf]
    %v1603 = vld [vmem:[%s1518 + $0x150] sm:$0xf]
    %v1604 = vld [vmem:[%s1518 + $0x154] sm:$0xf]
    %v1605 = vld [vmem:[%s1518 + $0x158] sm:$0xf]
    %v1606 = vld [vmem:[%s1518 + $0x15c] sm:$0xf]
    %v1607 = vld [vmem:[%s1518 + $0x160] sm:$0xf]
    %v1608 = vld [vmem:[%s1518 + $0x164] sm:$0xf]
    %v1609 = vld [vmem:[%s1518 + $0x168] sm:$0xf]
    %v1610 = vld [vmem:[%s1518 + $0x16c] sm:$0xf]
    %v1611 = vld [vmem:[%s1518 + $0x170] sm:$0xf]
    %v1612 = vld [vmem:[%s1518 + $0x174] sm:$0xf]
    %v1613 = vld [vmem:[%s1518 + $0x178] sm:$0xf]
    %v1614 = vld [vmem:[%s1518 + $0x17c] sm:$0xf]
    %v1621 = vunpack.c.l.b16 %v140
    %v1622 = vunpack.c.h.b16 %v140
    %v1623 = vunpack.c.l.b16 %v141
    %v1624 = vunpack.c.h.b16 %v141
    %v1625 = vunpack.c.l.b16 %v142
    %v1626 = vunpack.c.h.b16 %v142
    %v1627 = vunpack.c.l.b16 %v314
    %v1628 = vunpack.c.h.b16 %v314
    %v1629 = vunpack.c.l.b16 %v315
    %v1630 = vunpack.c.h.b16 %v315
    %v1631 = vunpack.c.l.b16 %v316
    %v1632 = vunpack.c.h.b16 %v316
    %v1633 = vunpack.c.l.b16 %v149
    %v1634 = vunpack.c.h.b16 %v149
    %v1635 = vunpack.c.l.b16 %v150
    %v1636 = vunpack.c.h.b16 %v150
    %v1637 = vunpack.c.l.b16 %v151
    %v1638 = vunpack.c.h.b16 %v151
    %v1639 = vunpack.c.l.b16 %v317
    %v1640 = vunpack.c.h.b16 %v317
    %v1641 = vunpack.c.l.b16 %v318
    %v1642 = vunpack.c.h.b16 %v318
    %v1643 = vunpack.c.l.b16 %v319
    %v1644 = vunpack.c.h.b16 %v319
    %v1645 = vpack.c.b16 %v1627, %v1621
    %v1646 = vpack.c.b16 %v1628, %v1622
    %v1647 = vpack.c.b16 %v1629, %v1623
    %v1648 = vpack.c.b16 %v1630, %v1624
    %v1649 = vpack.c.b16 %v1631, %v1625
    %v1650 = vpack.c.b16 %v1632, %v1626
    %v1651 = vpack.c.b16 %v1639, %v1633
    %v1652 = vpack.c.b16 %v1640, %v1634
    %v1653 = vpack.c.b16 %v1641, %v1635
    %v1654 = vpack.c.b16 %v1642, %v1636
    %v1655 = vpack.c.b16 %v1643, %v1637
    %v1656 = vpack.c.b16 %v1644, %v1638
    %v1765 = vunpack.c.l.b16 %v1519
    %v1766 = vunpack.c.l.b16 %v1520
    %v1767 = vunpack.c.l.b16 %v1521
    %v1768 = vunpack.c.l.b16 %v1522
    %v1769 = vunpack.c.l.b16 %v1523
    %v1770 = vunpack.c.l.b16 %v1524
    %v1771 = vunpack.c.l.b16 %v1525
    %v1772 = vunpack.c.l.b16 %v1526
    %v1773 = vunpack.c.l.b16 %v1527
    %v1774 = vunpack.c.l.b16 %v1528
    %v1775 = vunpack.c.l.b16 %v1529
    %v1776 = vunpack.c.l.b16 %v1530
    %v1777 = vunpack.c.l.b16 %v1531
    %v1778 = vunpack.c.l.b16 %v1532
    %v1779 = vunpack.c.l.b16 %v1533
    %v1780 = vunpack.c.l.b16 %v1534
    %v1781 = vunpack.c.l.b16 %v1535
    %v1782 = vunpack.c.l.b16 %v1536
    %v1783 = vunpack.c.l.b16 %v1537
    %v1784 = vunpack.c.l.b16 %v1538
    %v1785 = vunpack.c.l.b16 %v1539
    %v1786 = vunpack.c.l.b16 %v1540
    %v1787 = vunpack.c.l.b16 %v1541
    %v1788 = vunpack.c.l.b16 %v1542
    %v1789 = vunpack.c.l.b16 %v1543
    %v1790 = vunpack.c.l.b16 %v1544
    %v1791 = vunpack.c.l.b16 %v1545
    %v1792 = vunpack.c.l.b16 %v1546
    %v1793 = vunpack.c.l.b16 %v1547
    %v1794 = vunpack.c.l.b16 %v1548
    %v1795 = vunpack.c.l.b16 %v1549
    %v1796 = vunpack.c.l.b16 %v1550
    %v1797 = vunpack.c.l.b16 %v1551
    %v1798 = vunpack.c.l.b16 %v1552
    %v1799 = vunpack.c.l.b16 %v1553
    %v1800 = vunpack.c.l.b16 %v1554
    %v1801 = vunpack.c.l.b16 %v1555
    %v1802 = vunpack.c.l.b16 %v1556
    %v1803 = vunpack.c.l.b16 %v1557
    %v1804 = vunpack.c.l.b16 %v1558
    %v1805 = vunpack.c.l.b16 %v1559
    %v1806 = vunpack.c.l.b16 %v1560
    %v1807 = vunpack.c.l.b16 %v1561
    %v1808 = vunpack.c.l.b16 %v1562
    %v1809 = vunpack.c.l.b16 %v1563
    %v1810 = vunpack.c.l.b16 %v1564
    %v1811 = vunpack.c.l.b16 %v1565
    %v1812 = vunpack.c.l.b16 %v1566
    %v1813 = vunpack.c.l.b16 %v1567
    %v1814 = vunpack.c.l.b16 %v1568
    %v1815 = vunpack.c.l.b16 %v1569
    %v1816 = vunpack.c.l.b16 %v1570
    %v1817 = vunpack.c.l.b16 %v1571
    %v1818 = vunpack.c.l.b16 %v1572
    %v1819 = vunpack.c.l.b16 %v1573
    %v1820 = vunpack.c.l.b16 %v1574
    %v1821 = vunpack.c.l.b16 %v1575
    %v1822 = vunpack.c.l.b16 %v1576
    %v1823 = vunpack.c.l.b16 %v1577
    %v1824 = vunpack.c.l.b16 %v1578
    %v1825 = vunpack.c.l.b16 %v1579
    %v1826 = vunpack.c.l.b16 %v1580
    %v1827 = vunpack.c.l.b16 %v1581
    %v1828 = vunpack.c.l.b16 %v1582
    %v1829 = vunpack.c.l.b16 %v1583
    %v1830 = vunpack.c.l.b16 %v1584
    %v1831 = vunpack.c.l.b16 %v1585
    %v1832 = vunpack.c.l.b16 %v1586
    %v1833 = vunpack.c.l.b16 %v1587
    %v1834 = vunpack.c.l.b16 %v1588
    %v1835 = vunpack.c.l.b16 %v1589
    %v1836 = vunpack.c.l.b16 %v1590
    %v1837 = vunpack.c.l.b16 %v1591
    %v1838 = vunpack.c.l.b16 %v1592
    %v1839 = vunpack.c.l.b16 %v1593
    %v1840 = vunpack.c.l.b16 %v1594
    %v1841 = vunpack.c.l.b16 %v1595
    %v1842 = vunpack.c.l.b16 %v1596
    %v1843 = vunpack.c.l.b16 %v1597
    %v1844 = vunpack.c.l.b16 %v1598
    %v1845 = vunpack.c.l.b16 %v1599
    %v1846 = vunpack.c.l.b16 %v1600
    %v1847 = vunpack.c.l.b16 %v1601
    %v1848 = vunpack.c.l.b16 %v1602
    %v1849 = vunpack.c.l.b16 %v1603
    %v1850 = vunpack.c.l.b16 %v1604
    %v1851 = vunpack.c.l.b16 %v1605
    %v1852 = vunpack.c.l.b16 %v1606
    %v1853 = vunpack.c.l.b16 %v1607
    %v1854 = vunpack.c.l.b16 %v1608
    %v1855 = vunpack.c.l.b16 %v1609
    %v1856 = vunpack.c.l.b16 %v1610
    %v1857 = vunpack.c.l.b16 %v1611
    %v1858 = vunpack.c.l.b16 %v1612
    %v1859 = vunpack.c.l.b16 %v1613
    %v1860 = vunpack.c.l.b16 %v1614
    %v1861 = vpack.c.b16 %v1766, %v1765
    %v1862 = vpack.c.b16 %v1768, %v1767
    %v1863 = vpack.c.b16 %v1770, %v1769
    %v1864 = vpack.c.b16 %v1772, %v1771
    %v1865 = vpack.c.b16 %v1774, %v1773
    %v1866 = vpack.c.b16 %v1776, %v1775
    %v1867 = vpack.c.b16 %v1778, %v1777
    %v1868 = vpack.c.b16 %v1780, %v1779
    %v1869 = vpack.c.b16 %v1782, %v1781
    %v1870 = vpack.c.b16 %v1784, %v1783
    %v1871 = vpack.c.b16 %v1786, %v1785
    %v1872 = vpack.c.b16 %v1788, %v1787
    %v1873 = vpack.c.b16 %v1790, %v1789
    %v1874 = vpack.c.b16 %v1792, %v1791
    %v1875 = vpack.c.b16 %v1794, %v1793
    %v1876 = vpack.c.b16 %v1796, %v1795
    %v1877 = vpack.c.b16 %v1798, %v1797
    %v1878 = vpack.c.b16 %v1800, %v1799
    %v1879 = vpack.c.b16 %v1802, %v1801
    %v1880 = vpack.c.b16 %v1804, %v1803
    %v1881 = vpack.c.b16 %v1806, %v1805
    %v1882 = vpack.c.b16 %v1808, %v1807
    %v1883 = vpack.c.b16 %v1810, %v1809
    %v1884 = vpack.c.b16 %v1812, %v1811
    %v1885 = vpack.c.b16 %v1814, %v1813
    %v1886 = vpack.c.b16 %v1816, %v1815
    %v1887 = vpack.c.b16 %v1818, %v1817
    %v1888 = vpack.c.b16 %v1820, %v1819
    %v1889 = vpack.c.b16 %v1822, %v1821
    %v1890 = vpack.c.b16 %v1824, %v1823
    %v1891 = vpack.c.b16 %v1826, %v1825
    %v1892 = vpack.c.b16 %v1828, %v1827
    %v1893 = vpack.c.b16 %v1830, %v1829
    %v1894 = vpack.c.b16 %v1832, %v1831
    %v1895 = vpack.c.b16 %v1834, %v1833
    %v1896 = vpack.c.b16 %v1836, %v1835
    %v1897 = vpack.c.b16 %v1838, %v1837
    %v1898 = vpack.c.b16 %v1840, %v1839
    %v1899 = vpack.c.b16 %v1842, %v1841
    %v1900 = vpack.c.b16 %v1844, %v1843
    %v1901 = vpack.c.b16 %v1846, %v1845
    %v1902 = vpack.c.b16 %v1848, %v1847
    %v1903 = vpack.c.b16 %v1850, %v1849
    %v1904 = vpack.c.b16 %v1852, %v1851
    %v1905 = vpack.c.b16 %v1854, %v1853
    %v1906 = vpack.c.b16 %v1856, %v1855
    %v1907 = vpack.c.b16 %v1858, %v1857
    %v1908 = vpack.c.b16 %v1860, %v1859
    %1957 = vmatprep.subr.bf16.mxu0 0
    %1958 = vmatpush1.bf16.msra.mxu0 %v1868
    %1959 = vmatprep.subr.bf16.mxu0 0
    %1960 = vmatpush1.bf16.msra.mxu0 %v1867
    %1961 = vmatprep.subr.bf16.mxu0 0
    %1962 = vmatpush1.bf16.msra.mxu0 %v1866
    %1963 = vmatprep.subr.bf16.mxu0 0
    %1964 = vmatpush1.bf16.msra.mxu0 %v1865
    %1965 = vmatprep.subr.bf16.mxu0 0
    %1966 = vmatpush1.bf16.msra.mxu0 %v1864
    %1967 = vmatprep.subr.bf16.mxu0 0
    %1968 = vmatpush1.bf16.msra.mxu0 %v1863
    %1969 = vmatprep.subr.bf16.mxu0 0
    %1970 = vmatpush1.bf16.msra.mxu0 %v1862
    %1971 = vmatprep.subr.bf16.mxu0 0
    %1972 = vmatpush1.bf16.msra.mxu0 %v1861
    %1973 = vmatprep.subr.bf16.mxu0 0
    %1974 = vmatpush2.bf16.msra.mxu0 %v1876
    %1975 = vmatprep.subr.bf16.mxu0 0
    %1976 = vmatpush2.bf16.msra.mxu0 %v1875
    %1977 = vmatprep.subr.bf16.mxu0 0
    %1978 = vmatpush2.bf16.msra.mxu0 %v1874
    %1979 = vmatprep.subr.bf16.mxu0 0
    %1980 = vmatpush2.bf16.msra.mxu0 %v1873
    %1981 = vmatprep.subr.bf16.mxu0 0
    %1982 = vmatpush2.bf16.msra.mxu0 %v1872
    %1983 = vmatprep.subr.bf16.mxu0 0
    %1984 = vmatpush2.bf16.msra.mxu0 %v1871
    %1985 = vmatprep.subr.bf16.mxu0 0
    %1986 = vmatpush2.bf16.msra.mxu0 %v1870
    %1987 = vmatprep.subr.bf16.mxu0 0
    %1988 = vmatpush2.bf16.msra.mxu0 %v1869
    %1989 = vmatprep.mubr.bf16.mxu0 %v1646
    %1990 = vmatmul.mubr.bf16.gmra.mxu0 %v1645
    %v1991 = vpop.f32.mrf.mxu0
    %v1992 = vadd.f32 0.0, %v1991
    %v1993 = vpop.f32.mrf.mxu0
    %v1994 = vpop.f32.mrf.mxu0
    %v1995 = vadd.f32 0.0, %v1994
    %v1996 = vpop.f32.mrf.mxu0
    %1997 = vmatprep.mubr.bf16.mxu0 %v1652
    %1998 = vmatmul.mubr.bf16.gmra.mxu0 %v1651
    %v1999 = vpop.f32.mrf.mxu0
    %v2000 = vadd.f32 0.0, %v1999
    %v2001 = vpop.f32.mrf.mxu0
    %v2002 = vpop.f32.mrf.mxu0
    %v2003 = vadd.f32 0.0, %v2002
    %v2004 = vpop.f32.mrf.mxu0
    %2005 = vdwg.mxu0
    %2006 = vmatprep.subr.bf16.mxu0 0
    %2007 = vmatpush1.bf16.msra.mxu0 %v1884
    %2008 = vmatprep.subr.bf16.mxu0 0
    %2009 = vmatpush1.bf16.msra.mxu0 %v1883
    %2010 = vmatprep.subr.bf16.mxu0 0
    %2011 = vmatpush1.bf16.msra.mxu0 %v1882
    %2012 = vmatprep.subr.bf16.mxu0 0
    %2013 = vmatpush1.bf16.msra.mxu0 %v1881
    %2014 = vmatprep.subr.bf16.mxu0 0
    %2015 = vmatpush1.bf16.msra.mxu0 %v1880
    %2016 = vmatprep.subr.bf16.mxu0 0
    %2017 = vmatpush1.bf16.msra.mxu0 %v1879
    %2018 = vmatprep.subr.bf16.mxu0 0
    %2019 = vmatpush1.bf16.msra.mxu0 %v1878
    %2020 = vmatprep.subr.bf16.mxu0 0
    %2021 = vmatpush1.bf16.msra.mxu0 %v1877
    %2022 = vmatprep.subr.bf16.mxu0 0
    %2023 = vmatpush2.bf16.msra.mxu0 %v1892
    %2024 = vmatprep.subr.bf16.mxu0 0
    %2025 = vmatpush2.bf16.msra.mxu0 %v1891
    %2026 = vmatprep.subr.bf16.mxu0 0
    %2027 = vmatpush2.bf16.msra.mxu0 %v1890
    %2028 = vmatprep.subr.bf16.mxu0 0
    %2029 = vmatpush2.bf16.msra.mxu0 %v1889
    %2030 = vmatprep.subr.bf16.mxu0 0
    %2031 = vmatpush2.bf16.msra.mxu0 %v1888
    %2032 = vmatprep.subr.bf16.mxu0 0
    %2033 = vmatpush2.bf16.msra.mxu0 %v1887
    %2034 = vmatprep.subr.bf16.mxu0 0
    %2035 = vmatpush2.bf16.msra.mxu0 %v1886
    %2036 = vmatprep.subr.bf16.mxu0 0
    %2037 = vmatpush2.bf16.msra.mxu0 %v1885
    %2038 = vmatprep.mubr.bf16.mxu0 %v1648
    %2039 = vmatmul.mubr.bf16.gmra.mxu0 %v1647
    %v2040 = vpop.f32.mrf.mxu0
    %v2041 = vadd.f32 %v1992, %v2040
    %v2042 = vpop.f32.mrf.mxu0
    %v2043 = vpop.f32.mrf.mxu0
    %v2044 = vadd.f32 %v1995, %v2043
    %v2045 = vpop.f32.mrf.mxu0
    %2046 = vmatprep.mubr.bf16.mxu0 %v1654
    %2047 = vmatmul.mubr.bf16.gmra.mxu0 %v1653
    %v2048 = vpop.f32.mrf.mxu0
    %v2049 = vadd.f32 %v2000, %v2048
    %v2050 = vpop.f32.mrf.mxu0
    %v2051 = vpop.f32.mrf.mxu0
    %v2052 = vadd.f32 %v2003, %v2051
    %v2053 = vpop.f32.mrf.mxu0
    %2054 = vdwg.mxu0
    %2055 = vmatprep.subr.bf16.mxu0 0
    %2056 = vmatpush1.bf16.msra.mxu0 %v1900
    %2057 = vmatprep.subr.bf16.mxu0 0
    %2058 = vmatpush1.bf16.msra.mxu0 %v1899
    %2059 = vmatprep.subr.bf16.mxu0 0
    %2060 = vmatpush1.bf16.msra.mxu0 %v1898
    %2061 = vmatprep.subr.bf16.mxu0 0
    %2062 = vmatpush1.bf16.msra.mxu0 %v1897
    %2063 = vmatprep.subr.bf16.mxu0 0
    %2064 = vmatpush1.bf16.msra.mxu0 %v1896
    %2065 = vmatprep.subr.bf16.mxu0 0
    %2066 = vmatpush1.bf16.msra.mxu0 %v1895
    %2067 = vmatprep.subr.bf16.mxu0 0
    %2068 = vmatpush1.bf16.msra.mxu0 %v1894
    %2069 = vmatprep.subr.bf16.mxu0 0
    %2070 = vmatpush1.bf16.msra.mxu0 %v1893
    %2071 = vmatprep.subr.bf16.mxu0 0
    %2072 = vmatpush2.bf16.msra.mxu0 %v1908
    %2073 = vmatprep.subr.bf16.mxu0 0
    %2074 = vmatpush2.bf16.msra.mxu0 %v1907
    %2075 = vmatprep.subr.bf16.mxu0 0
    %2076 = vmatpush2.bf16.msra.mxu0 %v1906
    %2077 = vmatprep.subr.bf16.mxu0 0
    %2078 = vmatpush2.bf16.msra.mxu0 %v1905
    %2079 = vmatprep.subr.bf16.mxu0 0
    %2080 = vmatpush2.bf16.msra.mxu0 %v1904
    %2081 = vmatprep.subr.bf16.mxu0 0
    %2082 = vmatpush2.bf16.msra.mxu0 %v1903
    %2083 = vmatprep.subr.bf16.mxu0 0
    %2084 = vmatpush2.bf16.msra.mxu0 %v1902
    %2085 = vmatprep.subr.bf16.mxu0 0
    %2086 = vmatpush2.bf16.msra.mxu0 %v1901
    %2087 = vmatprep.mubr.bf16.mxu0 %v1650
    %2088 = vmatmul.mubr.bf16.gmra.mxu0 %v1649
    %v2089 = vpop.f32.mrf.mxu0
    %v2090 = vadd.f32 %v2041, %v2089
    %v2091 = vpop.f32.mrf.mxu0
    %v2092 = vpop.f32.mrf.mxu0
    %v2093 = vadd.f32 %v2044, %v2092
    %v2094 = vpop.f32.mrf.mxu0
    %2095 = vmatprep.mubr.bf16.mxu0 %v1656
    %2096 = vmatmul.mubr.bf16.gmra.mxu0 %v1655
    %v2097 = vpop.f32.mrf.mxu0
    %v2098 = vadd.f32 %v2049, %v2097
    %v2099 = vpop.f32.mrf.mxu0
    %v2100 = vpop.f32.mrf.mxu0
    %v2101 = vadd.f32 %v2052, %v2100
    %v2102 = vpop.f32.mrf.mxu0
    %2103 = vdwg.mxu0
    %v2104 = vadd.f32 %v1504, %v2090
    %v2105 = vadd.f32 %v1507, %v2093
    %v2106 = vadd.f32 %v1512, %v2098
    %v2107 = vadd.f32 %v1515, %v2101
    %v2108 = vld [vmem:[#allocation2 + $0x18] sm:$0xff]
    %v2109 = vld [vmem:[#allocation2 + $0x20] sm:$0xff]
    %v2110 = vld [vmem:[#allocation2 + $0x28] sm:$0xff]
    %v2111 = vld [vmem:[#allocation2 + $0x30] sm:$0xff]
    %v2112 = vld [vmem:[#allocation2 + $0x38] sm:$0xff]
    %v2113 = vld [vmem:[#allocation2 + $0x40] sm:$0xff]
    %v2114 = vld [vmem:[#allocation2 + $0x48] sm:$0x11]
    %v2115 = vld [vmem:[#allocation2 + $0x50] sm:$0x11]
    %v2116 = vld [vmem:[#allocation2 + $0x58] sm:$0x11]
    %v2117 = vld [vmem:[#allocation2 + $0x78] sm:$0xff]
    %v2118 = vld [vmem:[#allocation2 + $0x80] sm:$0xff]
    %v2119 = vld [vmem:[#allocation2 + $0x88] sm:$0xff]
    %v2120 = vld [vmem:[#allocation2 + $0x90] sm:$0xff]
    %v2121 = vld [vmem:[#allocation2 + $0x98] sm:$0xff]
    %v2122 = vld [vmem:[#allocation2 + $0xa0] sm:$0xff]
    %v2123 = vld [vmem:[#allocation2 + $0xa8] sm:$0x11]
    %v2124 = vld [vmem:[#allocation2 + $0xb0] sm:$0x11]
    %v2125 = vld [vmem:[#allocation2 + $0xb8] sm:$0x11]
    %vm2126 = vsmask.f32 3328
    %vm2127 = vsmask.f32 7440
    %vm2128 = vmor %vm2126, %vm2127
    %v2130 = vshrl.u32 %v2108, 16
    %v2132 = vrot.slane %v2130, 4
    %v2133 = vshll.u32 %v2108, 16
    %v2135 = vrot.slane %v2133, 5
    %v2136 = vor.u32 %v2132, %v2135
    %v2137 = vrot.slane %v2136, 4
    %v2139 = vshll.u32 %v2111, 16
    %v2141 = vrot.slane %v2139, 5
    %v2142 = vsel %vm2128, %v2137, %v2141
    %v2144 = vshrl.u32 %v2109, 16
    %v2146 = vrot.slane %v2144, 4
    %v2147 = vshll.u32 %v2109, 16
    %v2149 = vrot.slane %v2147, 5
    %v2150 = vor.u32 %v2146, %v2149
    %v2151 = vrot.slane %v2150, 4
    %v2153 = vshll.u32 %v2112, 16
    %v2155 = vrot.slane %v2153, 5
    %v2156 = vsel %vm2128, %v2151, %v2155
    %v2158 = vshrl.u32 %v2110, 16
    %v2160 = vrot.slane %v2158, 4
    %v2161 = vshll.u32 %v2110, 16
    %v2163 = vrot.slane %v2161, 5
    %v2164 = vor.u32 %v2160, %v2163
    %v2165 = vrot.slane %v2164, 4
    %v2167 = vshll.u32 %v2113, 16
    %v2169 = vrot.slane %v2167, 5
    %v2170 = vsel %vm2128, %v2165, %v2169
    %v2171 = vshrl.u32 %v2111, 16
    %v2173 = vrot.slane %v2171, 4
    %v2174 = vor.u32 %v2173, %v2141
    %v2175 = vrot.slane %v2174, 4
    %v2177 = vshll.u32 %v2114, 16
    %v2179 = vrot.slane %v2177, 5
    %v2180 = vsel %vm2128, %v2175, %v2179
    %v2181 = vshrl.u32 %v2112, 16
    %v2183 = vrot.slane %v2181, 4
    %v2184 = vor.u32 %v2183, %v2155
    %v2185 = vrot.slane %v2184, 4
    %v2187 = vshll.u32 %v2115, 16
    %v2189 = vrot.slane %v2187, 5
    %v2190 = vsel %vm2128, %v2185, %v2189
    %v2191 = vshrl.u32 %v2113, 16
    %v2193 = vrot.slane %v2191, 4
    %v2194 = vor.u32 %v2193, %v2169
    %v2195 = vrot.slane %v2194, 4
    %v2197 = vshll.u32 %v2116, 16
    %v2199 = vrot.slane %v2197, 5
    %v2200 = vsel %vm2128, %v2195, %v2199
    %v2202 = vshrl.u32 %v2117, 16
    %v2204 = vrot.slane %v2202, 4
    %v2205 = vshll.u32 %v2117, 16
    %v2207 = vrot.slane %v2205, 5
    %v2208 = vor.u32 %v2204, %v2207
    %v2209 = vrot.slane %v2208, 4
    %v2211 = vshll.u32 %v2120, 16
    %v2213 = vrot.slane %v2211, 5
    %v2214 = vsel %vm2128, %v2209, %v2213
    %v2216 = vshrl.u32 %v2118, 16
    %v2218 = vrot.slane %v2216, 4
    %v2219 = vshll.u32 %v2118, 16
    %v2221 = vrot.slane %v2219, 5
    %v2222 = vor.u32 %v2218, %v2221
    %v2223 = vrot.slane %v2222, 4
    %v2225 = vshll.u32 %v2121, 16
    %v2227 = vrot.slane %v2225, 5
    %v2228 = vsel %vm2128, %v2223, %v2227
    %v2230 = vshrl.u32 %v2119, 16
    %v2232 = vrot.slane %v2230, 4
    %v2233 = vshll.u32 %v2119, 16
    %v2235 = vrot.slane %v2233, 5
    %v2236 = vor.u32 %v2232, %v2235
    %v2237 = vrot.slane %v2236, 4
    %v2239 = vshll.u32 %v2122, 16
    %v2241 = vrot.slane %v2239, 5
    %v2242 = vsel %vm2128, %v2237, %v2241
    %v2243 = vshrl.u32 %v2120, 16
    %v2245 = vrot.slane %v2243, 4
    %v2246 = vor.u32 %v2245, %v2213
    %v2247 = vrot.slane %v2246, 4
    %v2249 = vshll.u32 %v2123, 16
    %v2251 = vrot.slane %v2249, 5
    %v2252 = vsel %vm2128, %v2247, %v2251
    %v2253 = vshrl.u32 %v2121, 16
    %v2255 = vrot.slane %v2253, 4
    %v2256 = vor.u32 %v2255, %v2227
    %v2257 = vrot.slane %v2256, 4
    %v2259 = vshll.u32 %v2124, 16
    %v2261 = vrot.slane %v2259, 5
    %v2262 = vsel %vm2128, %v2257, %v2261
    %v2263 = vshrl.u32 %v2122, 16
    %v2265 = vrot.slane %v2263, 4
    %v2266 = vor.u32 %v2265, %v2241
    %v2267 = vrot.slane %v2266, 4
    %v2269 = vshll.u32 %v2125, 16
    %v2271 = vrot.slane %v2269, 5
    %v2272 = vsel %vm2128, %v2267, %v2271
    %s2273 = scalar_lea.vmem [#allocation6], 1152
    %v2274 = vld [vmem:[%s2273] sm:$0xf]
    %v2275 = vld [vmem:[%s2273 + $0x4] sm:$0xf]
    %v2276 = vld [vmem:[%s2273 + $0x8] sm:$0xf]
    %v2277 = vld [vmem:[%s2273 + $0xc] sm:$0xf]
    %v2278 = vld [vmem:[%s2273 + $0x10] sm:$0xf]
    %v2279 = vld [vmem:[%s2273 + $0x14] sm:$0xf]
    %v2280 = vld [vmem:[%s2273 + $0x18] sm:$0xf]
    %v2281 = vld [vmem:[%s2273 + $0x1c] sm:$0xf]
    %v2282 = vld [vmem:[%s2273 + $0x20] sm:$0xf]
    %v2283 = vld [vmem:[%s2273 + $0x24] sm:$0xf]
    %v2284 = vld [vmem:[%s2273 + $0x28] sm:$0xf]
    %v2285 = vld [vmem:[%s2273 + $0x2c] sm:$0xf]
    %v2286 = vld [vmem:[%s2273 + $0x30] sm:$0xf]
    %v2287 = vld [vmem:[%s2273 + $0x34] sm:$0xf]
    %v2288 = vld [vmem:[%s2273 + $0x38] sm:$0xf]
    %v2289 = vld [vmem:[%s2273 + $0x3c] sm:$0xf]
    %v2290 = vld [vmem:[%s2273 + $0x40] sm:$0xf]
    %v2291 = vld [vmem:[%s2273 + $0x44] sm:$0xf]
    %v2292 = vld [vmem:[%s2273 + $0x48] sm:$0xf]
    %v2293 = vld [vmem:[%s2273 + $0x4c] sm:$0xf]
    %v2294 = vld [vmem:[%s2273 + $0x50] sm:$0xf]
    %v2295 = vld [vmem:[%s2273 + $0x54] sm:$0xf]
    %v2296 = vld [vmem:[%s2273 + $0x58] sm:$0xf]
    %v2297 = vld [vmem:[%s2273 + $0x5c] sm:$0xf]
    %v2298 = vld [vmem:[%s2273 + $0x60] sm:$0xf]
    %v2299 = vld [vmem:[%s2273 + $0x64] sm:$0xf]
    %v2300 = vld [vmem:[%s2273 + $0x68] sm:$0xf]
    %v2301 = vld [vmem:[%s2273 + $0x6c] sm:$0xf]
    %v2302 = vld [vmem:[%s2273 + $0x70] sm:$0xf]
    %v2303 = vld [vmem:[%s2273 + $0x74] sm:$0xf]
    %v2304 = vld [vmem:[%s2273 + $0x78] sm:$0xf]
    %v2305 = vld [vmem:[%s2273 + $0x7c] sm:$0xf]
    %v2306 = vld [vmem:[%s2273 + $0x80] sm:$0xf]
    %v2307 = vld [vmem:[%s2273 + $0x84] sm:$0xf]
    %v2308 = vld [vmem:[%s2273 + $0x88] sm:$0xf]
    %v2309 = vld [vmem:[%s2273 + $0x8c] sm:$0xf]
    %v2310 = vld [vmem:[%s2273 + $0x90] sm:$0xf]
    %v2311 = vld [vmem:[%s2273 + $0x94] sm:$0xf]
    %v2312 = vld [vmem:[%s2273 + $0x98] sm:$0xf]
    %v2313 = vld [vmem:[%s2273 + $0x9c] sm:$0xf]
    %v2314 = vld [vmem:[%s2273 + $0xa0] sm:$0xf]
    %v2315 = vld [vmem:[%s2273 + $0xa4] sm:$0xf]
    %v2316 = vld [vmem:[%s2273 + $0xa8] sm:$0xf]
    %v2317 = vld [vmem:[%s2273 + $0xac] sm:$0xf]
    %v2318 = vld [vmem:[%s2273 + $0xb0] sm:$0xf]
    %v2319 = vld [vmem:[%s2273 + $0xb4] sm:$0xf]
    %v2320 = vld [vmem:[%s2273 + $0xb8] sm:$0xf]
    %v2321 = vld [vmem:[%s2273 + $0xbc] sm:$0xf]
    %v2322 = vld [vmem:[%s2273 + $0xc0] sm:$0xf]
    %v2323 = vld [vmem:[%s2273 + $0xc4] sm:$0xf]
    %v2324 = vld [vmem:[%s2273 + $0xc8] sm:$0xf]
    %v2325 = vld [vmem:[%s2273 + $0xcc] sm:$0xf]
    %v2326 = vld [vmem:[%s2273 + $0xd0] sm:$0xf]
    %v2327 = vld [vmem:[%s2273 + $0xd4] sm:$0xf]
    %v2328 = vld [vmem:[%s2273 + $0xd8] sm:$0xf]
    %v2329 = vld [vmem:[%s2273 + $0xdc] sm:$0xf]
    %v2330 = vld [vmem:[%s2273 + $0xe0] sm:$0xf]
    %v2331 = vld [vmem:[%s2273 + $0xe4] sm:$0xf]
    %v2332 = vld [vmem:[%s2273 + $0xe8] sm:$0xf]
    %v2333 = vld [vmem:[%s2273 + $0xec] sm:$0xf]
    %v2334 = vld [vmem:[%s2273 + $0xf0] sm:$0xf]
    %v2335 = vld [vmem:[%s2273 + $0xf4] sm:$0xf]
    %v2336 = vld [vmem:[%s2273 + $0xf8] sm:$0xf]
    %v2337 = vld [vmem:[%s2273 + $0xfc] sm:$0xf]
    %v2338 = vld [vmem:[%s2273 + $0x100] sm:$0xf]
    %v2339 = vld [vmem:[%s2273 + $0x104] sm:$0xf]
    %v2340 = vld [vmem:[%s2273 + $0x108] sm:$0xf]
    %v2341 = vld [vmem:[%s2273 + $0x10c] sm:$0xf]
    %v2342 = vld [vmem:[%s2273 + $0x110] sm:$0xf]
    %v2343 = vld [vmem:[%s2273 + $0x114] sm:$0xf]
    %v2344 = vld [vmem:[%s2273 + $0x118] sm:$0xf]
    %v2345 = vld [vmem:[%s2273 + $0x11c] sm:$0xf]
    %v2346 = vld [vmem:[%s2273 + $0x120] sm:$0xf]
    %v2347 = vld [vmem:[%s2273 + $0x124] sm:$0xf]
    %v2348 = vld [vmem:[%s2273 + $0x128] sm:$0xf]
    %v2349 = vld [vmem:[%s2273 + $0x12c] sm:$0xf]
    %v2350 = vld [vmem:[%s2273 + $0x130] sm:$0xf]
    %v2351 = vld [vmem:[%s2273 + $0x134] sm:$0xf]
    %v2352 = vld [vmem:[%s2273 + $0x138] sm:$0xf]
    %v2353 = vld [vmem:[%s2273 + $0x13c] sm:$0xf]
    %v2354 = vld [vmem:[%s2273 + $0x140] sm:$0xf]
    %v2355 = vld [vmem:[%s2273 + $0x144] sm:$0xf]
    %v2356 = vld [vmem:[%s2273 + $0x148] sm:$0xf]
    %v2357 = vld [vmem:[%s2273 + $0x14c] sm:$0xf]
    %v2358 = vld [vmem:[%s2273 + $0x150] sm:$0xf]
    %v2359 = vld [vmem:[%s2273 + $0x154] sm:$0xf]
    %v2360 = vld [vmem:[%s2273 + $0x158] sm:$0xf]
    %v2361 = vld [vmem:[%s2273 + $0x15c] sm:$0xf]
    %v2362 = vld [vmem:[%s2273 + $0x160] sm:$0xf]
    %v2363 = vld [vmem:[%s2273 + $0x164] sm:$0xf]
    %v2364 = vld [vmem:[%s2273 + $0x168] sm:$0xf]
    %v2365 = vld [vmem:[%s2273 + $0x16c] sm:$0xf]
    %v2366 = vld [vmem:[%s2273 + $0x170] sm:$0xf]
    %v2367 = vld [vmem:[%s2273 + $0x174] sm:$0xf]
    %v2368 = vld [vmem:[%s2273 + $0x178] sm:$0xf]
    %v2369 = vld [vmem:[%s2273 + $0x17c] sm:$0xf]
    %v2370 = vunpack.c.l.b16 %v2142
    %v2371 = vunpack.c.h.b16 %v2142
    %v2372 = vunpack.c.l.b16 %v2156
    %v2373 = vunpack.c.h.b16 %v2156
    %v2374 = vunpack.c.l.b16 %v2170
    %v2375 = vunpack.c.h.b16 %v2170
    %v2376 = vunpack.c.l.b16 %v2180
    %v2377 = vunpack.c.h.b16 %v2180
    %v2378 = vunpack.c.l.b16 %v2190
    %v2379 = vunpack.c.h.b16 %v2190
    %v2380 = vunpack.c.l.b16 %v2200
    %v2381 = vunpack.c.h.b16 %v2200
    %v2382 = vunpack.c.l.b16 %v2214
    %v2383 = vunpack.c.h.b16 %v2214
    %v2384 = vunpack.c.l.b16 %v2228
    %v2385 = vunpack.c.h.b16 %v2228
    %v2386 = vunpack.c.l.b16 %v2242
    %v2387 = vunpack.c.h.b16 %v2242
    %v2388 = vunpack.c.l.b16 %v2252
    %v2389 = vunpack.c.h.b16 %v2252
    %v2390 = vunpack.c.l.b16 %v2262
    %v2391 = vunpack.c.h.b16 %v2262
    %v2392 = vunpack.c.l.b16 %v2272
    %v2393 = vunpack.c.h.b16 %v2272
    %v2394 = vpack.c.b16 %v2376, %v2370
    %v2395 = vpack.c.b16 %v2377, %v2371
    %v2396 = vpack.c.b16 %v2378, %v2372
    %v2397 = vpack.c.b16 %v2379, %v2373
    %v2398 = vpack.c.b16 %v2380, %v2374
    %v2399 = vpack.c.b16 %v2381, %v2375
    %v2400 = vpack.c.b16 %v2388, %v2382
    %v2401 = vpack.c.b16 %v2389, %v2383
    %v2402 = vpack.c.b16 %v2390, %v2384
    %v2403 = vpack.c.b16 %v2391, %v2385
    %v2404 = vpack.c.b16 %v2392, %v2386
    %v2405 = vpack.c.b16 %v2393, %v2387
    %v2514 = vunpack.c.l.b16 %v2274
    %v2515 = vunpack.c.l.b16 %v2275
    %v2516 = vunpack.c.l.b16 %v2276
    %v2517 = vunpack.c.l.b16 %v2277
    %v2518 = vunpack.c.l.b16 %v2278
    %v2519 = vunpack.c.l.b16 %v2279
    %v2520 = vunpack.c.l.b16 %v2280
    %v2521 = vunpack.c.l.b16 %v2281
    %v2522 = vunpack.c.l.b16 %v2282
    %v2523 = vunpack.c.l.b16 %v2283
    %v2524 = vunpack.c.l.b16 %v2284
    %v2525 = vunpack.c.l.b16 %v2285
    %v2526 = vunpack.c.l.b16 %v2286
    %v2527 = vunpack.c.l.b16 %v2287
    %v2528 = vunpack.c.l.b16 %v2288
    %v2529 = vunpack.c.l.b16 %v2289
    %v2530 = vunpack.c.l.b16 %v2290
    %v2531 = vunpack.c.l.b16 %v2291
    %v2532 = vunpack.c.l.b16 %v2292
    %v2533 = vunpack.c.l.b16 %v2293
    %v2534 = vunpack.c.l.b16 %v2294
    %v2535 = vunpack.c.l.b16 %v2295
    %v2536 = vunpack.c.l.b16 %v2296
    %v2537 = vunpack.c.l.b16 %v2297
    %v2538 = vunpack.c.l.b16 %v2298
    %v2539 = vunpack.c.l.b16 %v2299
    %v2540 = vunpack.c.l.b16 %v2300
    %v2541 = vunpack.c.l.b16 %v2301
    %v2542 = vunpack.c.l.b16 %v2302
    %v2543 = vunpack.c.l.b16 %v2303
    %v2544 = vunpack.c.l.b16 %v2304
    %v2545 = vunpack.c.l.b16 %v2305
    %v2546 = vunpack.c.l.b16 %v2306
    %v2547 = vunpack.c.l.b16 %v2307
    %v2548 = vunpack.c.l.b16 %v2308
    %v2549 = vunpack.c.l.b16 %v2309
    %v2550 = vunpack.c.l.b16 %v2310
    %v2551 = vunpack.c.l.b16 %v2311
    %v2552 = vunpack.c.l.b16 %v2312
    %v2553 = vunpack.c.l.b16 %v2313
    %v2554 = vunpack.c.l.b16 %v2314
    %v2555 = vunpack.c.l.b16 %v2315
    %v2556 = vunpack.c.l.b16 %v2316
    %v2557 = vunpack.c.l.b16 %v2317
    %v2558 = vunpack.c.l.b16 %v2318
    %v2559 = vunpack.c.l.b16 %v2319
    %v2560 = vunpack.c.l.b16 %v2320
    %v2561 = vunpack.c.l.b16 %v2321
    %v2562 = vunpack.c.l.b16 %v2322
    %v2563 = vunpack.c.l.b16 %v2323
    %v2564 = vunpack.c.l.b16 %v2324
    %v2565 = vunpack.c.l.b16 %v2325
    %v2566 = vunpack.c.l.b16 %v2326
    %v2567 = vunpack.c.l.b16 %v2327
    %v2568 = vunpack.c.l.b16 %v2328
    %v2569 = vunpack.c.l.b16 %v2329
    %v2570 = vunpack.c.l.b16 %v2330
    %v2571 = vunpack.c.l.b16 %v2331
    %v2572 = vunpack.c.l.b16 %v2332
    %v2573 = vunpack.c.l.b16 %v2333
    %v2574 = vunpack.c.l.b16 %v2334
    %v2575 = vunpack.c.l.b16 %v2335
    %v2576 = vunpack.c.l.b16 %v2336
    %v2577 = vunpack.c.l.b16 %v2337
    %v2578 = vunpack.c.l.b16 %v2338
    %v2579 = vunpack.c.l.b16 %v2339
    %v2580 = vunpack.c.l.b16 %v2340
    %v2581 = vunpack.c.l.b16 %v2341
    %v2582 = vunpack.c.l.b16 %v2342
    %v2583 = vunpack.c.l.b16 %v2343
    %v2584 = vunpack.c.l.b16 %v2344
    %v2585 = vunpack.c.l.b16 %v2345
    %v2586 = vunpack.c.l.b16 %v2346
    %v2587 = vunpack.c.l.b16 %v2347
    %v2588 = vunpack.c.l.b16 %v2348
    %v2589 = vunpack.c.l.b16 %v2349
    %v2590 = vunpack.c.l.b16 %v2350
    %v2591 = vunpack.c.l.b16 %v2351
    %v2592 = vunpack.c.l.b16 %v2352
    %v2593 = vunpack.c.l.b16 %v2353
    %v2594 = vunpack.c.l.b16 %v2354
    %v2595 = vunpack.c.l.b16 %v2355
    %v2596 = vunpack.c.l.b16 %v2356
    %v2597 = vunpack.c.l.b16 %v2357
    %v2598 = vunpack.c.l.b16 %v2358
    %v2599 = vunpack.c.l.b16 %v2359
    %v2600 = vunpack.c.l.b16 %v2360
    %v2601 = vunpack.c.l.b16 %v2361
    %v2602 = vunpack.c.l.b16 %v2362
    %v2603 = vunpack.c.l.b16 %v2363
    %v2604 = vunpack.c.l.b16 %v2364
    %v2605 = vunpack.c.l.b16 %v2365
    %v2606 = vunpack.c.l.b16 %v2366
    %v2607 = vunpack.c.l.b16 %v2367
    %v2608 = vunpack.c.l.b16 %v2368
    %v2609 = vunpack.c.l.b16 %v2369
    %v2610 = vpack.c.b16 %v2515, %v2514
    %v2611 = vpack.c.b16 %v2517, %v2516
    %v2612 = vpack.c.b16 %v2519, %v2518
    %v2613 = vpack.c.b16 %v2521, %v2520
    %v2614 = vpack.c.b16 %v2523, %v2522
    %v2615 = vpack.c.b16 %v2525, %v2524
    %v2616 = vpack.c.b16 %v2527, %v2526
    %v2617 = vpack.c.b16 %v2529, %v2528
    %v2618 = vpack.c.b16 %v2531, %v2530
    %v2619 = vpack.c.b16 %v2533, %v2532
    %v2620 = vpack.c.b16 %v2535, %v2534
    %v2621 = vpack.c.b16 %v2537, %v2536
    %v2622 = vpack.c.b16 %v2539, %v2538
    %v2623 = vpack.c.b16 %v2541, %v2540
    %v2624 = vpack.c.b16 %v2543, %v2542
    %v2625 = vpack.c.b16 %v2545, %v2544
    %v2626 = vpack.c.b16 %v2547, %v2546
    %v2627 = vpack.c.b16 %v2549, %v2548
    %v2628 = vpack.c.b16 %v2551, %v2550
    %v2629 = vpack.c.b16 %v2553, %v2552
    %v2630 = vpack.c.b16 %v2555, %v2554
    %v2631 = vpack.c.b16 %v2557, %v2556
    %v2632 = vpack.c.b16 %v2559, %v2558
    %v2633 = vpack.c.b16 %v2561, %v2560
    %v2634 = vpack.c.b16 %v2563, %v2562
    %v2635 = vpack.c.b16 %v2565, %v2564
    %v2636 = vpack.c.b16 %v2567, %v2566
    %v2637 = vpack.c.b16 %v2569, %v2568
    %v2638 = vpack.c.b16 %v2571, %v2570
    %v2639 = vpack.c.b16 %v2573, %v2572
    %v2640 = vpack.c.b16 %v2575, %v2574
    %v2641 = vpack.c.b16 %v2577, %v2576
    %v2642 = vpack.c.b16 %v2579, %v2578
    %v2643 = vpack.c.b16 %v2581, %v2580
    %v2644 = vpack.c.b16 %v2583, %v2582
    %v2645 = vpack.c.b16 %v2585, %v2584
    %v2646 = vpack.c.b16 %v2587, %v2586
    %v2647 = vpack.c.b16 %v2589, %v2588
    %v2648 = vpack.c.b16 %v2591, %v2590
    %v2649 = vpack.c.b16 %v2593, %v2592
    %v2650 = vpack.c.b16 %v2595, %v2594
    %v2651 = vpack.c.b16 %v2597, %v2596
    %v2652 = vpack.c.b16 %v2599, %v2598
    %v2653 = vpack.c.b16 %v2601, %v2600
    %v2654 = vpack.c.b16 %v2603, %v2602
    %v2655 = vpack.c.b16 %v2605, %v2604
    %v2656 = vpack.c.b16 %v2607, %v2606
    %v2657 = vpack.c.b16 %v2609, %v2608
    %2706 = vmatprep.subr.bf16.mxu0 0
    %2707 = vmatpush1.bf16.msra.mxu0 %v2617
    %2708 = vmatprep.subr.bf16.mxu0 0
    %2709 = vmatpush1.bf16.msra.mxu0 %v2616
    %2710 = vmatprep.subr.bf16.mxu0 0
    %2711 = vmatpush1.bf16.msra.mxu0 %v2615
    %2712 = vmatprep.subr.bf16.mxu0 0
    %2713 = vmatpush1.bf16.msra.mxu0 %v2614
    %2714 = vmatprep.subr.bf16.mxu0 0
    %2715 = vmatpush1.bf16.msra.mxu0 %v2613
    %2716 = vmatprep.subr.bf16.mxu0 0
    %2717 = vmatpush1.bf16.msra.mxu0 %v2612
    %2718 = vmatprep.subr.bf16.mxu0 0
    %2719 = vmatpush1.bf16.msra.mxu0 %v2611
    %2720 = vmatprep.subr.bf16.mxu0 0
    %2721 = vmatpush1.bf16.msra.mxu0 %v2610
    %2722 = vmatprep.subr.bf16.mxu0 0
    %2723 = vmatpush2.bf16.msra.mxu0 %v2625
    %2724 = vmatprep.subr.bf16.mxu0 0
    %2725 = vmatpush2.bf16.msra.mxu0 %v2624
    %2726 = vmatprep.subr.bf16.mxu0 0
    %2727 = vmatpush2.bf16.msra.mxu0 %v2623
    %2728 = vmatprep.subr.bf16.mxu0 0
    %2729 = vmatpush2.bf16.msra.mxu0 %v2622
    %2730 = vmatprep.subr.bf16.mxu0 0
    %2731 = vmatpush2.bf16.msra.mxu0 %v2621
    %2732 = vmatprep.subr.bf16.mxu0 0
    %2733 = vmatpush2.bf16.msra.mxu0 %v2620
    %2734 = vmatprep.subr.bf16.mxu0 0
    %2735 = vmatpush2.bf16.msra.mxu0 %v2619
    %2736 = vmatprep.subr.bf16.mxu0 0
    %2737 = vmatpush2.bf16.msra.mxu0 %v2618
    %2738 = vmatprep.mubr.bf16.mxu0 %v2395
    %2739 = vmatmul.mubr.bf16.gmra.mxu0 %v2394
    %v2740 = vpop.f32.mrf.mxu0
    %v2741 = vadd.f32 0.0, %v2740
    %v2742 = vpop.f32.mrf.mxu0
    %v2743 = vpop.f32.mrf.mxu0
    %v2744 = vadd.f32 0.0, %v2743
    %v2745 = vpop.f32.mrf.mxu0
    %2746 = vmatprep.mubr.bf16.mxu0 %v2401
    %2747 = vmatmul.mubr.bf16.gmra.mxu0 %v2400
    %v2748 = vpop.f32.mrf.mxu0
    %v2749 = vadd.f32 0.0, %v2748
    %v2750 = vpop.f32.mrf.mxu0
    %v2751 = vpop.f32.mrf.mxu0
    %v2752 = vadd.f32 0.0, %v2751
    %v2753 = vpop.f32.mrf.mxu0
    %2754 = vdwg.mxu0
    %2755 = vmatprep.subr.bf16.mxu0 0
    %2756 = vmatpush1.bf16.msra.mxu0 %v2633
    %2757 = vmatprep.subr.bf16.mxu0 0
    %2758 = vmatpush1.bf16.msra.mxu0 %v2632
    %2759 = vmatprep.subr.bf16.mxu0 0
    %2760 = vmatpush1.bf16.msra.mxu0 %v2631
    %2761 = vmatprep.subr.bf16.mxu0 0
    %2762 = vmatpush1.bf16.msra.mxu0 %v2630
    %2763 = vmatprep.subr.bf16.mxu0 0
    %2764 = vmatpush1.bf16.msra.mxu0 %v2629
    %2765 = vmatprep.subr.bf16.mxu0 0
    %2766 = vmatpush1.bf16.msra.mxu0 %v2628
    %2767 = vmatprep.subr.bf16.mxu0 0
    %2768 = vmatpush1.bf16.msra.mxu0 %v2627
    %2769 = vmatprep.subr.bf16.mxu0 0
    %2770 = vmatpush1.bf16.msra.mxu0 %v2626
    %2771 = vmatprep.subr.bf16.mxu0 0
    %2772 = vmatpush2.bf16.msra.mxu0 %v2641
    %2773 = vmatprep.subr.bf16.mxu0 0
    %2774 = vmatpush2.bf16.msra.mxu0 %v2640
    %2775 = vmatprep.subr.bf16.mxu0 0
    %2776 = vmatpush2.bf16.msra.mxu0 %v2639
    %2777 = vmatprep.subr.bf16.mxu0 0
    %2778 = vmatpush2.bf16.msra.mxu0 %v2638
    %2779 = vmatprep.subr.bf16.mxu0 0
    %2780 = vmatpush2.bf16.msra.mxu0 %v2637
    %2781 = vmatprep.subr.bf16.mxu0 0
    %2782 = vmatpush2.bf16.msra.mxu0 %v2636
    %2783 = vmatprep.subr.bf16.mxu0 0
    %2784 = vmatpush2.bf16.msra.mxu0 %v2635
    %2785 = vmatprep.subr.bf16.mxu0 0
    %2786 = vmatpush2.bf16.msra.mxu0 %v2634
    %2787 = vmatprep.mubr.bf16.mxu0 %v2397
    %2788 = vmatmul.mubr.bf16.gmra.mxu0 %v2396
    %v2789 = vpop.f32.mrf.mxu0
    %v2790 = vadd.f32 %v2741, %v2789
    %v2791 = vpop.f32.mrf.mxu0
    %v2792 = vpop.f32.mrf.mxu0
    %v2793 = vadd.f32 %v2744, %v2792
    %v2794 = vpop.f32.mrf.mxu0
    %2795 = vmatprep.mubr.bf16.mxu0 %v2403
    %2796 = vmatmul.mubr.bf16.gmra.mxu0 %v2402
    %v2797 = vpop.f32.mrf.mxu0
    %v2798 = vadd.f32 %v2749, %v2797
    %v2799 = vpop.f32.mrf.mxu0
    %v2800 = vpop.f32.mrf.mxu0
    %v2801 = vadd.f32 %v2752, %v2800
    %v2802 = vpop.f32.mrf.mxu0
    %2803 = vdwg.mxu0
    %2804 = vmatprep.subr.bf16.mxu0 0
    %2805 = vmatpush1.bf16.msra.mxu0 %v2649
    %2806 = vmatprep.subr.bf16.mxu0 0
    %2807 = vmatpush1.bf16.msra.mxu0 %v2648
    %2808 = vmatprep.subr.bf16.mxu0 0
    %2809 = vmatpush1.bf16.msra.mxu0 %v2647
    %2810 = vmatprep.subr.bf16.mxu0 0
    %2811 = vmatpush1.bf16.msra.mxu0 %v2646
    %2812 = vmatprep.subr.bf16.mxu0 0
    %2813 = vmatpush1.bf16.msra.mxu0 %v2645
    %2814 = vmatprep.subr.bf16.mxu0 0
    %2815 = vmatpush1.bf16.msra.mxu0 %v2644
    %2816 = vmatprep.subr.bf16.mxu0 0
    %2817 = vmatpush1.bf16.msra.mxu0 %v2643
    %2818 = vmatprep.subr.bf16.mxu0 0
    %2819 = vmatpush1.bf16.msra.mxu0 %v2642
    %2820 = vmatprep.subr.bf16.mxu0 0
    %2821 = vmatpush2.bf16.msra.mxu0 %v2657
    %2822 = vmatprep.subr.bf16.mxu0 0
    %2823 = vmatpush2.bf16.msra.mxu0 %v2656
    %2824 = vmatprep.subr.bf16.mxu0 0
    %2825 = vmatpush2.bf16.msra.mxu0 %v2655
    %2826 = vmatprep.subr.bf16.mxu0 0
    %2827 = vmatpush2.bf16.msra.mxu0 %v2654
    %2828 = vmatprep.subr.bf16.mxu0 0
    %2829 = vmatpush2.bf16.msra.mxu0 %v2653
    %2830 = vmatprep.subr.bf16.mxu0 0
    %2831 = vmatpush2.bf16.msra.mxu0 %v2652
    %2832 = vmatprep.subr.bf16.mxu0 0
    %2833 = vmatpush2.bf16.msra.mxu0 %v2651
    %2834 = vmatprep.subr.bf16.mxu0 0
    %2835 = vmatpush2.bf16.msra.mxu0 %v2650
    %2836 = vmatprep.mubr.bf16.mxu0 %v2399
    %2837 = vmatmul.mubr.bf16.gmra.mxu0 %v2398
    %v2838 = vpop.f32.mrf.mxu0
    %v2839 = vadd.f32 %v2790, %v2838
    %v2840 = vpop.f32.mrf.mxu0
    %v2841 = vpop.f32.mrf.mxu0
    %v2842 = vadd.f32 %v2793, %v2841
    %v2843 = vpop.f32.mrf.mxu0
    %2844 = vmatprep.mubr.bf16.mxu0 %v2405
    %2845 = vmatmul.mubr.bf16.gmra.mxu0 %v2404
    %v2846 = vpop.f32.mrf.mxu0
    %v2847 = vadd.f32 %v2798, %v2846
    %v2848 = vpop.f32.mrf.mxu0
    %v2849 = vpop.f32.mrf.mxu0
    %v2850 = vadd.f32 %v2801, %v2849
    %v2851 = vpop.f32.mrf.mxu0
    %2852 = vdwg.mxu0
    %v2853 = vadd.f32 %v2104, %v2839
    %v2854 = vadd.f32 %v2105, %v2842
    %v2855 = vadd.f32 %v2106, %v2847
    %v2856 = vadd.f32 %v2107, %v2850
    %v2857 = vld [vmem:[#allocation2 + $0x18] sm:$0xee]
    %v2858 = vld [vmem:[#allocation2 + $0x20] sm:$0xee]
    %v2859 = vld [vmem:[#allocation2 + $0x28] sm:$0xee]
    %v2860 = vld [vmem:[#allocation2 + $0x78] sm:$0xee]
    %v2861 = vld [vmem:[#allocation2 + $0x80] sm:$0xee]
    %v2862 = vld [vmem:[#allocation2 + $0x88] sm:$0xee]
    %vm2881 = vcmask 1042432
    %vm2882 = vcmask 1046532
    %vm2883 = vmor %vm2881, %vm2882
    %v2884 = vrot.slane %v2857, 5
    %v2885 = vrot.slane %v2884, 4
    %v2886 = vrot.slane %v2111, 5
    %v2887 = vsel %vm2883, %v2885, %v2886
    %v2888 = vrot.slane %v2858, 5
    %v2889 = vrot.slane %v2888, 4
    %v2890 = vrot.slane %v2112, 5
    %v2891 = vsel %vm2883, %v2889, %v2890
    %v2892 = vrot.slane %v2859, 5
    %v2893 = vrot.slane %v2892, 4
    %v2894 = vrot.slane %v2113, 5
    %v2895 = vsel %vm2883, %v2893, %v2894
    %v2896 = vrot.slane %v2886, 4
    %v2897 = vrot.slane %v2114, 5
    %v2898 = vsel %vm2883, %v2896, %v2897
    %v2899 = vrot.slane %v2890, 4
    %v2900 = vrot.slane %v2115, 5
    %v2901 = vsel %vm2883, %v2899, %v2900
    %v2902 = vrot.slane %v2894, 4
    %v2903 = vrot.slane %v2116, 5
    %v2904 = vsel %vm2883, %v2902, %v2903
    %v2905 = vrot.slane %v2860, 5
    %v2906 = vrot.slane %v2905, 4
    %v2907 = vrot.slane %v2120, 5
    %v2908 = vsel %vm2883, %v2906, %v2907
    %v2909 = vrot.slane %v2861, 5
    %v2910 = vrot.slane %v2909, 4
    %v2911 = vrot.slane %v2121, 5
    %v2912 = vsel %vm2883, %v2910, %v2911
    %v2913 = vrot.slane %v2862, 5
    %v2914 = vrot.slane %v2913, 4
    %v2915 = vrot.slane %v2122, 5
    %v2916 = vsel %vm2883, %v2914, %v2915
    %v2917 = vrot.slane %v2907, 4
    %v2918 = vrot.slane %v2123, 5
    %v2919 = vsel %vm2883, %v2917, %v2918
    %v2920 = vrot.slane %v2911, 4
    %v2921 = vrot.slane %v2124, 5
    %v2922 = vsel %vm2883, %v2920, %v2921
    %v2923 = vrot.slane %v2915, 4
    %v2924 = vrot.slane %v2125, 5
    %v2925 = vsel %vm2883, %v2923, %v2924
    %s2926 = scalar_lea.vmem [#allocation6], 1536
    %v2927 = vld [vmem:[%s2926] sm:$0xf]
    %v2928 = vld [vmem:[%s2926 + $0x4] sm:$0xf]
    %v2929 = vld [vmem:[%s2926 + $0x8] sm:$0xf]
    %v2930 = vld [vmem:[%s2926 + $0xc] sm:$0xf]
    %v2931 = vld [vmem:[%s2926 + $0x10] sm:$0xf]
    %v2932 = vld [vmem:[%s2926 + $0x14] sm:$0xf]
    %v2933 = vld [vmem:[%s2926 + $0x18] sm:$0xf]
    %v2934 = vld [vmem:[%s2926 + $0x1c] sm:$0xf]
    %v2935 = vld [vmem:[%s2926 + $0x20] sm:$0xf]
    %v2936 = vld [vmem:[%s2926 + $0x24] sm:$0xf]
    %v2937 = vld [vmem:[%s2926 + $0x28] sm:$0xf]
    %v2938 = vld [vmem:[%s2926 + $0x2c] sm:$0xf]
    %v2939 = vld [vmem:[%s2926 + $0x30] sm:$0xf]
    %v2940 = vld [vmem:[%s2926 + $0x34] sm:$0xf]
    %v2941 = vld [vmem:[%s2926 + $0x38] sm:$0xf]
    %v2942 = vld [vmem:[%s2926 + $0x3c] sm:$0xf]
    %v2943 = vld [vmem:[%s2926 + $0x40] sm:$0xf]
    %v2944 = vld [vmem:[%s2926 + $0x44] sm:$0xf]
    %v2945 = vld [vmem:[%s2926 + $0x48] sm:$0xf]
    %v2946 = vld [vmem:[%s2926 + $0x4c] sm:$0xf]
    %v2947 = vld [vmem:[%s2926 + $0x50] sm:$0xf]
    %v2948 = vld [vmem:[%s2926 + $0x54] sm:$0xf]
    %v2949 = vld [vmem:[%s2926 + $0x58] sm:$0xf]
    %v2950 = vld [vmem:[%s2926 + $0x5c] sm:$0xf]
    %v2951 = vld [vmem:[%s2926 + $0x60] sm:$0xf]
    %v2952 = vld [vmem:[%s2926 + $0x64] sm:$0xf]
    %v2953 = vld [vmem:[%s2926 + $0x68] sm:$0xf]
    %v2954 = vld [vmem:[%s2926 + $0x6c] sm:$0xf]
    %v2955 = vld [vmem:[%s2926 + $0x70] sm:$0xf]
    %v2956 = vld [vmem:[%s2926 + $0x74] sm:$0xf]
    %v2957 = vld [vmem:[%s2926 + $0x78] sm:$0xf]
    %v2958 = vld [vmem:[%s2926 + $0x7c] sm:$0xf]
    %v2959 = vld [vmem:[%s2926 + $0x80] sm:$0xf]
    %v2960 = vld [vmem:[%s2926 + $0x84] sm:$0xf]
    %v2961 = vld [vmem:[%s2926 + $0x88] sm:$0xf]
    %v2962 = vld [vmem:[%s2926 + $0x8c] sm:$0xf]
    %v2963 = vld [vmem:[%s2926 + $0x90] sm:$0xf]
    %v2964 = vld [vmem:[%s2926 + $0x94] sm:$0xf]
    %v2965 = vld [vmem:[%s2926 + $0x98] sm:$0xf]
    %v2966 = vld [vmem:[%s2926 + $0x9c] sm:$0xf]
    %v2967 = vld [vmem:[%s2926 + $0xa0] sm:$0xf]
    %v2968 = vld [vmem:[%s2926 + $0xa4] sm:$0xf]
    %v2969 = vld [vmem:[%s2926 + $0xa8] sm:$0xf]
    %v2970 = vld [vmem:[%s2926 + $0xac] sm:$0xf]
    %v2971 = vld [vmem:[%s2926 + $0xb0] sm:$0xf]
    %v2972 = vld [vmem:[%s2926 + $0xb4] sm:$0xf]
    %v2973 = vld [vmem:[%s2926 + $0xb8] sm:$0xf]
    %v2974 = vld [vmem:[%s2926 + $0xbc] sm:$0xf]
    %v2975 = vld [vmem:[%s2926 + $0xc0] sm:$0xf]
    %v2976 = vld [vmem:[%s2926 + $0xc4] sm:$0xf]
    %v2977 = vld [vmem:[%s2926 + $0xc8] sm:$0xf]
    %v2978 = vld [vmem:[%s2926 + $0xcc] sm:$0xf]
    %v2979 = vld [vmem:[%s2926 + $0xd0] sm:$0xf]
    %v2980 = vld [vmem:[%s2926 + $0xd4] sm:$0xf]
    %v2981 = vld [vmem:[%s2926 + $0xd8] sm:$0xf]
    %v2982 = vld [vmem:[%s2926 + $0xdc] sm:$0xf]
    %v2983 = vld [vmem:[%s2926 + $0xe0] sm:$0xf]
    %v2984 = vld [vmem:[%s2926 + $0xe4] sm:$0xf]
    %v2985 = vld [vmem:[%s2926 + $0xe8] sm:$0xf]
    %v2986 = vld [vmem:[%s2926 + $0xec] sm:$0xf]
    %v2987 = vld [vmem:[%s2926 + $0xf0] sm:$0xf]
    %v2988 = vld [vmem:[%s2926 + $0xf4] sm:$0xf]
    %v2989 = vld [vmem:[%s2926 + $0xf8] sm:$0xf]
    %v2990 = vld [vmem:[%s2926 + $0xfc] sm:$0xf]
    %v2991 = vld [vmem:[%s2926 + $0x100] sm:$0xf]
    %v2992 = vld [vmem:[%s2926 + $0x104] sm:$0xf]
    %v2993 = vld [vmem:[%s2926 + $0x108] sm:$0xf]
    %v2994 = vld [vmem:[%s2926 + $0x10c] sm:$0xf]
    %v2995 = vld [vmem:[%s2926 + $0x110] sm:$0xf]
    %v2996 = vld [vmem:[%s2926 + $0x114] sm:$0xf]
    %v2997 = vld [vmem:[%s2926 + $0x118] sm:$0xf]
    %v2998 = vld [vmem:[%s2926 + $0x11c] sm:$0xf]
    %v2999 = vld [vmem:[%s2926 + $0x120] sm:$0xf]
    %v3000 = vld [vmem:[%s2926 + $0x124] sm:$0xf]
    %v3001 = vld [vmem:[%s2926 + $0x128] sm:$0xf]
    %v3002 = vld [vmem:[%s2926 + $0x12c] sm:$0xf]
    %v3003 = vld [vmem:[%s2926 + $0x130] sm:$0xf]
    %v3004 = vld [vmem:[%s2926 + $0x134] sm:$0xf]
    %v3005 = vld [vmem:[%s2926 + $0x138] sm:$0xf]
    %v3006 = vld [vmem:[%s2926 + $0x13c] sm:$0xf]
    %v3007 = vld [vmem:[%s2926 + $0x140] sm:$0xf]
    %v3008 = vld [vmem:[%s2926 + $0x144] sm:$0xf]
    %v3009 = vld [vmem:[%s2926 + $0x148] sm:$0xf]
    %v3010 = vld [vmem:[%s2926 + $0x14c] sm:$0xf]
    %v3011 = vld [vmem:[%s2926 + $0x150] sm:$0xf]
    %v3012 = vld [vmem:[%s2926 + $0x154] sm:$0xf]
    %v3013 = vld [vmem:[%s2926 + $0x158] sm:$0xf]
    %v3014 = vld [vmem:[%s2926 + $0x15c] sm:$0xf]
    %v3015 = vld [vmem:[%s2926 + $0x160] sm:$0xf]
    %v3016 = vld [vmem:[%s2926 + $0x164] sm:$0xf]
    %v3017 = vld [vmem:[%s2926 + $0x168] sm:$0xf]
    %v3018 = vld [vmem:[%s2926 + $0x16c] sm:$0xf]
    %v3019 = vld [vmem:[%s2926 + $0x170] sm:$0xf]
    %v3020 = vld [vmem:[%s2926 + $0x174] sm:$0xf]
    %v3021 = vld [vmem:[%s2926 + $0x178] sm:$0xf]
    %v3022 = vld [vmem:[%s2926 + $0x17c] sm:$0xf]
    %v3023 = vunpack.c.l.b16 %v2887
    %v3024 = vunpack.c.h.b16 %v2887
    %v3025 = vunpack.c.l.b16 %v2891
    %v3026 = vunpack.c.h.b16 %v2891
    %v3027 = vunpack.c.l.b16 %v2895
    %v3028 = vunpack.c.h.b16 %v2895
    %v3029 = vunpack.c.l.b16 %v2898
    %v3030 = vunpack.c.h.b16 %v2898
    %v3031 = vunpack.c.l.b16 %v2901
    %v3032 = vunpack.c.h.b16 %v2901
    %v3033 = vunpack.c.l.b16 %v2904
    %v3034 = vunpack.c.h.b16 %v2904
    %v3035 = vunpack.c.l.b16 %v2908
    %v3036 = vunpack.c.h.b16 %v2908
    %v3037 = vunpack.c.l.b16 %v2912
    %v3038 = vunpack.c.h.b16 %v2912
    %v3039 = vunpack.c.l.b16 %v2916
    %v3040 = vunpack.c.h.b16 %v2916
    %v3041 = vunpack.c.l.b16 %v2919
    %v3042 = vunpack.c.h.b16 %v2919
    %v3043 = vunpack.c.l.b16 %v2922
    %v3044 = vunpack.c.h.b16 %v2922
    %v3045 = vunpack.c.l.b16 %v2925
    %v3046 = vunpack.c.h.b16 %v2925
    %v3047 = vpack.c.b16 %v3029, %v3023
    %v3048 = vpack.c.b16 %v3030, %v3024
    %v3049 = vpack.c.b16 %v3031, %v3025
    %v3050 = vpack.c.b16 %v3032, %v3026
    %v3051 = vpack.c.b16 %v3033, %v3027
    %v3052 = vpack.c.b16 %v3034, %v3028
    %v3053 = vpack.c.b16 %v3041, %v3035
    %v3054 = vpack.c.b16 %v3042, %v3036
    %v3055 = vpack.c.b16 %v3043, %v3037
    %v3056 = vpack.c.b16 %v3044, %v3038
    %v3057 = vpack.c.b16 %v3045, %v3039
    %v3058 = vpack.c.b16 %v3046, %v3040
    %v3167 = vunpack.c.l.b16 %v2927
    %v3168 = vunpack.c.l.b16 %v2928
    %v3169 = vunpack.c.l.b16 %v2929
    %v3170 = vunpack.c.l.b16 %v2930
    %v3171 = vunpack.c.l.b16 %v2931
    %v3172 = vunpack.c.l.b16 %v2932
    %v3173 = vunpack.c.l.b16 %v2933
    %v3174 = vunpack.c.l.b16 %v2934
    %v3175 = vunpack.c.l.b16 %v2935
    %v3176 = vunpack.c.l.b16 %v2936
    %v3177 = vunpack.c.l.b16 %v2937
    %v3178 = vunpack.c.l.b16 %v2938
    %v3179 = vunpack.c.l.b16 %v2939
    %v3180 = vunpack.c.l.b16 %v2940
    %v3181 = vunpack.c.l.b16 %v2941
    %v3182 = vunpack.c.l.b16 %v2942
    %v3183 = vunpack.c.l.b16 %v2943
    %v3184 = vunpack.c.l.b16 %v2944
    %v3185 = vunpack.c.l.b16 %v2945
    %v3186 = vunpack.c.l.b16 %v2946
    %v3187 = vunpack.c.l.b16 %v2947
    %v3188 = vunpack.c.l.b16 %v2948
    %v3189 = vunpack.c.l.b16 %v2949
    %v3190 = vunpack.c.l.b16 %v2950
    %v3191 = vunpack.c.l.b16 %v2951
    %v3192 = vunpack.c.l.b16 %v2952
    %v3193 = vunpack.c.l.b16 %v2953
    %v3194 = vunpack.c.l.b16 %v2954
    %v3195 = vunpack.c.l.b16 %v2955
    %v3196 = vunpack.c.l.b16 %v2956
    %v3197 = vunpack.c.l.b16 %v2957
    %v3198 = vunpack.c.l.b16 %v2958
    %v3199 = vunpack.c.l.b16 %v2959
    %v3200 = vunpack.c.l.b16 %v2960
    %v3201 = vunpack.c.l.b16 %v2961
    %v3202 = vunpack.c.l.b16 %v2962
    %v3203 = vunpack.c.l.b16 %v2963
    %v3204 = vunpack.c.l.b16 %v2964
    %v3205 = vunpack.c.l.b16 %v2965
    %v3206 = vunpack.c.l.b16 %v2966
    %v3207 = vunpack.c.l.b16 %v2967
    %v3208 = vunpack.c.l.b16 %v2968
    %v3209 = vunpack.c.l.b16 %v2969
    %v3210 = vunpack.c.l.b16 %v2970
    %v3211 = vunpack.c.l.b16 %v2971
    %v3212 = vunpack.c.l.b16 %v2972
    %v3213 = vunpack.c.l.b16 %v2973
    %v3214 = vunpack.c.l.b16 %v2974
    %v3215 = vunpack.c.l.b16 %v2975
    %v3216 = vunpack.c.l.b16 %v2976
    %v3217 = vunpack.c.l.b16 %v2977
    %v3218 = vunpack.c.l.b16 %v2978
    %v3219 = vunpack.c.l.b16 %v2979
    %v3220 = vunpack.c.l.b16 %v2980
    %v3221 = vunpack.c.l.b16 %v2981
    %v3222 = vunpack.c.l.b16 %v2982
    %v3223 = vunpack.c.l.b16 %v2983
    %v3224 = vunpack.c.l.b16 %v2984
    %v3225 = vunpack.c.l.b16 %v2985
    %v3226 = vunpack.c.l.b16 %v2986
    %v3227 = vunpack.c.l.b16 %v2987
    %v3228 = vunpack.c.l.b16 %v2988
    %v3229 = vunpack.c.l.b16 %v2989
    %v3230 = vunpack.c.l.b16 %v2990
    %v3231 = vunpack.c.l.b16 %v2991
    %v3232 = vunpack.c.l.b16 %v2992
    %v3233 = vunpack.c.l.b16 %v2993
    %v3234 = vunpack.c.l.b16 %v2994
    %v3235 = vunpack.c.l.b16 %v2995
    %v3236 = vunpack.c.l.b16 %v2996
    %v3237 = vunpack.c.l.b16 %v2997
    %v3238 = vunpack.c.l.b16 %v2998
    %v3239 = vunpack.c.l.b16 %v2999
    %v3240 = vunpack.c.l.b16 %v3000
    %v3241 = vunpack.c.l.b16 %v3001
    %v3242 = vunpack.c.l.b16 %v3002
    %v3243 = vunpack.c.l.b16 %v3003
    %v3244 = vunpack.c.l.b16 %v3004
    %v3245 = vunpack.c.l.b16 %v3005
    %v3246 = vunpack.c.l.b16 %v3006
    %v3247 = vunpack.c.l.b16 %v3007
    %v3248 = vunpack.c.l.b16 %v3008
    %v3249 = vunpack.c.l.b16 %v3009
    %v3250 = vunpack.c.l.b16 %v3010
    %v3251 = vunpack.c.l.b16 %v3011
    %v3252 = vunpack.c.l.b16 %v3012
    %v3253 = vunpack.c.l.b16 %v3013
    %v3254 = vunpack.c.l.b16 %v3014
    %v3255 = vunpack.c.l.b16 %v3015
    %v3256 = vunpack.c.l.b16 %v3016
    %v3257 = vunpack.c.l.b16 %v3017
    %v3258 = vunpack.c.l.b16 %v3018
    %v3259 = vunpack.c.l.b16 %v3019
    %v3260 = vunpack.c.l.b16 %v3020
    %v3261 = vunpack.c.l.b16 %v3021
    %v3262 = vunpack.c.l.b16 %v3022
    %v3263 = vpack.c.b16 %v3168, %v3167
    %v3264 = vpack.c.b16 %v3170, %v3169
    %v3265 = vpack.c.b16 %v3172, %v3171
    %v3266 = vpack.c.b16 %v3174, %v3173
    %v3267 = vpack.c.b16 %v3176, %v3175
    %v3268 = vpack.c.b16 %v3178, %v3177
    %v3269 = vpack.c.b16 %v3180, %v3179
    %v3270 = vpack.c.b16 %v3182, %v3181
    %v3271 = vpack.c.b16 %v3184, %v3183
    %v3272 = vpack.c.b16 %v3186, %v3185
    %v3273 = vpack.c.b16 %v3188, %v3187
    %v3274 = vpack.c.b16 %v3190, %v3189
    %v3275 = vpack.c.b16 %v3192, %v3191
    %v3276 = vpack.c.b16 %v3194, %v3193
    %v3277 = vpack.c.b16 %v3196, %v3195
    %v3278 = vpack.c.b16 %v3198, %v3197
    %v3279 = vpack.c.b16 %v3200, %v3199
    %v3280 = vpack.c.b16 %v3202, %v3201
    %v3281 = vpack.c.b16 %v3204, %v3203
    %v3282 = vpack.c.b16 %v3206, %v3205
    %v3283 = vpack.c.b16 %v3208, %v3207
    %v3284 = vpack.c.b16 %v3210, %v3209
    %v3285 = vpack.c.b16 %v3212, %v3211
    %v3286 = vpack.c.b16 %v3214, %v3213
    %v3287 = vpack.c.b16 %v3216, %v3215
    %v3288 = vpack.c.b16 %v3218, %v3217
    %v3289 = vpack.c.b16 %v3220, %v3219
    %v3290 = vpack.c.b16 %v3222, %v3221
    %v3291 = vpack.c.b16 %v3224, %v3223
    %v3292 = vpack.c.b16 %v3226, %v3225
    %v3293 = vpack.c.b16 %v3228, %v3227
    %v3294 = vpack.c.b16 %v3230, %v3229
    %v3295 = vpack.c.b16 %v3232, %v3231
    %v3296 = vpack.c.b16 %v3234, %v3233
    %v3297 = vpack.c.b16 %v3236, %v3235
    %v3298 = vpack.c.b16 %v3238, %v3237
    %v3299 = vpack.c.b16 %v3240, %v3239
    %v3300 = vpack.c.b16 %v3242, %v3241
    %v3301 = vpack.c.b16 %v3244, %v3243
    %v3302 = vpack.c.b16 %v3246, %v3245
    %v3303 = vpack.c.b16 %v3248, %v3247
    %v3304 = vpack.c.b16 %v3250, %v3249
    %v3305 = vpack.c.b16 %v3252, %v3251
    %v3306 = vpack.c.b16 %v3254, %v3253
    %v3307 = vpack.c.b16 %v3256, %v3255
    %v3308 = vpack.c.b16 %v3258, %v3257
    %v3309 = vpack.c.b16 %v3260, %v3259
    %v3310 = vpack.c.b16 %v3262, %v3261
    %3359 = vmatprep.subr.bf16.mxu0 0
    %3360 = vmatpush1.bf16.msra.mxu0 %v3270
    %3361 = vmatprep.subr.bf16.mxu0 0
    %3362 = vmatpush1.bf16.msra.mxu0 %v3269
    %3363 = vmatprep.subr.bf16.mxu0 0
    %3364 = vmatpush1.bf16.msra.mxu0 %v3268
    %3365 = vmatprep.subr.bf16.mxu0 0
    %3366 = vmatpush1.bf16.msra.mxu0 %v3267
    %3367 = vmatprep.subr.bf16.mxu0 0
    %3368 = vmatpush1.bf16.msra.mxu0 %v3266
    %3369 = vmatprep.subr.bf16.mxu0 0
    %3370 = vmatpush1.bf16.msra.mxu0 %v3265
    %3371 = vmatprep.subr.bf16.mxu0 0
    %3372 = vmatpush1.bf16.msra.mxu0 %v3264
    %3373 = vmatprep.subr.bf16.mxu0 0
    %3374 = vmatpush1.bf16.msra.mxu0 %v3263
    %3375 = vmatprep.subr.bf16.mxu0 0
    %3376 = vmatpush2.bf16.msra.mxu0 %v3278
    %3377 = vmatprep.subr.bf16.mxu0 0
    %3378 = vmatpush2.bf16.msra.mxu0 %v3277
    %3379 = vmatprep.subr.bf16.mxu0 0
    %3380 = vmatpush2.bf16.msra.mxu0 %v3276
    %3381 = vmatprep.subr.bf16.mxu0 0
    %3382 = vmatpush2.bf16.msra.mxu0 %v3275
    %3383 = vmatprep.subr.bf16.mxu0 0
    %3384 = vmatpush2.bf16.msra.mxu0 %v3274
    %3385 = vmatprep.subr.bf16.mxu0 0
    %3386 = vmatpush2.bf16.msra.mxu0 %v3273
    %3387 = vmatprep.subr.bf16.mxu0 0
    %3388 = vmatpush2.bf16.msra.mxu0 %v3272
    %3389 = vmatprep.subr.bf16.mxu0 0
    %3390 = vmatpush2.bf16.msra.mxu0 %v3271
    %3391 = vmatprep.mubr.bf16.mxu0 %v3048
    %3392 = vmatmul.mubr.bf16.gmra.mxu0 %v3047
    %v3393 = vpop.f32.mrf.mxu0
    %v3394 = vadd.f32 0.0, %v3393
    %v3395 = vpop.f32.mrf.mxu0
    %v3396 = vpop.f32.mrf.mxu0
    %v3397 = vadd.f32 0.0, %v3396
    %v3398 = vpop.f32.mrf.mxu0
    %3399 = vmatprep.mubr.bf16.mxu0 %v3054
    %3400 = vmatmul.mubr.bf16.gmra.mxu0 %v3053
    %v3401 = vpop.f32.mrf.mxu0
    %v3402 = vadd.f32 0.0, %v3401
    %v3403 = vpop.f32.mrf.mxu0
    %v3404 = vpop.f32.mrf.mxu0
    %v3405 = vadd.f32 0.0, %v3404
    %v3406 = vpop.f32.mrf.mxu0
    %3407 = vdwg.mxu0
    %3408 = vmatprep.subr.bf16.mxu0 0
    %3409 = vmatpush1.bf16.msra.mxu0 %v3286
    %3410 = vmatprep.subr.bf16.mxu0 0
    %3411 = vmatpush1.bf16.msra.mxu0 %v3285
    %3412 = vmatprep.subr.bf16.mxu0 0
    %3413 = vmatpush1.bf16.msra.mxu0 %v3284
    %3414 = vmatprep.subr.bf16.mxu0 0
    %3415 = vmatpush1.bf16.msra.mxu0 %v3283
    %3416 = vmatprep.subr.bf16.mxu0 0
    %3417 = vmatpush1.bf16.msra.mxu0 %v3282
    %3418 = vmatprep.subr.bf16.mxu0 0
    %3419 = vmatpush1.bf16.msra.mxu0 %v3281
    %3420 = vmatprep.subr.bf16.mxu0 0
    %3421 = vmatpush1.bf16.msra.mxu0 %v3280
    %3422 = vmatprep.subr.bf16.mxu0 0
    %3423 = vmatpush1.bf16.msra.mxu0 %v3279
    %3424 = vmatprep.subr.bf16.mxu0 0
    %3425 = vmatpush2.bf16.msra.mxu0 %v3294
    %3426 = vmatprep.subr.bf16.mxu0 0
    %3427 = vmatpush2.bf16.msra.mxu0 %v3293
    %3428 = vmatprep.subr.bf16.mxu0 0
    %3429 = vmatpush2.bf16.msra.mxu0 %v3292
    %3430 = vmatprep.subr.bf16.mxu0 0
    %3431 = vmatpush2.bf16.msra.mxu0 %v3291
    %3432 = vmatprep.subr.bf16.mxu0 0
    %3433 = vmatpush2.bf16.msra.mxu0 %v3290
    %3434 = vmatprep.subr.bf16.mxu0 0
    %3435 = vmatpush2.bf16.msra.mxu0 %v3289
    %3436 = vmatprep.subr.bf16.mxu0 0
    %3437 = vmatpush2.bf16.msra.mxu0 %v3288
    %3438 = vmatprep.subr.bf16.mxu0 0
    %3439 = vmatpush2.bf16.msra.mxu0 %v3287
    %3440 = vmatprep.mubr.bf16.mxu0 %v3050
    %3441 = vmatmul.mubr.bf16.gmra.mxu0 %v3049
    %v3442 = vpop.f32.mrf.mxu0
    %v3443 = vadd.f32 %v3394, %v3442
    %v3444 = vpop.f32.mrf.mxu0
    %v3445 = vpop.f32.mrf.mxu0
    %v3446 = vadd.f32 %v3397, %v3445
    %v3447 = vpop.f32.mrf.mxu0
    %3448 = vmatprep.mubr.bf16.mxu0 %v3056
    %3449 = vmatmul.mubr.bf16.gmra.mxu0 %v3055
    %v3450 = vpop.f32.mrf.mxu0
    %v3451 = vadd.f32 %v3402, %v3450
    %v3452 = vpop.f32.mrf.mxu0
    %v3453 = vpop.f32.mrf.mxu0
    %v3454 = vadd.f32 %v3405, %v3453
    %v3455 = vpop.f32.mrf.mxu0
    %3456 = vdwg.mxu0
    %3457 = vmatprep.subr.bf16.mxu0 0
    %3458 = vmatpush1.bf16.msra.mxu0 %v3302
    %3459 = vmatprep.subr.bf16.mxu0 0
    %3460 = vmatpush1.bf16.msra.mxu0 %v3301
    %3461 = vmatprep.subr.bf16.mxu0 0
    %3462 = vmatpush1.bf16.msra.mxu0 %v3300
    %3463 = vmatprep.subr.bf16.mxu0 0
    %3464 = vmatpush1.bf16.msra.mxu0 %v3299
    %3465 = vmatprep.subr.bf16.mxu0 0
    %3466 = vmatpush1.bf16.msra.mxu0 %v3298
    %3467 = vmatprep.subr.bf16.mxu0 0
    %3468 = vmatpush1.bf16.msra.mxu0 %v3297
    %3469 = vmatprep.subr.bf16.mxu0 0
    %3470 = vmatpush1.bf16.msra.mxu0 %v3296
    %3471 = vmatprep.subr.bf16.mxu0 0
    %3472 = vmatpush1.bf16.msra.mxu0 %v3295
    %3473 = vmatprep.subr.bf16.mxu0 0
    %3474 = vmatpush2.bf16.msra.mxu0 %v3310
    %3475 = vmatprep.subr.bf16.mxu0 0
    %3476 = vmatpush2.bf16.msra.mxu0 %v3309
    %3477 = vmatprep.subr.bf16.mxu0 0
    %3478 = vmatpush2.bf16.msra.mxu0 %v3308
    %3479 = vmatprep.subr.bf16.mxu0 0
    %3480 = vmatpush2.bf16.msra.mxu0 %v3307
    %3481 = vmatprep.subr.bf16.mxu0 0
    %3482 = vmatpush2.bf16.msra.mxu0 %v3306
    %3483 = vmatprep.subr.bf16.mxu0 0
    %3484 = vmatpush2.bf16.msra.mxu0 %v3305
    %3485 = vmatprep.subr.bf16.mxu0 0
    %3486 = vmatpush2.bf16.msra.mxu0 %v3304
    %3487 = vmatprep.subr.bf16.mxu0 0
    %3488 = vmatpush2.bf16.msra.mxu0 %v3303
    %3489 = vmatprep.mubr.bf16.mxu0 %v3052
    %3490 = vmatmul.mubr.bf16.gmra.mxu0 %v3051
    %v3491 = vpop.f32.mrf.mxu0
    %v3492 = vadd.f32 %v3443, %v3491
    %v3493 = vpop.f32.mrf.mxu0
    %v3494 = vpop.f32.mrf.mxu0
    %v3495 = vadd.f32 %v3446, %v3494
    %v3496 = vpop.f32.mrf.mxu0
    %3497 = vmatprep.mubr.bf16.mxu0 %v3058
    %3498 = vmatmul.mubr.bf16.gmra.mxu0 %v3057
    %v3499 = vpop.f32.mrf.mxu0
    %v3500 = vadd.f32 %v3451, %v3499
    %v3501 = vpop.f32.mrf.mxu0
    %v3502 = vpop.f32.mrf.mxu0
    %v3503 = vadd.f32 %v3454, %v3502
    %v3504 = vpop.f32.mrf.mxu0
    %3505 = vdwg.mxu0
    %v3506 = vadd.f32 %v2853, %v3492
    %v3507 = vadd.f32 %v2854, %v3495
    %v3508 = vadd.f32 %v2855, %v3500
    %v3509 = vadd.f32 %v2856, %v3503
    %v3510 = vld [vmem:[%s2] sm:$0x1]
    %v3512 = vlaneseq
    %v3513 = vshrl.u32 %v3512, 7
    %v3514 = vsub.s32 0, %v3513
    %v3515 = vrot.slane %v3510, %v3514
    %v3517 = vadd.f32 %v3506, %v3515
    %v3518 = vadd.f32 %v3507, %v3515
    %v3519 = vadd.f32 %v3508, %v3515
    %v3520 = vadd.f32 %v3509, %v3515
    %v3521 = vmax.f32 %v3517, 0.0
    %v3522 = vmax.f32 %v3518, 0.0
    %v3523 = vmax.f32 %v3519, 0.0
    %v3524 = vmax.f32 %v3520, 0.0
    %3525 = vst [vmem:[#allocation3] sm:$0xff] %v3521
    %3526 = vst [vmem:[#allocation3 + $0x8] sm:$0xff] %v3522
    %3527 = vst [vmem:[#allocation3 + $0x10] sm:$0xff] %v3523
    %3528 = vst [vmem:[#allocation3 + $0x18] sm:$0xff] %v3524
    %v3529 = vld [vmem:[#allocation3] ss:$2 sm:$0xff]
    %s3530 = scalar_lea.vmem [#allocation3], 16
    %v3531 = vld [vmem:[%s3530] ss:$2 sm:$0xff]
    %s3532 = scalar_lea.vmem [#allocation3], 1
    %v3533 = vld [vmem:[%s3532] ss:$2 sm:$0xff]
    %s3534 = scalar_lea.vmem [#allocation3], 17
    %v3535 = vld [vmem:[%s3534] ss:$2 sm:$0xff]
    %v3536 = vmax.f32 %v3529, %v3533
    %v3537 = vmax.f32 %v3531, %v3535
    %v3538 = vpack.c.bf16 %v3536, %v3536
    %v3539 = vpack.c.bf16 %v3537, %v3537
    %3540 = vst [vmem:[#allocation4 + $0x4] sm:$0xf] %v3538
    %3541 = vst [vmem:[#allocation4 + $0x10] sm:$0xf] %v3539
    %v3542 = vld [vmem:[#allocation4] sm:$0x8]
    %v3543 = vld [vmem:[#allocation4 + $0x4] sm:$0x7]
    %v3544 = vld [vmem:[#allocation4 + $0xc] sm:$0x8]
    %v3545 = vld [vmem:[#allocation4 + $0x10] sm:$0x7]
    %v3550 = vrot.slane %v3542, 7
    %v3551 = vrot.slane %v3550, 4
    %v3552 = vrot.slane %v3543, 7
    %v3553 = vsel %vm175, %v3551, %v3552
    %v3554 = vrot.slane %v3544, 7
    %v3555 = vrot.slane %v3554, 4
    %v3556 = vrot.slane %v3545, 7
    %v3557 = vsel %vm175, %v3555, %v3556
    %v3558 = vld [vmem:[%s3] sm:$0xf]
    %v3559 = vld [vmem:[%s3 + $0x4] sm:$0xf]
    %v3560 = vld [vmem:[%s3 + $0x8] sm:$0xf]
    %v3561 = vld [vmem:[%s3 + $0xc] sm:$0xf]
    %v3562 = vld [vmem:[%s3 + $0x10] sm:$0xf]
    %v3563 = vld [vmem:[%s3 + $0x14] sm:$0xf]
    %v3564 = vld [vmem:[%s3 + $0x18] sm:$0xf]
    %v3565 = vld [vmem:[%s3 + $0x1c] sm:$0xf]
    %v3566 = vld [vmem:[%s3 + $0x20] sm:$0xf]
    %v3567 = vld [vmem:[%s3 + $0x24] sm:$0xf]
    %v3568 = vld [vmem:[%s3 + $0x28] sm:$0xf]
    %v3569 = vld [vmem:[%s3 + $0x2c] sm:$0xf]
    %v3570 = vld [vmem:[%s3 + $0x30] sm:$0xf]
    %v3571 = vld [vmem:[%s3 + $0x34] sm:$0xf]
    %v3572 = vld [vmem:[%s3 + $0x38] sm:$0xf]
    %v3573 = vld [vmem:[%s3 + $0x3c] sm:$0xf]
    %v3574 = vld [vmem:[#allocation4 + $0x4] sm:$0xf]
    %v3575 = vld [vmem:[#allocation4 + $0x10] sm:$0xf]
    %v3577 = vshrl.u32 %v3542, 16
    %v3579 = vrot.slane %v3577, 7
    %v3580 = vrot.slane %v3579, 4
    %v3582 = vshrl.u32 %v3574, 16
    %v3584 = vrot.slane %v3582, 7
    %v3585 = vshll.u32 %v3574, 16
    %v3587 = vor.u32 %v3584, %v3585
    %v3588 = vsel %vm322, %v3580, %v3587
    %v3590 = vshrl.u32 %v3544, 16
    %v3592 = vrot.slane %v3590, 7
    %v3593 = vrot.slane %v3592, 4
    %v3595 = vshrl.u32 %v3575, 16
    %v3597 = vrot.slane %v3595, 7
    %v3598 = vshll.u32 %v3575, 16
    %v3600 = vor.u32 %v3597, %v3598
    %v3601 = vsel %vm322, %v3593, %v3600
    %s3602 = scalar_lea.vmem %s3, 64
    %v3603 = vld [vmem:[%s3602] sm:$0xf]
    %v3604 = vld [vmem:[%s3602 + $0x4] sm:$0xf]
    %v3605 = vld [vmem:[%s3602 + $0x8] sm:$0xf]
    %v3606 = vld [vmem:[%s3602 + $0xc] sm:$0xf]
    %v3607 = vld [vmem:[%s3602 + $0x10] sm:$0xf]
    %v3608 = vld [vmem:[%s3602 + $0x14] sm:$0xf]
    %v3609 = vld [vmem:[%s3602 + $0x18] sm:$0xf]
    %v3610 = vld [vmem:[%s3602 + $0x1c] sm:$0xf]
    %v3611 = vld [vmem:[%s3602 + $0x20] sm:$0xf]
    %v3612 = vld [vmem:[%s3602 + $0x24] sm:$0xf]
    %v3613 = vld [vmem:[%s3602 + $0x28] sm:$0xf]
    %v3614 = vld [vmem:[%s3602 + $0x2c] sm:$0xf]
    %v3615 = vld [vmem:[%s3602 + $0x30] sm:$0xf]
    %v3616 = vld [vmem:[%s3602 + $0x34] sm:$0xf]
    %v3617 = vld [vmem:[%s3602 + $0x38] sm:$0xf]
    %v3618 = vld [vmem:[%s3602 + $0x3c] sm:$0xf]
    %v3619 = vunpack.c.l.b16 %v3588
    %v3620 = vunpack.c.l.b16 %v3601
    %v3621 = vpack.c.b16 %v3620, %v3619
    %v3639 = vunpack.c.l.b16 %v3603
    %v3640 = vunpack.c.l.b16 %v3604
    %v3641 = vunpack.c.l.b16 %v3605
    %v3642 = vunpack.c.l.b16 %v3606
    %v3643 = vunpack.c.l.b16 %v3607
    %v3644 = vunpack.c.l.b16 %v3608
    %v3645 = vunpack.c.l.b16 %v3609
    %v3646 = vunpack.c.l.b16 %v3610
    %v3647 = vunpack.c.l.b16 %v3611
    %v3648 = vunpack.c.l.b16 %v3612
    %v3649 = vunpack.c.l.b16 %v3613
    %v3650 = vunpack.c.l.b16 %v3614
    %v3651 = vunpack.c.l.b16 %v3615
    %v3652 = vunpack.c.l.b16 %v3616
    %v3653 = vunpack.c.l.b16 %v3617
    %v3654 = vunpack.c.l.b16 %v3618
    %v3655 = vpack.c.b16 %v3640, %v3639
    %v3656 = vpack.c.b16 %v3642, %v3641
    %v3657 = vpack.c.b16 %v3644, %v3643
    %v3658 = vpack.c.b16 %v3646, %v3645
    %v3659 = vpack.c.b16 %v3648, %v3647
    %v3660 = vpack.c.b16 %v3650, %v3649
    %v3661 = vpack.c.b16 %v3652, %v3651
    %v3662 = vpack.c.b16 %v3654, %v3653
    %3671 = vmatprep.subr.bf16.mxu0 0
    %3672 = vmatpush1.bf16.msra.mxu0 %v3662
    %3673 = vmatprep.subr.bf16.mxu0 0
    %3674 = vmatpush1.bf16.msra.mxu0 %v3661
    %3675 = vmatprep.subr.bf16.mxu0 0
    %3676 = vmatpush1.bf16.msra.mxu0 %v3660
    %3677 = vmatprep.subr.bf16.mxu0 0
    %3678 = vmatpush1.bf16.msra.mxu0 %v3659
    %3679 = vmatprep.subr.bf16.mxu0 0
    %3680 = vmatpush1.bf16.msra.mxu0 %v3658
    %3681 = vmatprep.subr.bf16.mxu0 0
    %3682 = vmatpush1.bf16.msra.mxu0 %v3657
    %3683 = vmatprep.subr.bf16.mxu0 0
    %3684 = vmatpush1.bf16.msra.mxu0 %v3656
    %3685 = vmatprep.subr.bf16.mxu0 0
    %3686 = vmatpush1.bf16.msra.mxu0 %v3655
    %3687 = vmatprep.subr.bf16.mxu0 0
    %3688 = vmatpush2.bf16.msra.mxu0 0
    %3689 = vmatprep.subr.bf16.mxu0 0
    %3690 = vmatpush2.bf16.msra.mxu0 0
    %3691 = vmatprep.subr.bf16.mxu0 0
    %3692 = vmatpush2.bf16.msra.mxu0 0
    %3693 = vmatprep.subr.bf16.mxu0 0
    %3694 = vmatpush2.bf16.msra.mxu0 0
    %3695 = vmatprep.subr.bf16.mxu0 0
    %3696 = vmatpush2.bf16.msra.mxu0 0
    %3697 = vmatprep.subr.bf16.mxu0 0
    %3698 = vmatpush2.bf16.msra.mxu0 0
    %3699 = vmatprep.subr.bf16.mxu0 0
    %3700 = vmatpush2.bf16.msra.mxu0 0
    %3701 = vmatprep.subr.bf16.mxu0 0
    %3702 = vmatpush2.bf16.msra.mxu0 0
    %3703 = vmatprep.mubr.bf16.mxu0 0
    %3704 = vmatmul.mubr.bf16.gmra.mxu0 %v3621
    %v3705 = vpop.f32.mrf.mxu0
    %v3706 = vadd.f32 0.0, %v3705
    %v3707 = vpop.f32.mrf.mxu0
    %v3708 = vpop.f32.mrf.mxu0
    %v3709 = vadd.f32 0.0, %v3708
    %v3710 = vpop.f32.mrf.mxu0
    %3711 = vdwg.mxu0
    %v3712 = vunpack.c.l.b16 %v3553
    %v3713 = vunpack.c.l.b16 %v3557
    %v3714 = vpack.c.b16 %v3713, %v3712
    %v3732 = vunpack.c.l.b16 %v3558
    %v3733 = vunpack.c.l.b16 %v3559
    %v3734 = vunpack.c.l.b16 %v3560
    %v3735 = vunpack.c.l.b16 %v3561
    %v3736 = vunpack.c.l.b16 %v3562
    %v3737 = vunpack.c.l.b16 %v3563
    %v3738 = vunpack.c.l.b16 %v3564
    %v3739 = vunpack.c.l.b16 %v3565
    %v3740 = vunpack.c.l.b16 %v3566
    %v3741 = vunpack.c.l.b16 %v3567
    %v3742 = vunpack.c.l.b16 %v3568
    %v3743 = vunpack.c.l.b16 %v3569
    %v3744 = vunpack.c.l.b16 %v3570
    %v3745 = vunpack.c.l.b16 %v3571
    %v3746 = vunpack.c.l.b16 %v3572
    %v3747 = vunpack.c.l.b16 %v3573
    %v3748 = vpack.c.b16 %v3733, %v3732
    %v3749 = vpack.c.b16 %v3735, %v3734
    %v3750 = vpack.c.b16 %v3737, %v3736
    %v3751 = vpack.c.b16 %v3739, %v3738
    %v3752 = vpack.c.b16 %v3741, %v3740
    %v3753 = vpack.c.b16 %v3743, %v3742
    %v3754 = vpack.c.b16 %v3745, %v3744
    %v3755 = vpack.c.b16 %v3747, %v3746
    %3764 = vmatprep.subr.bf16.mxu0 0
    %3765 = vmatpush1.bf16.msra.mxu0 %v3755
    %3766 = vmatprep.subr.bf16.mxu0 0
    %3767 = vmatpush1.bf16.msra.mxu0 %v3754
    %3768 = vmatprep.subr.bf16.mxu0 0
    %3769 = vmatpush1.bf16.msra.mxu0 %v3753
    %3770 = vmatprep.subr.bf16.mxu0 0
    %3771 = vmatpush1.bf16.msra.mxu0 %v3752
    %3772 = vmatprep.subr.bf16.mxu0 0
    %3773 = vmatpush1.bf16.msra.mxu0 %v3751
    %3774 = vmatprep.subr.bf16.mxu0 0
    %3775 = vmatpush1.bf16.msra.mxu0 %v3750
    %3776 = vmatprep.subr.bf16.mxu0 0
    %3777 = vmatpush1.bf16.msra.mxu0 %v3749
    %3778 = vmatprep.subr.bf16.mxu0 0
    %3779 = vmatpush1.bf16.msra.mxu0 %v3748
    %3780 = vmatprep.subr.bf16.mxu0 0
    %3781 = vmatpush2.bf16.msra.mxu0 0
    %3782 = vmatprep.subr.bf16.mxu0 0
    %3783 = vmatpush2.bf16.msra.mxu0 0
    %3784 = vmatprep.subr.bf16.mxu0 0
    %3785 = vmatpush2.bf16.msra.mxu0 0
    %3786 = vmatprep.subr.bf16.mxu0 0
    %3787 = vmatpush2.bf16.msra.mxu0 0
    %3788 = vmatprep.subr.bf16.mxu0 0
    %3789 = vmatpush2.bf16.msra.mxu0 0
    %3790 = vmatprep.subr.bf16.mxu0 0
    %3791 = vmatpush2.bf16.msra.mxu0 0
    %3792 = vmatprep.subr.bf16.mxu0 0
    %3793 = vmatpush2.bf16.msra.mxu0 0
    %3794 = vmatprep.subr.bf16.mxu0 0
    %3795 = vmatpush2.bf16.msra.mxu0 0
    %3796 = vmatprep.mubr.bf16.mxu0 0
    %3797 = vmatmul.mubr.bf16.gmra.mxu0 %v3714
    %v3798 = vpop.f32.mrf.mxu0
    %v3799 = vadd.f32 %v3706, %v3798
    %v3800 = vpop.f32.mrf.mxu0
    %v3801 = vpop.f32.mrf.mxu0
    %v3802 = vadd.f32 %v3709, %v3801
    %v3803 = vpop.f32.mrf.mxu0
    %3804 = vdwg.mxu0
    %s3805 = scalar_lea.vmem %s3, 128
    %v3806 = vld [vmem:[%s3805] sm:$0xf]
    %v3807 = vld [vmem:[%s3805 + $0x4] sm:$0xf]
    %v3808 = vld [vmem:[%s3805 + $0x8] sm:$0xf]
    %v3809 = vld [vmem:[%s3805 + $0xc] sm:$0xf]
    %v3810 = vld [vmem:[%s3805 + $0x10] sm:$0xf]
    %v3811 = vld [vmem:[%s3805 + $0x14] sm:$0xf]
    %v3812 = vld [vmem:[%s3805 + $0x18] sm:$0xf]
    %v3813 = vld [vmem:[%s3805 + $0x1c] sm:$0xf]
    %v3814 = vld [vmem:[%s3805 + $0x20] sm:$0xf]
    %v3815 = vld [vmem:[%s3805 + $0x24] sm:$0xf]
    %v3816 = vld [vmem:[%s3805 + $0x28] sm:$0xf]
    %v3817 = vld [vmem:[%s3805 + $0x2c] sm:$0xf]
    %v3818 = vld [vmem:[%s3805 + $0x30] sm:$0xf]
    %v3819 = vld [vmem:[%s3805 + $0x34] sm:$0xf]
    %v3820 = vld [vmem:[%s3805 + $0x38] sm:$0xf]
    %v3821 = vld [vmem:[%s3805 + $0x3c] sm:$0xf]
    %v3824 = vunpack.c.l.b16 %v3574
    %v3825 = vunpack.c.l.b16 %v3575
    %v3826 = vpack.c.b16 %v3825, %v3824
    %v3844 = vunpack.c.l.b16 %v3806
    %v3845 = vunpack.c.l.b16 %v3807
    %v3846 = vunpack.c.l.b16 %v3808
    %v3847 = vunpack.c.l.b16 %v3809
    %v3848 = vunpack.c.l.b16 %v3810
    %v3849 = vunpack.c.l.b16 %v3811
    %v3850 = vunpack.c.l.b16 %v3812
    %v3851 = vunpack.c.l.b16 %v3813
    %v3852 = vunpack.c.l.b16 %v3814
    %v3853 = vunpack.c.l.b16 %v3815
    %v3854 = vunpack.c.l.b16 %v3816
    %v3855 = vunpack.c.l.b16 %v3817
    %v3856 = vunpack.c.l.b16 %v3818
    %v3857 = vunpack.c.l.b16 %v3819
    %v3858 = vunpack.c.l.b16 %v3820
    %v3859 = vunpack.c.l.b16 %v3821
    %v3860 = vpack.c.b16 %v3845, %v3844
    %v3861 = vpack.c.b16 %v3847, %v3846
    %v3862 = vpack.c.b16 %v3849, %v3848
    %v3863 = vpack.c.b16 %v3851, %v3850
    %v3864 = vpack.c.b16 %v3853, %v3852
    %v3865 = vpack.c.b16 %v3855, %v3854
    %v3866 = vpack.c.b16 %v3857, %v3856
    %v3867 = vpack.c.b16 %v3859, %v3858
    %3876 = vmatprep.subr.bf16.mxu0 0
    %3877 = vmatpush1.bf16.msra.mxu0 %v3867
    %3878 = vmatprep.subr.bf16.mxu0 0
    %3879 = vmatpush1.bf16.msra.mxu0 %v3866
    %3880 = vmatprep.subr.bf16.mxu0 0
    %3881 = vmatpush1.bf16.msra.mxu0 %v3865
    %3882 = vmatprep.subr.bf16.mxu0 0
    %3883 = vmatpush1.bf16.msra.mxu0 %v3864
    %3884 = vmatprep.subr.bf16.mxu0 0
    %3885 = vmatpush1.bf16.msra.mxu0 %v3863
    %3886 = vmatprep.subr.bf16.mxu0 0
    %3887 = vmatpush1.bf16.msra.mxu0 %v3862
    %3888 = vmatprep.subr.bf16.mxu0 0
    %3889 = vmatpush1.bf16.msra.mxu0 %v3861
    %3890 = vmatprep.subr.bf16.mxu0 0
    %3891 = vmatpush1.bf16.msra.mxu0 %v3860
    %3892 = vmatprep.subr.bf16.mxu0 0
    %3893 = vmatpush2.bf16.msra.mxu0 0
    %3894 = vmatprep.subr.bf16.mxu0 0
    %3895 = vmatpush2.bf16.msra.mxu0 0
    %3896 = vmatprep.subr.bf16.mxu0 0
    %3897 = vmatpush2.bf16.msra.mxu0 0
    %3898 = vmatprep.subr.bf16.mxu0 0
    %3899 = vmatpush2.bf16.msra.mxu0 0
    %3900 = vmatprep.subr.bf16.mxu0 0
    %3901 = vmatpush2.bf16.msra.mxu0 0
    %3902 = vmatprep.subr.bf16.mxu0 0
    %3903 = vmatpush2.bf16.msra.mxu0 0
    %3904 = vmatprep.subr.bf16.mxu0 0
    %3905 = vmatpush2.bf16.msra.mxu0 0
    %3906 = vmatprep.subr.bf16.mxu0 0
    %3907 = vmatpush2.bf16.msra.mxu0 0
    %3908 = vmatprep.mubr.bf16.mxu0 0
    %3909 = vmatmul.mubr.bf16.gmra.mxu0 %v3826
    %v3910 = vpop.f32.mrf.mxu0
    %v3911 = vadd.f32 0.0, %v3910
    %v3912 = vpop.f32.mrf.mxu0
    %v3913 = vpop.f32.mrf.mxu0
    %v3914 = vadd.f32 0.0, %v3913
    %v3915 = vpop.f32.mrf.mxu0
    %3916 = vdwg.mxu0
    %v3917 = vadd.f32 %v3799, %v3911
    %v3918 = vadd.f32 %v3802, %v3914
    %v3919 = vld [vmem:[#allocation4 + $0x4] sm:$0xf]
    %v3920 = vld [vmem:[#allocation4 + $0x8] sm:$0x1]
    %v3921 = vld [vmem:[#allocation4 + $0x10] sm:$0xf]
    %v3922 = vld [vmem:[#allocation4 + $0x14] sm:$0x1]
    %v3924 = vshrl.u32 %v3919, 16
    %v3926 = vrot.slane %v3924, 4
    %v3927 = vshll.u32 %v3919, 16
    %v3929 = vrot.slane %v3927, 5
    %v3930 = vor.u32 %v3926, %v3929
    %v3931 = vrot.slane %v3930, 4
    %v3933 = vshll.u32 %v3920, 16
    %v3935 = vrot.slane %v3933, 5
    %v3936 = vsel %vm2128, %v3931, %v3935
    %v3938 = vshrl.u32 %v3921, 16
    %v3940 = vrot.slane %v3938, 4
    %v3941 = vshll.u32 %v3921, 16
    %v3943 = vrot.slane %v3941, 5
    %v3944 = vor.u32 %v3940, %v3943
    %v3945 = vrot.slane %v3944, 4
    %v3947 = vshll.u32 %v3922, 16
    %v3949 = vrot.slane %v3947, 5
    %v3950 = vsel %vm2128, %v3945, %v3949
    %s3951 = scalar_lea.vmem %s3, 192
    %v3952 = vld [vmem:[%s3951] sm:$0xf]
    %v3953 = vld [vmem:[%s3951 + $0x4] sm:$0xf]
    %v3954 = vld [vmem:[%s3951 + $0x8] sm:$0xf]
    %v3955 = vld [vmem:[%s3951 + $0xc] sm:$0xf]
    %v3956 = vld [vmem:[%s3951 + $0x10] sm:$0xf]
    %v3957 = vld [vmem:[%s3951 + $0x14] sm:$0xf]
    %v3958 = vld [vmem:[%s3951 + $0x18] sm:$0xf]
    %v3959 = vld [vmem:[%s3951 + $0x1c] sm:$0xf]
    %v3960 = vld [vmem:[%s3951 + $0x20] sm:$0xf]
    %v3961 = vld [vmem:[%s3951 + $0x24] sm:$0xf]
    %v3962 = vld [vmem:[%s3951 + $0x28] sm:$0xf]
    %v3963 = vld [vmem:[%s3951 + $0x2c] sm:$0xf]
    %v3964 = vld [vmem:[%s3951 + $0x30] sm:$0xf]
    %v3965 = vld [vmem:[%s3951 + $0x34] sm:$0xf]
    %v3966 = vld [vmem:[%s3951 + $0x38] sm:$0xf]
    %v3967 = vld [vmem:[%s3951 + $0x3c] sm:$0xf]
    %v3968 = vunpack.c.l.b16 %v3936
    %v3969 = vunpack.c.l.b16 %v3950
    %v3970 = vpack.c.b16 %v3969, %v3968
    %v3988 = vunpack.c.l.b16 %v3952
    %v3989 = vunpack.c.l.b16 %v3953
    %v3990 = vunpack.c.l.b16 %v3954
    %v3991 = vunpack.c.l.b16 %v3955
    %v3992 = vunpack.c.l.b16 %v3956
    %v3993 = vunpack.c.l.b16 %v3957
    %v3994 = vunpack.c.l.b16 %v3958
    %v3995 = vunpack.c.l.b16 %v3959
    %v3996 = vunpack.c.l.b16 %v3960
    %v3997 = vunpack.c.l.b16 %v3961
    %v3998 = vunpack.c.l.b16 %v3962
    %v3999 = vunpack.c.l.b16 %v3963
    %v4000 = vunpack.c.l.b16 %v3964
    %v4001 = vunpack.c.l.b16 %v3965
    %v4002 = vunpack.c.l.b16 %v3966
    %v4003 = vunpack.c.l.b16 %v3967
    %v4004 = vpack.c.b16 %v3989, %v3988
    %v4005 = vpack.c.b16 %v3991, %v3990
    %v4006 = vpack.c.b16 %v3993, %v3992
    %v4007 = vpack.c.b16 %v3995, %v3994
    %v4008 = vpack.c.b16 %v3997, %v3996
    %v4009 = vpack.c.b16 %v3999, %v3998
    %v4010 = vpack.c.b16 %v4001, %v4000
    %v4011 = vpack.c.b16 %v4003, %v4002
    %4020 = vmatprep.subr.bf16.mxu0 0
    %4021 = vmatpush1.bf16.msra.mxu0 %v4011
    %4022 = vmatprep.subr.bf16.mxu0 0
    %4023 = vmatpush1.bf16.msra.mxu0 %v4010
    %4024 = vmatprep.subr.bf16.mxu0 0
    %4025 = vmatpush1.bf16.msra.mxu0 %v4009
    %4026 = vmatprep.subr.bf16.mxu0 0
    %4027 = vmatpush1.bf16.msra.mxu0 %v4008
    %4028 = vmatprep.subr.bf16.mxu0 0
    %4029 = vmatpush1.bf16.msra.mxu0 %v4007
    %4030 = vmatprep.subr.bf16.mxu0 0
    %4031 = vmatpush1.bf16.msra.mxu0 %v4006
    %4032 = vmatprep.subr.bf16.mxu0 0
    %4033 = vmatpush1.bf16.msra.mxu0 %v4005
    %4034 = vmatprep.subr.bf16.mxu0 0
    %4035 = vmatpush1.bf16.msra.mxu0 %v4004
    %4036 = vmatprep.subr.bf16.mxu0 0
    %4037 = vmatpush2.bf16.msra.mxu0 0
    %4038 = vmatprep.subr.bf16.mxu0 0
    %4039 = vmatpush2.bf16.msra.mxu0 0
    %4040 = vmatprep.subr.bf16.mxu0 0
    %4041 = vmatpush2.bf16.msra.mxu0 0
    %4042 = vmatprep.subr.bf16.mxu0 0
    %4043 = vmatpush2.bf16.msra.mxu0 0
    %4044 = vmatprep.subr.bf16.mxu0 0
    %4045 = vmatpush2.bf16.msra.mxu0 0
    %4046 = vmatprep.subr.bf16.mxu0 0
    %4047 = vmatpush2.bf16.msra.mxu0 0
    %4048 = vmatprep.subr.bf16.mxu0 0
    %4049 = vmatpush2.bf16.msra.mxu0 0
    %4050 = vmatprep.subr.bf16.mxu0 0
    %4051 = vmatpush2.bf16.msra.mxu0 0
    %4052 = vmatprep.mubr.bf16.mxu0 0
    %4053 = vmatmul.mubr.bf16.gmra.mxu0 %v3970
    %v4054 = vpop.f32.mrf.mxu0
    %v4055 = vadd.f32 0.0, %v4054
    %v4056 = vpop.f32.mrf.mxu0
    %v4057 = vpop.f32.mrf.mxu0
    %v4058 = vadd.f32 0.0, %v4057
    %v4059 = vpop.f32.mrf.mxu0
    %4060 = vdwg.mxu0
    %v4061 = vadd.f32 %v3917, %v4055
    %v4062 = vadd.f32 %v3918, %v4058
    %v4063 = vld [vmem:[#allocation4 + $0x4] sm:$0xe]
    %v4064 = vld [vmem:[#allocation4 + $0x10] sm:$0xe]
    %v4069 = vrot.slane %v4063, 5
    %v4070 = vrot.slane %v4069, 4
    %v4071 = vrot.slane %v3920, 5
    %v4072 = vsel %vm2883, %v4070, %v4071
    %v4073 = vrot.slane %v4064, 5
    %v4074 = vrot.slane %v4073, 4
    %v4075 = vrot.slane %v3922, 5
    %v4076 = vsel %vm2883, %v4074, %v4075
    %s4077 = scalar_lea.vmem %s3, 256
    %v4078 = vld [vmem:[%s4077] sm:$0xf]
    %v4079 = vld [vmem:[%s4077 + $0x4] sm:$0xf]
    %v4080 = vld [vmem:[%s4077 + $0x8] sm:$0xf]
    %v4081 = vld [vmem:[%s4077 + $0xc] sm:$0xf]
    %v4082 = vld [vmem:[%s4077 + $0x10] sm:$0xf]
    %v4083 = vld [vmem:[%s4077 + $0x14] sm:$0xf]
    %v4084 = vld [vmem:[%s4077 + $0x18] sm:$0xf]
    %v4085 = vld [vmem:[%s4077 + $0x1c] sm:$0xf]
    %v4086 = vld [vmem:[%s4077 + $0x20] sm:$0xf]
    %v4087 = vld [vmem:[%s4077 + $0x24] sm:$0xf]
    %v4088 = vld [vmem:[%s4077 + $0x28] sm:$0xf]
    %v4089 = vld [vmem:[%s4077 + $0x2c] sm:$0xf]
    %v4090 = vld [vmem:[%s4077 + $0x30] sm:$0xf]
    %v4091 = vld [vmem:[%s4077 + $0x34] sm:$0xf]
    %v4092 = vld [vmem:[%s4077 + $0x38] sm:$0xf]
    %v4093 = vld [vmem:[%s4077 + $0x3c] sm:$0xf]
    %v4094 = vunpack.c.l.b16 %v4072
    %v4095 = vunpack.c.l.b16 %v4076
    %v4096 = vpack.c.b16 %v4095, %v4094
    %v4114 = vunpack.c.l.b16 %v4078
    %v4115 = vunpack.c.l.b16 %v4079
    %v4116 = vunpack.c.l.b16 %v4080
    %v4117 = vunpack.c.l.b16 %v4081
    %v4118 = vunpack.c.l.b16 %v4082
    %v4119 = vunpack.c.l.b16 %v4083
    %v4120 = vunpack.c.l.b16 %v4084
    %v4121 = vunpack.c.l.b16 %v4085
    %v4122 = vunpack.c.l.b16 %v4086
    %v4123 = vunpack.c.l.b16 %v4087
    %v4124 = vunpack.c.l.b16 %v4088
    %v4125 = vunpack.c.l.b16 %v4089
    %v4126 = vunpack.c.l.b16 %v4090
    %v4127 = vunpack.c.l.b16 %v4091
    %v4128 = vunpack.c.l.b16 %v4092
    %v4129 = vunpack.c.l.b16 %v4093
    %v4130 = vpack.c.b16 %v4115, %v4114
    %v4131 = vpack.c.b16 %v4117, %v4116
    %v4132 = vpack.c.b16 %v4119, %v4118
    %v4133 = vpack.c.b16 %v4121, %v4120
    %v4134 = vpack.c.b16 %v4123, %v4122
    %v4135 = vpack.c.b16 %v4125, %v4124
    %v4136 = vpack.c.b16 %v4127, %v4126
    %v4137 = vpack.c.b16 %v4129, %v4128
    %4146 = vmatprep.subr.bf16.mxu0 0
    %4147 = vmatpush1.bf16.msra.mxu0 %v4137
    %4148 = vmatprep.subr.bf16.mxu0 0
    %4149 = vmatpush1.bf16.msra.mxu0 %v4136
    %4150 = vmatprep.subr.bf16.mxu0 0
    %4151 = vmatpush1.bf16.msra.mxu0 %v4135
    %4152 = vmatprep.subr.bf16.mxu0 0
    %4153 = vmatpush1.bf16.msra.mxu0 %v4134
    %4154 = vmatprep.subr.bf16.mxu0 0
    %4155 = vmatpush1.bf16.msra.mxu0 %v4133
    %4156 = vmatprep.subr.bf16.mxu0 0
    %4157 = vmatpush1.bf16.msra.mxu0 %v4132
    %4158 = vmatprep.subr.bf16.mxu0 0
    %4159 = vmatpush1.bf16.msra.mxu0 %v4131
    %4160 = vmatprep.subr.bf16.mxu0 0
    %4161 = vmatpush1.bf16.msra.mxu0 %v4130
    %4162 = vmatprep.subr.bf16.mxu0 0
    %4163 = vmatpush2.bf16.msra.mxu0 0
    %4164 = vmatprep.subr.bf16.mxu0 0
    %4165 = vmatpush2.bf16.msra.mxu0 0
    %4166 = vmatprep.subr.bf16.mxu0 0
    %4167 = vmatpush2.bf16.msra.mxu0 0
    %4168 = vmatprep.subr.bf16.mxu0 0
    %4169 = vmatpush2.bf16.msra.mxu0 0
    %4170 = vmatprep.subr.bf16.mxu0 0
    %4171 = vmatpush2.bf16.msra.mxu0 0
    %4172 = vmatprep.subr.bf16.mxu0 0
    %4173 = vmatpush2.bf16.msra.mxu0 0
    %4174 = vmatprep.subr.bf16.mxu0 0
    %4175 = vmatpush2.bf16.msra.mxu0 0
    %4176 = vmatprep.subr.bf16.mxu0 0
    %4177 = vmatpush2.bf16.msra.mxu0 0
    %4178 = vmatprep.mubr.bf16.mxu0 0
    %4179 = vmatmul.mubr.bf16.gmra.mxu0 %v4096
    %v4180 = vpop.f32.mrf.mxu0
    %v4181 = vadd.f32 0.0, %v4180
    %v4182 = vpop.f32.mrf.mxu0
    %v4183 = vpop.f32.mrf.mxu0
    %v4184 = vadd.f32 0.0, %v4183
    %v4185 = vpop.f32.mrf.mxu0
    %4186 = vdwg.mxu0
    %v4187 = vadd.f32 %v4061, %v4181
    %v4188 = vadd.f32 %v4062, %v4184
    %v4189 = vld [vmem:[%s4] sm:$0x1]
    %v4191 = vlaneseq
    %v4192 = vshrl.u32 %v4191, 7
    %v4193 = vsub.s32 0, %v4192
    %v4194 = vrot.slane %v4189, %v4193
    %v4196 = vadd.f32 %v4187, %v4194
    %v4197 = vadd.f32 %v4188, %v4194
    %v4198 = vmax.f32 %v4196, 0.0
    %v4199 = vmax.f32 %v4197, 0.0
    %vm4200 = vcmask 523264
    %4201 = vst.msk [vmem:[#allocation5] sm:$0xff] %vm4200, %v4198
    %4202 = vst.msk [vmem:[#allocation5 + $0x8] sm:$0xff] %vm4200, %v4199
    %v4203 = vld [vmem:[#allocation5] ss:$8 sm:$0x3]
    %s4204 = scalar_lea.vmem [#allocation5], 1
    %v4205 = vld [vmem:[%s4204] ss:$8 sm:$0x3]
    %v4206 = vmax.f32 %v4203, %v4205
    %s4207 = scalar_lea.vmem [#allocation5], 2
    %v4208 = vld [vmem:[%s4207] ss:$8 sm:$0x3]
    %s4209 = scalar_lea.vmem [#allocation5], 3
    %v4210 = vld [vmem:[%s4209] ss:$8 sm:$0x3]
    %v4211 = vmax.f32 %v4208, %v4210
    %s4212 = scalar_lea.vmem [#allocation5], 4
    %v4213 = vld [vmem:[%s4212] ss:$8 sm:$0x3]
    %s4214 = scalar_lea.vmem [#allocation5], 5
    %v4215 = vld [vmem:[%s4214] ss:$8 sm:$0x3]
    %v4216 = vmax.f32 %v4213, %v4215
    %s4217 = scalar_lea.vmem [#allocation5], 6
    %v4218 = vld [vmem:[%s4217] ss:$8 sm:$0x3]
    %s4219 = scalar_lea.vmem [#allocation5], 7
    %v4220 = vld [vmem:[%s4219] ss:$8 sm:$0x3]
    %v4221 = vmax.f32 %v4218, %v4220
    %4223 = vrot.lane.b32.xlu0 %v4211, 64
    %v4224 = vpop.permute.xlu0 %4223
    %4227 = vrot.lane.b32.xlu0 %v4221, 64
    %v4228 = vpop.permute.xlu0 %4227
    %v4230 = vsel %vm4200, %v4206, %v4224
    %v4231 = vsel %vm4200, %v4216, %v4228
    %v4232 = vpack.c.bf16 %v4230, %v4230
    %v4233 = vpack.c.bf16 %v4231, %v4231
    %v4234 = vld [vmem:[%s5] sm:$0xf]
    %v4235 = vld [vmem:[%s5 + $0x4] sm:$0xf]
    %v4236 = vld [vmem:[%s5 + $0x8] sm:$0xf]
    %v4237 = vld [vmem:[%s5 + $0xc] sm:$0xf]
    %v4238 = vld [vmem:[%s5 + $0x10] sm:$0xf]
    %v4239 = vld [vmem:[%s5 + $0x14] sm:$0xf]
    %v4240 = vld [vmem:[%s5 + $0x18] sm:$0xf]
    %v4241 = vld [vmem:[%s5 + $0x1c] sm:$0xf]
    %v4242 = vld [vmem:[%s5 + $0x20] sm:$0xf]
    %v4243 = vld [vmem:[%s5 + $0x24] sm:$0xf]
    %v4244 = vld [vmem:[%s5 + $0x28] sm:$0xf]
    %v4245 = vld [vmem:[%s5 + $0x2c] sm:$0xf]
    %v4246 = vld [vmem:[%s5 + $0x30] sm:$0xf]
    %v4247 = vld [vmem:[%s5 + $0x34] sm:$0xf]
    %v4248 = vld [vmem:[%s5 + $0x38] sm:$0xf]
    %v4249 = vld [vmem:[%s5 + $0x3c] sm:$0xf]
    %v4250 = vld [vmem:[%s5 + $0x40] sm:$0xf]
    %v4251 = vld [vmem:[%s5 + $0x44] sm:$0xf]
    %v4252 = vld [vmem:[%s5 + $0x48] sm:$0xf]
    %v4253 = vld [vmem:[%s5 + $0x4c] sm:$0xf]
    %v4254 = vld [vmem:[%s5 + $0x50] sm:$0xf]
    %v4255 = vld [vmem:[%s5 + $0x54] sm:$0xf]
    %v4256 = vld [vmem:[%s5 + $0x58] sm:$0xf]
    %v4257 = vld [vmem:[%s5 + $0x5c] sm:$0xf]
    %v4258 = vld [vmem:[%s5 + $0x60] sm:$0xf]
    %v4259 = vld [vmem:[%s5 + $0x64] sm:$0xf]
    %v4260 = vld [vmem:[%s5 + $0x68] sm:$0xf]
    %v4261 = vld [vmem:[%s5 + $0x6c] sm:$0xf]
    %v4262 = vld [vmem:[%s5 + $0x70] sm:$0xf]
    %v4263 = vld [vmem:[%s5 + $0x74] sm:$0xf]
    %v4264 = vld [vmem:[%s5 + $0x78] sm:$0xf]
    %v4265 = vld [vmem:[%s5 + $0x7c] sm:$0xf]
    %v4266 = vld [vmem:[%s6] sm:$0x1]
    %v4268 = vlaneseq
    %v4269 = vshrl.u32 %v4268, 7
    %v4270 = vsub.s32 0, %v4269
    %v4271 = vrot.slane %v4266, %v4270
    %v4305 = vunpack.c.l.b16 %v4234
    %v4306 = vunpack.c.l.b16 %v4235
    %v4307 = vunpack.c.l.b16 %v4236
    %v4308 = vunpack.c.l.b16 %v4237
    %v4309 = vunpack.c.l.b16 %v4238
    %v4310 = vunpack.c.l.b16 %v4239
    %v4311 = vunpack.c.l.b16 %v4240
    %v4312 = vunpack.c.l.b16 %v4241
    %v4313 = vunpack.c.l.b16 %v4242
    %v4314 = vunpack.c.l.b16 %v4243
    %v4315 = vunpack.c.l.b16 %v4244
    %v4316 = vunpack.c.l.b16 %v4245
    %v4317 = vunpack.c.l.b16 %v4246
    %v4318 = vunpack.c.l.b16 %v4247
    %v4319 = vunpack.c.l.b16 %v4248
    %v4320 = vunpack.c.l.b16 %v4249
    %v4321 = vunpack.c.l.b16 %v4250
    %v4322 = vunpack.c.l.b16 %v4251
    %v4323 = vunpack.c.l.b16 %v4252
    %v4324 = vunpack.c.l.b16 %v4253
    %v4325 = vunpack.c.l.b16 %v4254
    %v4326 = vunpack.c.l.b16 %v4255
    %v4327 = vunpack.c.l.b16 %v4256
    %v4328 = vunpack.c.l.b16 %v4257
    %v4329 = vunpack.c.l.b16 %v4258
    %v4330 = vunpack.c.l.b16 %v4259
    %v4331 = vunpack.c.l.b16 %v4260
    %v4332 = vunpack.c.l.b16 %v4261
    %v4333 = vunpack.c.l.b16 %v4262
    %v4334 = vunpack.c.l.b16 %v4263
    %v4335 = vunpack.c.l.b16 %v4264
    %v4336 = vunpack.c.l.b16 %v4265
    %v4337 = vpack.c.b16 %v4306, %v4305
    %v4338 = vpack.c.b16 %v4308, %v4307
    %v4339 = vpack.c.b16 %v4310, %v4309
    %v4340 = vpack.c.b16 %v4312, %v4311
    %v4341 = vpack.c.b16 %v4314, %v4313
    %v4342 = vpack.c.b16 %v4316, %v4315
    %v4343 = vpack.c.b16 %v4318, %v4317
    %v4344 = vpack.c.b16 %v4320, %v4319
    %v4345 = vpack.c.b16 %v4322, %v4321
    %v4346 = vpack.c.b16 %v4324, %v4323
    %v4347 = vpack.c.b16 %v4326, %v4325
    %v4348 = vpack.c.b16 %v4328, %v4327
    %v4349 = vpack.c.b16 %v4330, %v4329
    %v4350 = vpack.c.b16 %v4332, %v4331
    %v4351 = vpack.c.b16 %v4334, %v4333
    %v4352 = vpack.c.b16 %v4336, %v4335
    %4369 = vmatprep.subr.bf16.mxu0 0
    %4370 = vmatpush1.bf16.msra.mxu0 %v4344
    %4371 = vmatprep.subr.bf16.mxu0 0
    %4372 = vmatpush1.bf16.msra.mxu0 %v4343
    %4373 = vmatprep.subr.bf16.mxu0 0
    %4374 = vmatpush1.bf16.msra.mxu0 %v4342
    %4375 = vmatprep.subr.bf16.mxu0 0
    %4376 = vmatpush1.bf16.msra.mxu0 %v4341
    %4377 = vmatprep.subr.bf16.mxu0 0
    %4378 = vmatpush1.bf16.msra.mxu0 %v4340
    %4379 = vmatprep.subr.bf16.mxu0 0
    %4380 = vmatpush1.bf16.msra.mxu0 %v4339
    %4381 = vmatprep.subr.bf16.mxu0 0
    %4382 = vmatpush1.bf16.msra.mxu0 %v4338
    %4383 = vmatprep.subr.bf16.mxu0 0
    %4384 = vmatpush1.bf16.msra.mxu0 %v4337
    %4385 = vmatprep.subr.bf16.mxu0 0
    %4386 = vmatpush2.bf16.msra.mxu0 %v4352
    %4387 = vmatprep.subr.bf16.mxu0 0
    %4388 = vmatpush2.bf16.msra.mxu0 %v4351
    %4389 = vmatprep.subr.bf16.mxu0 0
    %4390 = vmatpush2.bf16.msra.mxu0 %v4350
    %4391 = vmatprep.subr.bf16.mxu0 0
    %4392 = vmatpush2.bf16.msra.mxu0 %v4349
    %4393 = vmatprep.subr.bf16.mxu0 0
    %4394 = vmatpush2.bf16.msra.mxu0 %v4348
    %4395 = vmatprep.subr.bf16.mxu0 0
    %4396 = vmatpush2.bf16.msra.mxu0 %v4347
    %4397 = vmatprep.subr.bf16.mxu0 0
    %4398 = vmatpush2.bf16.msra.mxu0 %v4346
    %4399 = vmatprep.subr.bf16.mxu0 0
    %4400 = vmatpush2.bf16.msra.mxu0 %v4345
    %4401 = vmatprep.mubr.bf16.mxu0 %v4233
    %4402 = vmatmul.mubr.bf16.gmra.mxu0 %v4232
    %v4403 = vpop.f32.mrf.mxu0
    %v4404 = vadd.f32 %v4271, %v4403
    %v4405 = vpop.f32.mrf.mxu0
    %v4406 = vpop.f32.mrf.mxu0
    %v4407 = vpop.f32.mrf.mxu0
    %4408 = vdwg.mxu0
    %v4409 = vmax.f32 %v4404, 0.0
    %v4410 = vpack.c.bf16 %v4409, %v4409
    %v4411 = vld [vmem:[%s7] sm:$0xf]
    %v4412 = vld [vmem:[%s7 + $0x4] sm:$0xf]
    %v4413 = vld [vmem:[%s7 + $0x8] sm:$0xf]
    %v4414 = vld [vmem:[%s7 + $0xc] sm:$0xf]
    %v4415 = vld [vmem:[%s7 + $0x10] sm:$0xf]
    %v4416 = vld [vmem:[%s7 + $0x14] sm:$0xf]
    %v4417 = vld [vmem:[%s7 + $0x18] sm:$0xf]
    %v4418 = vld [vmem:[%s7 + $0x1c] sm:$0xf]
    %v4419 = vld [vmem:[%s8] sm:$0x1]
    %v4421 = vlaneseq
    %v4422 = vshrl.u32 %v4421, 7
    %v4423 = vsub.s32 0, %v4422
    %v4424 = vrot.slane %v4419, %v4423
    %v4434 = vunpack.c.l.b16 %v4411
    %v4435 = vunpack.c.l.b16 %v4412
    %v4436 = vunpack.c.l.b16 %v4413
    %v4437 = vunpack.c.l.b16 %v4414
    %v4438 = vunpack.c.l.b16 %v4415
    %v4439 = vunpack.c.l.b16 %v4416
    %v4440 = vunpack.c.l.b16 %v4417
    %v4441 = vunpack.c.l.b16 %v4418
    %v4442 = vpack.c.b16 %v4435, %v4434
    %v4443 = vpack.c.b16 %v4437, %v4436
    %v4444 = vpack.c.b16 %v4439, %v4438
    %v4445 = vpack.c.b16 %v4441, %v4440
    %v4451 = vsel %vm4200, %v4410, 0
    %4453 = vmatprep.subr.bf16.mxu0 0
    %4454 = vmatpush1.bf16.msra.mxu0 0
    %4455 = vmatprep.subr.bf16.mxu0 0
    %4456 = vmatpush1.bf16.msra.mxu0 0
    %4457 = vmatprep.subr.bf16.mxu0 0
    %4458 = vmatpush1.bf16.msra.mxu0 0
    %4459 = vmatprep.subr.bf16.mxu0 0
    %4460 = vmatpush1.bf16.msra.mxu0 0
    %4461 = vmatprep.subr.bf16.mxu0 0
    %4462 = vmatpush1.bf16.msra.mxu0 %v4445
    %4463 = vmatprep.subr.bf16.mxu0 0
    %4464 = vmatpush1.bf16.msra.mxu0 %v4444
    %4465 = vmatprep.subr.bf16.mxu0 0
    %4466 = vmatpush1.bf16.msra.mxu0 %v4443
    %4467 = vmatprep.subr.bf16.mxu0 0
    %4468 = vmatpush1.bf16.msra.mxu0 %v4442
    %4469 = vmatprep.subr.bf16.mxu0 0
    %4470 = vmatpush2.bf16.msra.mxu0 0
    %4471 = vmatprep.subr.bf16.mxu0 0
    %4472 = vmatpush2.bf16.msra.mxu0 0
    %4473 = vmatprep.subr.bf16.mxu0 0
    %4474 = vmatpush2.bf16.msra.mxu0 0
    %4475 = vmatprep.subr.bf16.mxu0 0
    %4476 = vmatpush2.bf16.msra.mxu0 0
    %4477 = vmatprep.subr.bf16.mxu0 0
    %4478 = vmatpush2.bf16.msra.mxu0 0
    %4479 = vmatprep.subr.bf16.mxu0 0
    %4480 = vmatpush2.bf16.msra.mxu0 0
    %4481 = vmatprep.subr.bf16.mxu0 0
    %4482 = vmatpush2.bf16.msra.mxu0 0
    %4483 = vmatprep.subr.bf16.mxu0 0
    %4484 = vmatpush2.bf16.msra.mxu0 0
    %4485 = vmatprep.mubr.bf16.mxu0 0
    %4486 = vmatmul.mubr.bf16.gmra.mxu0 %v4451
    %v4487 = vpop.f32.mrf.mxu0
    %v4488 = vadd.f32 %v4424, %v4487
    %v4489 = vpop.f32.mrf.mxu0
    %v4490 = vpop.f32.mrf.mxu0
    %v4491 = vpop.f32.mrf.mxu0
    %4492 = vdwg.mxu0
    %vm4493 = vcmask 25600
    %4494 = vst.msk [vmem:[#allocation9] sm:$0x3] %vm4493, %v4488
    // Predicated region
    $region77: #{tpu_custom_call.1} parent=1 // pred_check
      _
    $region78: #{tpu_custom_call.1} parent=1 // pred_check_branch
      %4496 = sbr.rel (0) target = $region80
    $region79: #{tpu_custom_call.1} parent=1 // pred_region
      %s4498 = ssub.s32 32, 32
      %4499 = vsyncadd [#allocation8], %s4498
      %s4501 = sshll.u32 [#allocation9], 4
      %s4502 = int_to_ptr.vmem [resolvable:$true] %s4501
      %4504 = dma.vmem_to_hbm [thread:$0]  %s4502, 32, %s9, [#allocation8]
    $region80: #{tpu_custom_call.1} parent=1 // pred_fallthru
      _
    // Predicated region
    $region81: #{tpu_custom_call.1} parent=1 // pred_check
      _
    $region82: #{tpu_custom_call.1} parent=1 // pred_check_branch
      %4506 = sbr.rel (0) target = $region84
    $region83: #{tpu_custom_call.1} parent=1 // pred_region
      %4507 = dma.done [#allocation8], 32
    $region84: #{tpu_custom_call.1} parent=1 // pred_fallthru
      _
    %4508 = vsyncpa [#allocation7], 1
    %4509 = vsyncpa [#allocation8], 1

</llo_original>
